<compile_context>
chip_gen: v7x
topology: tpu7x:2x2x1
jax: 0.10.0
libtpu: 0.0.40
codegen_flags: <defaults>
</compile_context>

<pallas_src>
import functools

import jax
import jax.numpy as jnp
from jax import lax
from jax.experimental import pallas as pl
from jax.experimental.pallas import tpu as pltpu


def _ceil_to(a, m):
    return -(-a // m) * m


# ---------------------------------------------------------------------------
# Pallas kernel: interleaved bidirectional LSTM over a padded batch.
# Packed-sequence semantics via masking (assumes contiguous length-prefix
# masks, like pack_padded_sequence):
#   * outputs are exactly zero at padded positions (pad_packed_sequence)
#   * backward-direction state stays (0,0) until each sequence's true last
#     token; forward-direction state needs no freeze because later forward
#     steps never influence earlier (valid) outputs.
# ---------------------------------------------------------------------------
def _bilstm_kernel(x_ref,       # [S*B, E]   bf16 (time-major)
                   m1_ref,      # [S*B, 1]   f32  {0,1}
                   win_ref,     # [E, 8H]    bf16  [W_ih_f^T | W_ih_b^T]
                   whh_ref,     # [2H, 8H]   bf16  blockdiag(W_hh_f^T, W_hh_b^T)
                   bias_ref,    # [1, 8H]    f32   [b_f | b_b]
                   out_ref,     # [S*B, 2H]  f32
                   gx_ref,      # scratch [S*B, 8H] bf16 (pre-projected gates)
                   mb_ref,      # scratch [S*B, H]  f32  (pre-broadcast mask)
                   *, seq_len, batch, hidden, fuse_recurrent, unroll):
    S, B, H = seq_len, batch, hidden
    G = 4 * H

    # ---- prologue -----------------------------------------------------------
    # (a) fused input projection for BOTH directions: one MXU pass, one
    #     lane-dense [S*B, 8H] store; kept bf16 to halve VMEM / per-step vld.
    gx_ref[...] = (jnp.dot(x_ref[...], win_ref[...],
                           preferred_element_type=jnp.float32)
                   + bias_ref[...]).astype(jnp.bfloat16)
    # (b) mask lane-broadcast hoisted out of the recurrence: the loop only
    #     does full-width unmasked loads, no per-step broadcast_in_dim.
    mb_ref[...] = jnp.broadcast_to(m1_ref[...], (S * B, H))

    # ---- weight-stationary recurrent matrix --------------------------------
    whh_blk = whh_ref[...]                                    # bf16 [2H, 8H]
    if not fuse_recurrent:                                    # v5e path
        whh_f = whh_blk[0:H, 0:G]
        whh_b = whh_blk[H:2 * H, G:2 * G]

    def sigmoid(v):
        # single EUP push (tanh) instead of exp + divide
        return 0.5 * jnp.tanh(0.5 * v) + 0.5

    def lstm_gates(g, c):
        # PyTorch LSTM gate order: i, f, g, o
        i = sigmoid(g[:, 0:H])
        f = sigmoid(g[:, H:2 * H])
        gg = jnp.tanh(g[:, 2 * H:3 * H])
        o = sigmoid(g[:, 3 * H:4 * H])
        c_new = f * c + i * gg
        h_new = o * jnp.tanh(c_new)
        return h_new, c_new

    # ---- interleaved recurrence: fwd at t, bwd at S-1-t ---------------------
    def step(t, carry):
        hf, cf, hb, cb = carry
        tb = (S - 1) - t
        rf = pl.multiple_of(t * B, B)
        rb = pl.multiple_of(tb * B, B)

        if fuse_recurrent:
            # single K=2H=256 push through the MXU (block-diagonal weights)
            h_cat = jnp.concatenate([hf, hb], axis=1).astype(jnp.bfloat16)
            rec = jnp.dot(h_cat, whh_blk, preferred_element_type=jnp.float32)
            rec_f, rec_b = rec[:, 0:G], rec[:, G:2 * G]
        else:
            rec_f = jnp.dot(hf.astype(jnp.bfloat16), whh_f,
                            preferred_element_type=jnp.float32)
            rec_b = jnp.dot(hb.astype(jnp.bfloat16), whh_b,
                            preferred_element_type=jnp.float32)

        gf = rec_f + gx_ref[pl.ds(rf, B), 0:G].astype(jnp.float32)
        gb = rec_b + gx_ref[pl.ds(rb, B), G:2 * G].astype(jnp.float32)

        hf_new, cf_new = lstm_gates(gf, cf)
        hb_new, cb_new = lstm_gates(gb, cb)

        mf = mb_ref[pl.ds(rf, B), :]                          # f32 {0,1} [B,H]
        mb = mb_ref[pl.ds(rb, B), :]

        # zeros at padded positions, like pad_packed_sequence
        out_ref[pl.ds(rf, B), 0:H] = hf_new * mf
        out_ref[pl.ds(rb, B), H:2 * H] = hb_new * mb

        # only the backward state needs freezing (starts at the true last
        # valid token of each sequence)
        keep_b = mb > 0.0
        hb_nxt = jnp.where(keep_b, hb_new, hb)
        cb_nxt = jnp.where(keep_b, cb_new, cb)
        return hf_new, cf_new, hb_nxt, cb_nxt

    z = jnp.zeros((B, H), jnp.float32)
    lax.fori_loop(0, S, step, (z, z, z, z), unroll=unroll)


# ---------------------------------------------------------------------------
# Host-side weight fusion and wrapper
# ---------------------------------------------------------------------------
def _fuse_lstm_params(params):
    """Fused input projection [E, 8H], block-diag W_hh [2H, 8H], bias [1, 8H]."""
    H = params["whh_f"].shape[0]
    w_in = jnp.concatenate([params["wih_f"], params["wih_b"]], axis=1)
    b_in = jnp.concatenate([params["b_f"], params["b_b"]], axis=1)
    whh = jnp.zeros((2 * H, 8 * H), jnp.float32)
    whh = whh.at[0:H, 0:4 * H].set(params["whh_f"])
    whh = whh.at[H:2 * H, 4 * H:8 * H].set(params["whh_b"])
    return (w_in.astype(jnp.bfloat16), whh.astype(jnp.bfloat16),
            b_in.astype(jnp.float32))


def _vmem_limit_bytes(S, B, E, H):
    def tile(rows, cols, itemsize):
        sub = 8 * (4 // itemsize)          # 8 rows for f32 tiles, 16 for bf16
        return _ceil_to(rows, sub) * _ceil_to(cols, 128) * itemsize

    SB = S * B
    need = (tile(SB, E, 2) + tile(SB, 1, 4)                       # x, mask
            + tile(E, 8 * H, 2) + tile(2 * H, 8 * H, 2)           # weights
            + tile(1, 8 * H, 4)                                   # bias
            + tile(SB, 2 * H, 4)                                  # out
            + tile(SB, 8 * H, 2) + tile(SB, H, 4)                 # scratch
            + tile(SB, 8 * H, 4))                                 # f32 proj temp
    return int(min(max(2 * need + (8 << 20), 32 << 20), 96 << 20))


def bilstm_pallas(x_sbe, mask_sb, params, *, fuse_recurrent=True):
    """x_sbe: [S, B, E] bf16 (B % 16 == 0), mask_sb: [S, B] {0,1} -> [S, B, 2H] f32."""
    S, B, E = x_sbe.shape
    H = params["whh_f"].shape[0]
    assert B % 16 == 0, "batch must be padded to a multiple of 16"
    assert H % 128 == 0, "hidden must be a multiple of 128 lanes"

    w_in, whh_blk, b_in = _fuse_lstm_params(params)
    x2d = x_sbe.reshape(S * B, E).astype(jnp.bfloat16)
    m2d = mask_sb.reshape(S * B, 1).astype(jnp.float32)

    unroll = True if S <= 32 else 2        # partial unroll for long sequences
    kernel = functools.partial(_bilstm_kernel, seq_len=S, batch=B, hidden=H,
                               fuse_recurrent=fuse_recurrent, unroll=unroll)
    vmem = pl.BlockSpec(memory_space=pltpu.MemorySpace.VMEM)

    out2d = pl.pallas_call(
        kernel,
        out_shape=jax.ShapeDtypeStruct((S * B, 2 * H), jnp.float32),
        in_specs=[vmem] * 5,
        out_specs=vmem,
        scratch_shapes=[pltpu.VMEM((S * B, 8 * H), jnp.bfloat16),
                        pltpu.VMEM((S * B, H), jnp.float32)],
        compiler_params=pltpu.CompilerParams(
            vmem_limit_bytes=_vmem_limit_bytes(S, B, E, H)),
    )(x2d, m2d, w_in, whh_blk, b_in)
    return out2d.reshape(S, B, 2 * H)


# ---------------------------------------------------------------------------
# DenoteModel.forward equivalent
# ---------------------------------------------------------------------------
def denote_model_forward(sent, mask, params, dropout_key,
                         dropout_p=0.2, train=True, fuse_recurrent=True):
    """sent: [B, S] int32 token ids, mask: [B, S] {0,1}. Returns [B, S, 2H] f32."""
    B, S = sent.shape

    # embedding lookup gathered directly time-major, kept bf16 end-to-end
    emb = jnp.take(params["embedding"], sent.T, axis=0).astype(jnp.bfloat16)

    # F.dropout defaults to training=True in the PyTorch forward.
    # TODO(synk): dropout uses JAX PRNG (cannot bitwise-match torch RNG); it
    # could be fused into the kernel with pltpu.prng_seed/prng_random_bits.
    if train and dropout_p > 0.0:
        keep = jax.random.bernoulli(dropout_key, 1.0 - dropout_p, emb.shape)
        emb = jnp.where(keep, emb * (1.0 / (1.0 - dropout_p)), 0.0)

    # Pad batch to a multiple of 16 (bf16 sublane tile / more MXU rows);
    # padded rows have an all-zero mask so their outputs are exactly zero and
    # are sliced off.  For real throughput, batch many sentences per call.
    B_pad = _ceil_to(B, 16)
    pad = B_pad - B
    mask_sb = mask.astype(jnp.float32).T                      # [S, B]
    if pad:
        emb = jnp.pad(emb, ((0, 0), (0, pad), (0, 0)))
        mask_sb = jnp.pad(mask_sb, ((0, 0), (0, pad)))

    out_sb = bilstm_pallas(emb, mask_sb, params, fuse_recurrent=fuse_recurrent)
    return jnp.transpose(out_sb, (1, 0, 2))[:B]               # [B, S, 2H]


def _should_fuse_recurrent():
    """K=256 fused recurrent matmul fills the 256-wide MXU on v6e/v7x; on
    older 128-wide-MXU chips (<= v5) keep the two K=128 matmuls."""
    try:
        kind = jax.devices()[0].device_kind.lower()
    except Exception:
        return True
    return not any(tag in kind for tag in ("v2", "v3", "v4", "v5"))


# ---------------------------------------------------------------------------
# Deterministic parameter initialization (shapes from DenoteModel.__init__)
# ---------------------------------------------------------------------------
def init_params(key, vocab_size, embed_size, hidden):
    ks = jax.random.split(key, 9)
    k = 1.0 / jnp.sqrt(hidden)

    def u(kk, shape):
        return jax.random.uniform(kk, shape, jnp.float32, -k, k)

    return {
        # nn.Embedding default init: N(0, 1)
        "embedding": jax.random.normal(ks[0], (vocab_size, embed_size),
                                       jnp.float32),
        # LSTM weights stored pre-transposed: W_ih^T [E, 4H], W_hh^T [H, 4H];
        # biases combined (b_ih + b_hh), kept 2D [1, 4H] for broadcasting.
        "wih_f": u(ks[1], (embed_size, 4 * hidden)),
        "whh_f": u(ks[2], (hidden, 4 * hidden)),
        "b_f":   u(ks[3], (1, 4 * hidden)) + u(ks[4], (1, 4 * hidden)),
        "wih_b": u(ks[5], (embed_size, 4 * hidden)),
        "whh_b": u(ks[6], (hidden, 4 * hidden)),
        "b_b":   u(ks[7], (1, 4 * hidden)) + u(ks[8], (1, 4 * hidden)),
    }


if __name__ == "__main__":
    B, S, E, H = 2, 8, 32, 128          # word_out_channel = 128 (fixed in module)
    VOCAB = 100

    root = jax.random.PRNGKey(0)
    k_params, k_sent, k_drop = jax.random.split(root, 3)

    params = init_params(k_params, VOCAB, E, H)

    sent = jax.random.randint(k_sent, (B, S), 0, VOCAB, dtype=jnp.int32)
    lengths = jnp.array([8, 5], dtype=jnp.int32)
    mask = (jnp.arange(S)[None, :] < lengths[:, None]).astype(jnp.float32)

    fuse = _should_fuse_recurrent()
    fwd = jax.jit(functools.partial(denote_model_forward, dropout_p=0.2,
                                    train=True, fuse_recurrent=fuse))
    out = fwd(sent, mask, params, k_drop)
    jax.block_until_ready(out)

    assert out.shape == (B, S, 2 * H)
    # padded positions (t >= len[b]) must be exactly zero, like pad_packed_sequence
    assert bool(jnp.all(out[1, 5:, :] == 0.0))
    assert bool(jnp.all(jnp.isfinite(out)))
    print("KERNEL_OK")
</pallas_src>

<mosaic_0001>
module attributes {stable_mosaic.version = 11 : i64} {
  func.func @_bilstm_kernel(%arg0: memref<128x32xbf16, #tpu.memory_space<vmem>>, %arg1: memref<128x1xf32, #tpu.memory_space<vmem>>, %arg2: memref<32x1024xbf16, #tpu.memory_space<vmem>>, %arg3: memref<256x1024xbf16, #tpu.memory_space<vmem>>, %arg4: memref<1x1024xf32, #tpu.memory_space<vmem>>, %arg5: memref<128x256xf32, #tpu.memory_space<vmem>>, %arg6: memref<128x1024xbf16, #tpu.memory_space<vmem>>, %arg7: memref<128x128xf32, #tpu.memory_space<vmem>>) attributes {dimension_semantics = [], scalar_prefetch = 0 : i64, scratch_operands = 2 : i64, tpu.core_type = #tpu.core_type<tc>} {
    %c0 = arith.constant 0 : index
    %c0_0 = arith.constant 0 : index
    %0 = vector.load %arg0[%c0, %c0_0] : memref<128x32xbf16, #tpu.memory_space<vmem>>, vector<128x32xbf16>
    %c0_1 = arith.constant 0 : index
    %c0_2 = arith.constant 0 : index
    %1 = vector.load %arg2[%c0_1, %c0_2] : memref<32x1024xbf16, #tpu.memory_space<vmem>>, vector<32x1024xbf16>
    %cst = arith.constant dense<0.000000e+00> : vector<128x1024xf32>
    %2 = tpu.matmul %0, %1, %cst {dimension_numbers = #tpu.dot_dimension_numbers<[1], [0], [0], [1], [0, 0, 1, 1], [], []>} : vector<128x32xbf16>, vector<32x1024xbf16>, vector<128x1024xf32> -> vector<128x1024xf32>
    %c0_3 = arith.constant 0 : index
    %c0_4 = arith.constant 0 : index
    %3 = vector.load %arg4[%c0_3, %c0_4] : memref<1x1024xf32, #tpu.memory_space<vmem>>, vector<1x1024xf32>
    %4 = vector.broadcast %3 : vector<1x1024xf32> to vector<128x1024xf32>
    %5 = arith.addf %2, %4 : vector<128x1024xf32>
    %6 = arith.truncf %5 : vector<128x1024xf32> to vector<128x1024xbf16>
    %c0_5 = arith.constant 0 : index
    %c0_6 = arith.constant 0 : index
    %7 = vector.load %arg6[%c0_5, %c0_6] : memref<128x1024xbf16, #tpu.memory_space<vmem>>, vector<128x1024xbf16>
    tpu.vector_store %arg6[%c0_5, %c0_6], %6 {strides = array<i32>} : memref<128x1024xbf16, #tpu.memory_space<vmem>>, vector<128x1024xbf16>,
    %c0_7 = arith.constant 0 : index
    %c0_8 = arith.constant 0 : index
    %8 = vector.load %arg1[%c0_7, %c0_8] : memref<128x1xf32, #tpu.memory_space<vmem>>, vector<128x1xf32>
    %9 = vector.shape_cast %8 : vector<128x1xf32> to vector<128x1xf32>
    %10 = vector.broadcast %9 : vector<128x1xf32> to vector<128x128xf32>
    %c0_9 = arith.constant 0 : index
    %c0_10 = arith.constant 0 : index
    %11 = vector.load %arg7[%c0_9, %c0_10] : memref<128x128xf32, #tpu.memory_space<vmem>>, vector<128x128xf32>
    tpu.vector_store %arg7[%c0_9, %c0_10], %10 {strides = array<i32>} : memref<128x128xf32, #tpu.memory_space<vmem>>, vector<128x128xf32>,
    %c0_11 = arith.constant 0 : index
    %c0_12 = arith.constant 0 : index
    %12 = vector.load %arg3[%c0_11, %c0_12] : memref<256x1024xbf16, #tpu.memory_space<vmem>>, vector<256x1024xbf16>
    %cst_13 = arith.constant 0.000000e+00 : f32
    %13 = vector.broadcast %cst_13 : f32 to vector<16x128xf32>
    %c0_i32 = arith.constant 0 : i32
    %c7_i32 = arith.constant 7 : i32
    %14 = arith.subi %c7_i32, %c0_i32 : i32
    %c16_i32 = arith.constant 16 : i32
    %15 = arith.muli %c0_i32, %c16_i32 : i32
    %16 = tpu.assume_multiple %15, 16 : i32
    %c16_i32_14 = arith.constant 16 : i32
    %17 = arith.muli %14, %c16_i32_14 : i32
    %18 = tpu.assume_multiple %17, 16 : i32
    %19 = tpu.concatenate %13, %13 in 1 : vector<16x128xf32>, vector<16x128xf32> -> vector<16x256xf32>
    %20 = arith.truncf %19 : vector<16x256xf32> to vector<16x256xbf16>
    %cst_15 = arith.constant dense<0.000000e+00> : vector<16x1024xf32>
    %21 = tpu.matmul %20, %12, %cst_15 {dimension_numbers = #tpu.dot_dimension_numbers<[1], [0], [0], [1], [0, 0, 1, 1], [], []>} : vector<16x256xbf16>, vector<256x1024xbf16>, vector<16x1024xf32> -> vector<16x1024xf32>
    %22 = vector.extract_strided_slice %21 {offsets = [0, 0], sizes = [16, 512], strides = [1, 1]} : vector<16x1024xf32> to vector<16x512xf32>
    %23 = vector.extract_strided_slice %21 {offsets = [0, 512], sizes = [16, 512], strides = [1, 1]} : vector<16x1024xf32> to vector<16x512xf32>
    %24 = arith.index_cast %16 : i32 to index
    %c0_16 = arith.constant 0 : index
    %25 = vector.load %arg6[%24, %c0_16] : memref<128x1024xbf16, #tpu.memory_space<vmem>>, vector<16x512xbf16>
    %26 = arith.extf %25 : vector<16x512xbf16> to vector<16x512xf32>
    %27 = arith.addf %22, %26 : vector<16x512xf32>
    %28 = arith.index_cast %18 : i32 to index
    %c512 = arith.constant 512 : index
    %29 = vector.load %arg6[%28, %c512] : memref<128x1024xbf16, #tpu.memory_space<vmem>>, vector<16x512xbf16>
    %30 = arith.extf %29 : vector<16x512xbf16> to vector<16x512xf32>
    %31 = arith.addf %23, %30 : vector<16x512xf32>
    %32 = vector.extract_strided_slice %27 {offsets = [0, 0], sizes = [16, 128], strides = [1, 1]} : vector<16x512xf32> to vector<16x128xf32>
    %cst_17 = arith.constant 5.000000e-01 : f32
    %33 = vector.broadcast %cst_17 : f32 to vector<16x128xf32>
    %34 = arith.mulf %33, %32 : vector<16x128xf32>
    %35 = math.tanh %34 : vector<16x128xf32>
    %cst_18 = arith.constant 5.000000e-01 : f32
    %36 = vector.broadcast %cst_18 : f32 to vector<16x128xf32>
    %37 = arith.mulf %36, %35 : vector<16x128xf32>
    %cst_19 = arith.constant 5.000000e-01 : f32
    %38 = vector.broadcast %cst_19 : f32 to vector<16x128xf32>
    %39 = arith.addf %37, %38 : vector<16x128xf32>
    %40 = vector.extract_strided_slice %27 {offsets = [0, 128], sizes = [16, 128], strides = [1, 1]} : vector<16x512xf32> to vector<16x128xf32>
    %cst_20 = arith.constant 5.000000e-01 : f32
    %41 = vector.broadcast %cst_20 : f32 to vector<16x128xf32>
    %42 = arith.mulf %41, %40 : vector<16x128xf32>
    %43 = math.tanh %42 : vector<16x128xf32>
    %cst_21 = arith.constant 5.000000e-01 : f32
    %44 = vector.broadcast %cst_21 : f32 to vector<16x128xf32>
    %45 = arith.mulf %44, %43 : vector<16x128xf32>
    %cst_22 = arith.constant 5.000000e-01 : f32
    %46 = vector.broadcast %cst_22 : f32 to vector<16x128xf32>
    %47 = arith.addf %45, %46 : vector<16x128xf32>
    %48 = vector.extract_strided_slice %27 {offsets = [0, 256], sizes = [16, 128], strides = [1, 1]} : vector<16x512xf32> to vector<16x128xf32>
    %49 = math.tanh %48 : vector<16x128xf32>
    %50 = vector.extract_strided_slice %27 {offsets = [0, 384], sizes = [16, 128], strides = [1, 1]} : vector<16x512xf32> to vector<16x128xf32>
    %cst_23 = arith.constant 5.000000e-01 : f32
    %51 = vector.broadcast %cst_23 : f32 to vector<16x128xf32>
    %52 = arith.mulf %51, %50 : vector<16x128xf32>
    %53 = math.tanh %52 : vector<16x128xf32>
    %cst_24 = arith.constant 5.000000e-01 : f32
    %54 = vector.broadcast %cst_24 : f32 to vector<16x128xf32>
    %55 = arith.mulf %54, %53 : vector<16x128xf32>
    %cst_25 = arith.constant 5.000000e-01 : f32
    %56 = vector.broadcast %cst_25 : f32 to vector<16x128xf32>
    %57 = arith.addf %55, %56 : vector<16x128xf32>
    %58 = arith.mulf %47, %13 : vector<16x128xf32>
    %59 = arith.mulf %39, %49 : vector<16x128xf32>
    %60 = arith.addf %58, %59 : vector<16x128xf32>
    %61 = math.tanh %60 : vector<16x128xf32>
    %62 = arith.mulf %57, %61 : vector<16x128xf32>
    %63 = vector.extract_strided_slice %31 {offsets = [0, 0], sizes = [16, 128], strides = [1, 1]} : vector<16x512xf32> to vector<16x128xf32>
    %cst_26 = arith.constant 5.000000e-01 : f32
    %64 = vector.broadcast %cst_26 : f32 to vector<16x128xf32>
    %65 = arith.mulf %64, %63 : vector<16x128xf32>
    %66 = math.tanh %65 : vector<16x128xf32>
    %cst_27 = arith.constant 5.000000e-01 : f32
    %67 = vector.broadcast %cst_27 : f32 to vector<16x128xf32>
    %68 = arith.mulf %67, %66 : vector<16x128xf32>
    %cst_28 = arith.constant 5.000000e-01 : f32
    %69 = vector.broadcast %cst_28 : f32 to vector<16x128xf32>
    %70 = arith.addf %68, %69 : vector<16x128xf32>
    %71 = vector.extract_strided_slice %31 {offsets = [0, 128], sizes = [16, 128], strides = [1, 1]} : vector<16x512xf32> to vector<16x128xf32>
    %cst_29 = arith.constant 5.000000e-01 : f32
    %72 = vector.broadcast %cst_29 : f32 to vector<16x128xf32>
    %73 = arith.mulf %72, %71 : vector<16x128xf32>
    %74 = math.tanh %73 : vector<16x128xf32>
    %cst_30 = arith.constant 5.000000e-01 : f32
    %75 = vector.broadcast %cst_30 : f32 to vector<16x128xf32>
    %76 = arith.mulf %75, %74 : vector<16x128xf32>
    %cst_31 = arith.constant 5.000000e-01 : f32
    %77 = vector.broadcast %cst_31 : f32 to vector<16x128xf32>
    %78 = arith.addf %76, %77 : vector<16x128xf32>
    %79 = vector.extract_strided_slice %31 {offsets = [0, 256], sizes = [16, 128], strides = [1, 1]} : vector<16x512xf32> to vector<16x128xf32>
    %80 = math.tanh %79 : vector<16x128xf32>
    %81 = vector.extract_strided_slice %31 {offsets = [0, 384], sizes = [16, 128], strides = [1, 1]} : vector<16x512xf32> to vector<16x128xf32>
    %cst_32 = arith.constant 5.000000e-01 : f32
    %82 = vector.broadcast %cst_32 : f32 to vector<16x128xf32>
    %83 = arith.mulf %82, %81 : vector<16x128xf32>
    %84 = math.tanh %83 : vector<16x128xf32>
    %cst_33 = arith.constant 5.000000e-01 : f32
    %85 = vector.broadcast %cst_33 : f32 to vector<16x128xf32>
    %86 = arith.mulf %85, %84 : vector<16x128xf32>
    %cst_34 = arith.constant 5.000000e-01 : f32
    %87 = vector.broadcast %cst_34 : f32 to vector<16x128xf32>
    %88 = arith.addf %86, %87 : vector<16x128xf32>
    %89 = arith.mulf %78, %13 : vector<16x128xf32>
    %90 = arith.mulf %70, %80 : vector<16x128xf32>
    %91 = arith.addf %89, %90 : vector<16x128xf32>
    %92 = math.tanh %91 : vector<16x128xf32>
    %93 = arith.mulf %88, %92 : vector<16x128xf32>
    %94 = arith.index_cast %16 : i32 to index
    %c0_35 = arith.constant 0 : index
    %95 = vector.load %arg7[%94, %c0_35] : memref<128x128xf32, #tpu.memory_space<vmem>>, vector<16x128xf32>
    %96 = arith.index_cast %18 : i32 to index
    %c0_36 = arith.constant 0 : index
    %97 = vector.load %arg7[%96, %c0_36] : memref<128x128xf32, #tpu.memory_space<vmem>>, vector<16x128xf32>
    %98 = arith.mulf %62, %95 : vector<16x128xf32>
    %99 = arith.index_cast %16 : i32 to index
    %c0_37 = arith.constant 0 : index
    %100 = vector.load %arg5[%99, %c0_37] : memref<128x256xf32, #tpu.memory_space<vmem>>, vector<16x128xf32>
    tpu.vector_store %arg5[%99, %c0_37], %98 {strides = array<i32>} : memref<128x256xf32, #tpu.memory_space<vmem>>, vector<16x128xf32>,
    %101 = arith.mulf %93, %97 : vector<16x128xf32>
    %102 = arith.index_cast %18 : i32 to index
    %c128 = arith.constant 128 : index
    %103 = vector.load %arg5[%102, %c128] : memref<128x256xf32, #tpu.memory_space<vmem>>, vector<16x128xf32>
    tpu.vector_store %arg5[%102, %c128], %101 {strides = array<i32>} : memref<128x256xf32, #tpu.memory_space<vmem>>, vector<16x128xf32>,
    %cst_38 = arith.constant 0.000000e+00 : f32
    %104 = vector.broadcast %cst_38 : f32 to vector<16x128xf32>
    %105 = arith.cmpf ogt, %97, %104 : vector<16x128xf32>
    %106 = arith.select %105, %93, %13 : vector<16x128xi1>, vector<16x128xf32>
    %107 = arith.select %105, %91, %13 : vector<16x128xi1>, vector<16x128xf32>
    %c1_i32 = arith.constant 1 : i32
    %c7_i32_39 = arith.constant 7 : i32
    %108 = arith.subi %c7_i32_39, %c1_i32 : i32
    %c16_i32_40 = arith.constant 16 : i32
    %109 = arith.muli %c1_i32, %c16_i32_40 : i32
    %110 = tpu.assume_multiple %109, 16 : i32
    %c16_i32_41 = arith.constant 16 : i32
    %111 = arith.muli %108, %c16_i32_41 : i32
    %112 = tpu.assume_multiple %111, 16 : i32
    %113 = tpu.concatenate %62, %106 in 1 : vector<16x128xf32>, vector<16x128xf32> -> vector<16x256xf32>
    %114 = arith.truncf %113 : vector<16x256xf32> to vector<16x256xbf16>
    %cst_42 = arith.constant dense<0.000000e+00> : vector<16x1024xf32>
    %115 = tpu.matmul %114, %12, %cst_42 {dimension_numbers = #tpu.dot_dimension_numbers<[1], [0], [0], [1], [0, 0, 1, 1], [], []>} : vector<16x256xbf16>, vector<256x1024xbf16>, vector<16x1024xf32> -> vector<16x1024xf32>
    %116 = vector.extract_strided_slice %115 {offsets = [0, 0], sizes = [16, 512], strides = [1, 1]} : vector<16x1024xf32> to vector<16x512xf32>
    %117 = vector.extract_strided_slice %115 {offsets = [0, 512], sizes = [16, 512], strides = [1, 1]} : vector<16x1024xf32> to vector<16x512xf32>
    %118 = arith.index_cast %110 : i32 to index
    %c0_43 = arith.constant 0 : index
    %119 = vector.load %arg6[%118, %c0_43] : memref<128x1024xbf16, #tpu.memory_space<vmem>>, vector<16x512xbf16>
    %120 = arith.extf %119 : vector<16x512xbf16> to vector<16x512xf32>
    %121 = arith.addf %116, %120 : vector<16x512xf32>
    %122 = arith.index_cast %112 : i32 to index
    %c512_44 = arith.constant 512 : index
    %123 = vector.load %arg6[%122, %c512_44] : memref<128x1024xbf16, #tpu.memory_space<vmem>>, vector<16x512xbf16>
    %124 = arith.extf %123 : vector<16x512xbf16> to vector<16x512xf32>
    %125 = arith.addf %117, %124 : vector<16x512xf32>
    %126 = vector.extract_strided_slice %121 {offsets = [0, 0], sizes = [16, 128], strides = [1, 1]} : vector<16x512xf32> to vector<16x128xf32>
    %cst_45 = arith.constant 5.000000e-01 : f32
    %127 = vector.broadcast %cst_45 : f32 to vector<16x128xf32>
    %128 = arith.mulf %127, %126 : vector<16x128xf32>
    %129 = math.tanh %128 : vector<16x128xf32>
    %cst_46 = arith.constant 5.000000e-01 : f32
    %130 = vector.broadcast %cst_46 : f32 to vector<16x128xf32>
    %131 = arith.mulf %130, %129 : vector<16x128xf32>
    %cst_47 = arith.constant 5.000000e-01 : f32
    %132 = vector.broadcast %cst_47 : f32 to vector<16x128xf32>
    %133 = arith.addf %131, %132 : vector<16x128xf32>
    %134 = vector.extract_strided_slice %121 {offsets = [0, 128], sizes = [16, 128], strides = [1, 1]} : vector<16x512xf32> to vector<16x128xf32>
    %cst_48 = arith.constant 5.000000e-01 : f32
    %135 = vector.broadcast %cst_48 : f32 to vector<16x128xf32>
    %136 = arith.mulf %135, %134 : vector<16x128xf32>
    %137 = math.tanh %136 : vector<16x128xf32>
    %cst_49 = arith.constant 5.000000e-01 : f32
    %138 = vector.broadcast %cst_49 : f32 to vector<16x128xf32>
    %139 = arith.mulf %138, %137 : vector<16x128xf32>
    %cst_50 = arith.constant 5.000000e-01 : f32
    %140 = vector.broadcast %cst_50 : f32 to vector<16x128xf32>
    %141 = arith.addf %139, %140 : vector<16x128xf32>
    %142 = vector.extract_strided_slice %121 {offsets = [0, 256], sizes = [16, 128], strides = [1, 1]} : vector<16x512xf32> to vector<16x128xf32>
    %143 = math.tanh %142 : vector<16x128xf32>
    %144 = vector.extract_strided_slice %121 {offsets = [0, 384], sizes = [16, 128], strides = [1, 1]} : vector<16x512xf32> to vector<16x128xf32>
    %cst_51 = arith.constant 5.000000e-01 : f32
    %145 = vector.broadcast %cst_51 : f32 to vector<16x128xf32>
    %146 = arith.mulf %145, %144 : vector<16x128xf32>
    %147 = math.tanh %146 : vector<16x128xf32>
    %cst_52 = arith.constant 5.000000e-01 : f32
    %148 = vector.broadcast %cst_52 : f32 to vector<16x128xf32>
    %149 = arith.mulf %148, %147 : vector<16x128xf32>
    %cst_53 = arith.constant 5.000000e-01 : f32
    %150 = vector.broadcast %cst_53 : f32 to vector<16x128xf32>
    %151 = arith.addf %149, %150 : vector<16x128xf32>
    %152 = arith.mulf %141, %60 : vector<16x128xf32>
    %153 = arith.mulf %133, %143 : vector<16x128xf32>
    %154 = arith.addf %152, %153 : vector<16x128xf32>
    %155 = math.tanh %154 : vector<16x128xf32>
    %156 = arith.mulf %151, %155 : vector<16x128xf32>
    %157 = vector.extract_strided_slice %125 {offsets = [0, 0], sizes = [16, 128], strides = [1, 1]} : vector<16x512xf32> to vector<16x128xf32>
    %cst_54 = arith.constant 5.000000e-01 : f32
    %158 = vector.broadcast %cst_54 : f32 to vector<16x128xf32>
    %159 = arith.mulf %158, %157 : vector<16x128xf32>
    %160 = math.tanh %159 : vector<16x128xf32>
    %cst_55 = arith.constant 5.000000e-01 : f32
    %161 = vector.broadcast %cst_55 : f32 to vector<16x128xf32>
    %162 = arith.mulf %161, %160 : vector<16x128xf32>
    %cst_56 = arith.constant 5.000000e-01 : f32
    %163 = vector.broadcast %cst_56 : f32 to vector<16x128xf32>
    %164 = arith.addf %162, %163 : vector<16x128xf32>
    %165 = vector.extract_strided_slice %125 {offsets = [0, 128], sizes = [16, 128], strides = [1, 1]} : vector<16x512xf32> to vector<16x128xf32>
    %cst_57 = arith.constant 5.000000e-01 : f32
    %166 = vector.broadcast %cst_57 : f32 to vector<16x128xf32>
    %167 = arith.mulf %166, %165 : vector<16x128xf32>
    %168 = math.tanh %167 : vector<16x128xf32>
    %cst_58 = arith.constant 5.000000e-01 : f32
    %169 = vector.broadcast %cst_58 : f32 to vector<16x128xf32>
    %170 = arith.mulf %169, %168 : vector<16x128xf32>
    %cst_59 = arith.constant 5.000000e-01 : f32
    %171 = vector.broadcast %cst_59 : f32 to vector<16x128xf32>
    %172 = arith.addf %170, %171 : vector<16x128xf32>
    %173 = vector.extract_strided_slice %125 {offsets = [0, 256], sizes = [16, 128], strides = [1, 1]} : vector<16x512xf32> to vector<16x128xf32>
    %174 = math.tanh %173 : vector<16x128xf32>
    %175 = vector.extract_strided_slice %125 {offsets = [0, 384], sizes = [16, 128], strides = [1, 1]} : vector<16x512xf32> to vector<16x128xf32>
    %cst_60 = arith.constant 5.000000e-01 : f32
    %176 = vector.broadcast %cst_60 : f32 to vector<16x128xf32>
    %177 = arith.mulf %176, %175 : vector<16x128xf32>
    %178 = math.tanh %177 : vector<16x128xf32>
    %cst_61 = arith.constant 5.000000e-01 : f32
    %179 = vector.broadcast %cst_61 : f32 to vector<16x128xf32>
    %180 = arith.mulf %179, %178 : vector<16x128xf32>
    %cst_62 = arith.constant 5.000000e-01 : f32
    %181 = vector.broadcast %cst_62 : f32 to vector<16x128xf32>
    %182 = arith.addf %180, %181 : vector<16x128xf32>
    %183 = arith.mulf %172, %107 : vector<16x128xf32>
    %184 = arith.mulf %164, %174 : vector<16x128xf32>
    %185 = arith.addf %183, %184 : vector<16x128xf32>
    %186 = math.tanh %185 : vector<16x128xf32>
    %187 = arith.mulf %182, %186 : vector<16x128xf32>
    %188 = arith.index_cast %110 : i32 to index
    %c0_63 = arith.constant 0 : index
    %189 = vector.load %arg7[%188, %c0_63] : memref<128x128xf32, #tpu.memory_space<vmem>>, vector<16x128xf32>
    %190 = arith.index_cast %112 : i32 to index
    %c0_64 = arith.constant 0 : index
    %191 = vector.load %arg7[%190, %c0_64] : memref<128x128xf32, #tpu.memory_space<vmem>>, vector<16x128xf32>
    %192 = arith.mulf %156, %189 : vector<16x128xf32>
    %193 = arith.index_cast %110 : i32 to index
    %c0_65 = arith.constant 0 : index
    %194 = vector.load %arg5[%193, %c0_65] : memref<128x256xf32, #tpu.memory_space<vmem>>, vector<16x128xf32>
    tpu.vector_store %arg5[%193, %c0_65], %192 {strides = array<i32>} : memref<128x256xf32, #tpu.memory_space<vmem>>, vector<16x128xf32>,
    %195 = arith.mulf %187, %191 : vector<16x128xf32>
    %196 = arith.index_cast %112 : i32 to index
    %c128_66 = arith.constant 128 : index
    %197 = vector.load %arg5[%196, %c128_66] : memref<128x256xf32, #tpu.memory_space<vmem>>, vector<16x128xf32>
    tpu.vector_store %arg5[%196, %c128_66], %195 {strides = array<i32>} : memref<128x256xf32, #tpu.memory_space<vmem>>, vector<16x128xf32>,
    %cst_67 = arith.constant 0.000000e+00 : f32
    %198 = vector.broadcast %cst_67 : f32 to vector<16x128xf32>
    %199 = arith.cmpf ogt, %191, %198 : vector<16x128xf32>
    %200 = arith.select %199, %187, %106 : vector<16x128xi1>, vector<16x128xf32>
    %201 = arith.select %199, %185, %107 : vector<16x128xi1>, vector<16x128xf32>
    %c2_i32 = arith.constant 2 : i32
    %c7_i32_68 = arith.constant 7 : i32
    %202 = arith.subi %c7_i32_68, %c2_i32 : i32
    %c16_i32_69 = arith.constant 16 : i32
    %203 = arith.muli %c2_i32, %c16_i32_69 : i32
    %204 = tpu.assume_multiple %203, 16 : i32
    %c16_i32_70 = arith.constant 16 : i32
    %205 = arith.muli %202, %c16_i32_70 : i32
    %206 = tpu.assume_multiple %205, 16 : i32
    %207 = tpu.concatenate %156, %200 in 1 : vector<16x128xf32>, vector<16x128xf32> -> vector<16x256xf32>
    %208 = arith.truncf %207 : vector<16x256xf32> to vector<16x256xbf16>
    %cst_71 = arith.constant dense<0.000000e+00> : vector<16x1024xf32>
    %209 = tpu.matmul %208, %12, %cst_71 {dimension_numbers = #tpu.dot_dimension_numbers<[1], [0], [0], [1], [0, 0, 1, 1], [], []>} : vector<16x256xbf16>, vector<256x1024xbf16>, vector<16x1024xf32> -> vector<16x1024xf32>
    %210 = vector.extract_strided_slice %209 {offsets = [0, 0], sizes = [16, 512], strides = [1, 1]} : vector<16x1024xf32> to vector<16x512xf32>
    %211 = vector.extract_strided_slice %209 {offsets = [0, 512], sizes = [16, 512], strides = [1, 1]} : vector<16x1024xf32> to vector<16x512xf32>
    %212 = arith.index_cast %204 : i32 to index
    %c0_72 = arith.constant 0 : index
    %213 = vector.load %arg6[%212, %c0_72] : memref<128x1024xbf16, #tpu.memory_space<vmem>>, vector<16x512xbf16>
    %214 = arith.extf %213 : vector<16x512xbf16> to vector<16x512xf32>
    %215 = arith.addf %210, %214 : vector<16x512xf32>
    %216 = arith.index_cast %206 : i32 to index
    %c512_73 = arith.constant 512 : index
    %217 = vector.load %arg6[%216, %c512_73] : memref<128x1024xbf16, #tpu.memory_space<vmem>>, vector<16x512xbf16>
    %218 = arith.extf %217 : vector<16x512xbf16> to vector<16x512xf32>
    %219 = arith.addf %211, %218 : vector<16x512xf32>
    %220 = vector.extract_strided_slice %215 {offsets = [0, 0], sizes = [16, 128], strides = [1, 1]} : vector<16x512xf32> to vector<16x128xf32>
    %cst_74 = arith.constant 5.000000e-01 : f32
    %221 = vector.broadcast %cst_74 : f32 to vector<16x128xf32>
    %222 = arith.mulf %221, %220 : vector<16x128xf32>
    %223 = math.tanh %222 : vector<16x128xf32>
    %cst_75 = arith.constant 5.000000e-01 : f32
    %224 = vector.broadcast %cst_75 : f32 to vector<16x128xf32>
    %225 = arith.mulf %224, %223 : vector<16x128xf32>
    %cst_76 = arith.constant 5.000000e-01 : f32
    %226 = vector.broadcast %cst_76 : f32 to vector<16x128xf32>
    %227 = arith.addf %225, %226 : vector<16x128xf32>
    %228 = vector.extract_strided_slice %215 {offsets = [0, 128], sizes = [16, 128], strides = [1, 1]} : vector<16x512xf32> to vector<16x128xf32>
    %cst_77 = arith.constant 5.000000e-01 : f32
    %229 = vector.broadcast %cst_77 : f32 to vector<16x128xf32>
    %230 = arith.mulf %229, %228 : vector<16x128xf32>
    %231 = math.tanh %230 : vector<16x128xf32>
    %cst_78 = arith.constant 5.000000e-01 : f32
    %232 = vector.broadcast %cst_78 : f32 to vector<16x128xf32>
    %233 = arith.mulf %232, %231 : vector<16x128xf32>
    %cst_79 = arith.constant 5.000000e-01 : f32
    %234 = vector.broadcast %cst_79 : f32 to vector<16x128xf32>
    %235 = arith.addf %233, %234 : vector<16x128xf32>
    %236 = vector.extract_strided_slice %215 {offsets = [0, 256], sizes = [16, 128], strides = [1, 1]} : vector<16x512xf32> to vector<16x128xf32>
    %237 = math.tanh %236 : vector<16x128xf32>
    %238 = vector.extract_strided_slice %215 {offsets = [0, 384], sizes = [16, 128], strides = [1, 1]} : vector<16x512xf32> to vector<16x128xf32>
    %cst_80 = arith.constant 5.000000e-01 : f32
    %239 = vector.broadcast %cst_80 : f32 to vector<16x128xf32>
    %240 = arith.mulf %239, %238 : vector<16x128xf32>
    %241 = math.tanh %240 : vector<16x128xf32>
    %cst_81 = arith.constant 5.000000e-01 : f32
    %242 = vector.broadcast %cst_81 : f32 to vector<16x128xf32>
    %243 = arith.mulf %242, %241 : vector<16x128xf32>
    %cst_82 = arith.constant 5.000000e-01 : f32
    %244 = vector.broadcast %cst_82 : f32 to vector<16x128xf32>
    %245 = arith.addf %243, %244 : vector<16x128xf32>
    %246 = arith.mulf %235, %154 : vector<16x128xf32>
    %247 = arith.mulf %227, %237 : vector<16x128xf32>
    %248 = arith.addf %246, %247 : vector<16x128xf32>
    %249 = math.tanh %248 : vector<16x128xf32>
    %250 = arith.mulf %245, %249 : vector<16x128xf32>
    %251 = vector.extract_strided_slice %219 {offsets = [0, 0], sizes = [16, 128], strides = [1, 1]} : vector<16x512xf32> to vector<16x128xf32>
    %cst_83 = arith.constant 5.000000e-01 : f32
    %252 = vector.broadcast %cst_83 : f32 to vector<16x128xf32>
    %253 = arith.mulf %252, %251 : vector<16x128xf32>
    %254 = math.tanh %253 : vector<16x128xf32>
    %cst_84 = arith.constant 5.000000e-01 : f32
    %255 = vector.broadcast %cst_84 : f32 to vector<16x128xf32>
    %256 = arith.mulf %255, %254 : vector<16x128xf32>
    %cst_85 = arith.constant 5.000000e-01 : f32
    %257 = vector.broadcast %cst_85 : f32 to vector<16x128xf32>
    %258 = arith.addf %256, %257 : vector<16x128xf32>
    %259 = vector.extract_strided_slice %219 {offsets = [0, 128], sizes = [16, 128], strides = [1, 1]} : vector<16x512xf32> to vector<16x128xf32>
    %cst_86 = arith.constant 5.000000e-01 : f32
    %260 = vector.broadcast %cst_86 : f32 to vector<16x128xf32>
    %261 = arith.mulf %260, %259 : vector<16x128xf32>
    %262 = math.tanh %261 : vector<16x128xf32>
    %cst_87 = arith.constant 5.000000e-01 : f32
    %263 = vector.broadcast %cst_87 : f32 to vector<16x128xf32>
    %264 = arith.mulf %263, %262 : vector<16x128xf32>
    %cst_88 = arith.constant 5.000000e-01 : f32
    %265 = vector.broadcast %cst_88 : f32 to vector<16x128xf32>
    %266 = arith.addf %264, %265 : vector<16x128xf32>
    %267 = vector.extract_strided_slice %219 {offsets = [0, 256], sizes = [16, 128], strides = [1, 1]} : vector<16x512xf32> to vector<16x128xf32>
    %268 = math.tanh %267 : vector<16x128xf32>
    %269 = vector.extract_strided_slice %219 {offsets = [0, 384], sizes = [16, 128], strides = [1, 1]} : vector<16x512xf32> to vector<16x128xf32>
    %cst_89 = arith.constant 5.000000e-01 : f32
    %270 = vector.broadcast %cst_89 : f32 to vector<16x128xf32>
    %271 = arith.mulf %270, %269 : vector<16x128xf32>
    %272 = math.tanh %271 : vector<16x128xf32>
    %cst_90 = arith.constant 5.000000e-01 : f32
    %273 = vector.broadcast %cst_90 : f32 to vector<16x128xf32>
    %274 = arith.mulf %273, %272 : vector<16x128xf32>
    %cst_91 = arith.constant 5.000000e-01 : f32
    %275 = vector.broadcast %cst_91 : f32 to vector<16x128xf32>
    %276 = arith.addf %274, %275 : vector<16x128xf32>
    %277 = arith.mulf %266, %201 : vector<16x128xf32>
    %278 = arith.mulf %258, %268 : vector<16x128xf32>
    %279 = arith.addf %277, %278 : vector<16x128xf32>
    %280 = math.tanh %279 : vector<16x128xf32>
    %281 = arith.mulf %276, %280 : vector<16x128xf32>
    %282 = arith.index_cast %204 : i32 to index
    %c0_92 = arith.constant 0 : index
    %283 = vector.load %arg7[%282, %c0_92] : memref<128x128xf32, #tpu.memory_space<vmem>>, vector<16x128xf32>
    %284 = arith.index_cast %206 : i32 to index
    %c0_93 = arith.constant 0 : index
    %285 = vector.load %arg7[%284, %c0_93] : memref<128x128xf32, #tpu.memory_space<vmem>>, vector<16x128xf32>
    %286 = arith.mulf %250, %283 : vector<16x128xf32>
    %287 = arith.index_cast %204 : i32 to index
    %c0_94 = arith.constant 0 : index
    %288 = vector.load %arg5[%287, %c0_94] : memref<128x256xf32, #tpu.memory_space<vmem>>, vector<16x128xf32>
    tpu.vector_store %arg5[%287, %c0_94], %286 {strides = array<i32>} : memref<128x256xf32, #tpu.memory_space<vmem>>, vector<16x128xf32>,
    %289 = arith.mulf %281, %285 : vector<16x128xf32>
    %290 = arith.index_cast %206 : i32 to index
    %c128_95 = arith.constant 128 : index
    %291 = vector.load %arg5[%290, %c128_95] : memref<128x256xf32, #tpu.memory_space<vmem>>, vector<16x128xf32>
    tpu.vector_store %arg5[%290, %c128_95], %289 {strides = array<i32>} : memref<128x256xf32, #tpu.memory_space<vmem>>, vector<16x128xf32>,
    %cst_96 = arith.constant 0.000000e+00 : f32
    %292 = vector.broadcast %cst_96 : f32 to vector<16x128xf32>
    %293 = arith.cmpf ogt, %285, %292 : vector<16x128xf32>
    %294 = arith.select %293, %281, %200 : vector<16x128xi1>, vector<16x128xf32>
    %295 = arith.select %293, %279, %201 : vector<16x128xi1>, vector<16x128xf32>
    %c3_i32 = arith.constant 3 : i32
    %c7_i32_97 = arith.constant 7 : i32
    %296 = arith.subi %c7_i32_97, %c3_i32 : i32
    %c16_i32_98 = arith.constant 16 : i32
    %297 = arith.muli %c3_i32, %c16_i32_98 : i32
    %298 = tpu.assume_multiple %297, 16 : i32
    %c16_i32_99 = arith.constant 16 : i32
    %299 = arith.muli %296, %c16_i32_99 : i32
    %300 = tpu.assume_multiple %299, 16 : i32
    %301 = tpu.concatenate %250, %294 in 1 : vector<16x128xf32>, vector<16x128xf32> -> vector<16x256xf32>
    %302 = arith.truncf %301 : vector<16x256xf32> to vector<16x256xbf16>
    %cst_100 = arith.constant dense<0.000000e+00> : vector<16x1024xf32>
    %303 = tpu.matmul %302, %12, %cst_100 {dimension_numbers = #tpu.dot_dimension_numbers<[1], [0], [0], [1], [0, 0, 1, 1], [], []>} : vector<16x256xbf16>, vector<256x1024xbf16>, vector<16x1024xf32> -> vector<16x1024xf32>
    %304 = vector.extract_strided_slice %303 {offsets = [0, 0], sizes = [16, 512], strides = [1, 1]} : vector<16x1024xf32> to vector<16x512xf32>
    %305 = vector.extract_strided_slice %303 {offsets = [0, 512], sizes = [16, 512], strides = [1, 1]} : vector<16x1024xf32> to vector<16x512xf32>
    %306 = arith.index_cast %298 : i32 to index
    %c0_101 = arith.constant 0 : index
    %307 = vector.load %arg6[%306, %c0_101] : memref<128x1024xbf16, #tpu.memory_space<vmem>>, vector<16x512xbf16>
    %308 = arith.extf %307 : vector<16x512xbf16> to vector<16x512xf32>
    %309 = arith.addf %304, %308 : vector<16x512xf32>
    %310 = arith.index_cast %300 : i32 to index
    %c512_102 = arith.constant 512 : index
    %311 = vector.load %arg6[%310, %c512_102] : memref<128x1024xbf16, #tpu.memory_space<vmem>>, vector<16x512xbf16>
    %312 = arith.extf %311 : vector<16x512xbf16> to vector<16x512xf32>
    %313 = arith.addf %305, %312 : vector<16x512xf32>
    %314 = vector.extract_strided_slice %309 {offsets = [0, 0], sizes = [16, 128], strides = [1, 1]} : vector<16x512xf32> to vector<16x128xf32>
    %cst_103 = arith.constant 5.000000e-01 : f32
    %315 = vector.broadcast %cst_103 : f32 to vector<16x128xf32>
    %316 = arith.mulf %315, %314 : vector<16x128xf32>
    %317 = math.tanh %316 : vector<16x128xf32>
    %cst_104 = arith.constant 5.000000e-01 : f32
    %318 = vector.broadcast %cst_104 : f32 to vector<16x128xf32>
    %319 = arith.mulf %318, %317 : vector<16x128xf32>
    %cst_105 = arith.constant 5.000000e-01 : f32
    %320 = vector.broadcast %cst_105 : f32 to vector<16x128xf32>
    %321 = arith.addf %319, %320 : vector<16x128xf32>
    %322 = vector.extract_strided_slice %309 {offsets = [0, 128], sizes = [16, 128], strides = [1, 1]} : vector<16x512xf32> to vector<16x128xf32>
    %cst_106 = arith.constant 5.000000e-01 : f32
    %323 = vector.broadcast %cst_106 : f32 to vector<16x128xf32>
    %324 = arith.mulf %323, %322 : vector<16x128xf32>
    %325 = math.tanh %324 : vector<16x128xf32>
    %cst_107 = arith.constant 5.000000e-01 : f32
    %326 = vector.broadcast %cst_107 : f32 to vector<16x128xf32>
    %327 = arith.mulf %326, %325 : vector<16x128xf32>
    %cst_108 = arith.constant 5.000000e-01 : f32
    %328 = vector.broadcast %cst_108 : f32 to vector<16x128xf32>
    %329 = arith.addf %327, %328 : vector<16x128xf32>
    %330 = vector.extract_strided_slice %309 {offsets = [0, 256], sizes = [16, 128], strides = [1, 1]} : vector<16x512xf32> to vector<16x128xf32>
    %331 = math.tanh %330 : vector<16x128xf32>
    %332 = vector.extract_strided_slice %309 {offsets = [0, 384], sizes = [16, 128], strides = [1, 1]} : vector<16x512xf32> to vector<16x128xf32>
    %cst_109 = arith.constant 5.000000e-01 : f32
    %333 = vector.broadcast %cst_109 : f32 to vector<16x128xf32>
    %334 = arith.mulf %333, %332 : vector<16x128xf32>
    %335 = math.tanh %334 : vector<16x128xf32>
    %cst_110 = arith.constant 5.000000e-01 : f32
    %336 = vector.broadcast %cst_110 : f32 to vector<16x128xf32>
    %337 = arith.mulf %336, %335 : vector<16x128xf32>
    %cst_111 = arith.constant 5.000000e-01 : f32
    %338 = vector.broadcast %cst_111 : f32 to vector<16x128xf32>
    %339 = arith.addf %337, %338 : vector<16x128xf32>
    %340 = arith.mulf %329, %248 : vector<16x128xf32>
    %341 = arith.mulf %321, %331 : vector<16x128xf32>
    %342 = arith.addf %340, %341 : vector<16x128xf32>
    %343 = math.tanh %342 : vector<16x128xf32>
    %344 = arith.mulf %339, %343 : vector<16x128xf32>
    %345 = vector.extract_strided_slice %313 {offsets = [0, 0], sizes = [16, 128], strides = [1, 1]} : vector<16x512xf32> to vector<16x128xf32>
    %cst_112 = arith.constant 5.000000e-01 : f32
    %346 = vector.broadcast %cst_112 : f32 to vector<16x128xf32>
    %347 = arith.mulf %346, %345 : vector<16x128xf32>
    %348 = math.tanh %347 : vector<16x128xf32>
    %cst_113 = arith.constant 5.000000e-01 : f32
    %349 = vector.broadcast %cst_113 : f32 to vector<16x128xf32>
    %350 = arith.mulf %349, %348 : vector<16x128xf32>
    %cst_114 = arith.constant 5.000000e-01 : f32
    %351 = vector.broadcast %cst_114 : f32 to vector<16x128xf32>
    %352 = arith.addf %350, %351 : vector<16x128xf32>
    %353 = vector.extract_strided_slice %313 {offsets = [0, 128], sizes = [16, 128], strides = [1, 1]} : vector<16x512xf32> to vector<16x128xf32>
    %cst_115 = arith.constant 5.000000e-01 : f32
    %354 = vector.broadcast %cst_115 : f32 to vector<16x128xf32>
    %355 = arith.mulf %354, %353 : vector<16x128xf32>
    %356 = math.tanh %355 : vector<16x128xf32>
    %cst_116 = arith.constant 5.000000e-01 : f32
    %357 = vector.broadcast %cst_116 : f32 to vector<16x128xf32>
    %358 = arith.mulf %357, %356 : vector<16x128xf32>
    %cst_117 = arith.constant 5.000000e-01 : f32
    %359 = vector.broadcast %cst_117 : f32 to vector<16x128xf32>
    %360 = arith.addf %358, %359 : vector<16x128xf32>
    %361 = vector.extract_strided_slice %313 {offsets = [0, 256], sizes = [16, 128], strides = [1, 1]} : vector<16x512xf32> to vector<16x128xf32>
    %362 = math.tanh %361 : vector<16x128xf32>
    %363 = vector.extract_strided_slice %313 {offsets = [0, 384], sizes = [16, 128], strides = [1, 1]} : vector<16x512xf32> to vector<16x128xf32>
    %cst_118 = arith.constant 5.000000e-01 : f32
    %364 = vector.broadcast %cst_118 : f32 to vector<16x128xf32>
    %365 = arith.mulf %364, %363 : vector<16x128xf32>
    %366 = math.tanh %365 : vector<16x128xf32>
    %cst_119 = arith.constant 5.000000e-01 : f32
    %367 = vector.broadcast %cst_119 : f32 to vector<16x128xf32>
    %368 = arith.mulf %367, %366 : vector<16x128xf32>
    %cst_120 = arith.constant 5.000000e-01 : f32
    %369 = vector.broadcast %cst_120 : f32 to vector<16x128xf32>
    %370 = arith.addf %368, %369 : vector<16x128xf32>
    %371 = arith.mulf %360, %295 : vector<16x128xf32>
    %372 = arith.mulf %352, %362 : vector<16x128xf32>
    %373 = arith.addf %371, %372 : vector<16x128xf32>
    %374 = math.tanh %373 : vector<16x128xf32>
    %375 = arith.mulf %370, %374 : vector<16x128xf32>
    %376 = arith.index_cast %298 : i32 to index
    %c0_121 = arith.constant 0 : index
    %377 = vector.load %arg7[%376, %c0_121] : memref<128x128xf32, #tpu.memory_space<vmem>>, vector<16x128xf32>
    %378 = arith.index_cast %300 : i32 to index
    %c0_122 = arith.constant 0 : index
    %379 = vector.load %arg7[%378, %c0_122] : memref<128x128xf32, #tpu.memory_space<vmem>>, vector<16x128xf32>
    %380 = arith.mulf %344, %377 : vector<16x128xf32>
    %381 = arith.index_cast %298 : i32 to index
    %c0_123 = arith.constant 0 : index
    %382 = vector.load %arg5[%381, %c0_123] : memref<128x256xf32, #tpu.memory_space<vmem>>, vector<16x128xf32>
    tpu.vector_store %arg5[%381, %c0_123], %380 {strides = array<i32>} : memref<128x256xf32, #tpu.memory_space<vmem>>, vector<16x128xf32>,
    %383 = arith.mulf %375, %379 : vector<16x128xf32>
    %384 = arith.index_cast %300 : i32 to index
    %c128_124 = arith.constant 128 : index
    %385 = vector.load %arg5[%384, %c128_124] : memref<128x256xf32, #tpu.memory_space<vmem>>, vector<16x128xf32>
    tpu.vector_store %arg5[%384, %c128_124], %383 {strides = array<i32>} : memref<128x256xf32, #tpu.memory_space<vmem>>, vector<16x128xf32>,
    %cst_125 = arith.constant 0.000000e+00 : f32
    %386 = vector.broadcast %cst_125 : f32 to vector<16x128xf32>
    %387 = arith.cmpf ogt, %379, %386 : vector<16x128xf32>
    %388 = arith.select %387, %375, %294 : vector<16x128xi1>, vector<16x128xf32>
    %389 = arith.select %387, %373, %295 : vector<16x128xi1>, vector<16x128xf32>
    %c4_i32 = arith.constant 4 : i32
    %c7_i32_126 = arith.constant 7 : i32
    %390 = arith.subi %c7_i32_126, %c4_i32 : i32
    %c16_i32_127 = arith.constant 16 : i32
    %391 = arith.muli %c4_i32, %c16_i32_127 : i32
    %392 = tpu.assume_multiple %391, 16 : i32
    %c16_i32_128 = arith.constant 16 : i32
    %393 = arith.muli %390, %c16_i32_128 : i32
    %394 = tpu.assume_multiple %393, 16 : i32
    %395 = tpu.concatenate %344, %388 in 1 : vector<16x128xf32>, vector<16x128xf32> -> vector<16x256xf32>
    %396 = arith.truncf %395 : vector<16x256xf32> to vector<16x256xbf16>
    %cst_129 = arith.constant dense<0.000000e+00> : vector<16x1024xf32>
    %397 = tpu.matmul %396, %12, %cst_129 {dimension_numbers = #tpu.dot_dimension_numbers<[1], [0], [0], [1], [0, 0, 1, 1], [], []>} : vector<16x256xbf16>, vector<256x1024xbf16>, vector<16x1024xf32> -> vector<16x1024xf32>
    %398 = vector.extract_strided_slice %397 {offsets = [0, 0], sizes = [16, 512], strides = [1, 1]} : vector<16x1024xf32> to vector<16x512xf32>
    %399 = vector.extract_strided_slice %397 {offsets = [0, 512], sizes = [16, 512], strides = [1, 1]} : vector<16x1024xf32> to vector<16x512xf32>
    %400 = arith.index_cast %392 : i32 to index
    %c0_130 = arith.constant 0 : index
    %401 = vector.load %arg6[%400, %c0_130] : memref<128x1024xbf16, #tpu.memory_space<vmem>>, vector<16x512xbf16>
    %402 = arith.extf %401 : vector<16x512xbf16> to vector<16x512xf32>
    %403 = arith.addf %398, %402 : vector<16x512xf32>
    %404 = arith.index_cast %394 : i32 to index
    %c512_131 = arith.constant 512 : index
    %405 = vector.load %arg6[%404, %c512_131] : memref<128x1024xbf16, #tpu.memory_space<vmem>>, vector<16x512xbf16>
    %406 = arith.extf %405 : vector<16x512xbf16> to vector<16x512xf32>
    %407 = arith.addf %399, %406 : vector<16x512xf32>
    %408 = vector.extract_strided_slice %403 {offsets = [0, 0], sizes = [16, 128], strides = [1, 1]} : vector<16x512xf32> to vector<16x128xf32>
    %cst_132 = arith.constant 5.000000e-01 : f32
    %409 = vector.broadcast %cst_132 : f32 to vector<16x128xf32>
    %410 = arith.mulf %409, %408 : vector<16x128xf32>
    %411 = math.tanh %410 : vector<16x128xf32>
    %cst_133 = arith.constant 5.000000e-01 : f32
    %412 = vector.broadcast %cst_133 : f32 to vector<16x128xf32>
    %413 = arith.mulf %412, %411 : vector<16x128xf32>
    %cst_134 = arith.constant 5.000000e-01 : f32
    %414 = vector.broadcast %cst_134 : f32 to vector<16x128xf32>
    %415 = arith.addf %413, %414 : vector<16x128xf32>
    %416 = vector.extract_strided_slice %403 {offsets = [0, 128], sizes = [16, 128], strides = [1, 1]} : vector<16x512xf32> to vector<16x128xf32>
    %cst_135 = arith.constant 5.000000e-01 : f32
    %417 = vector.broadcast %cst_135 : f32 to vector<16x128xf32>
    %418 = arith.mulf %417, %416 : vector<16x128xf32>
    %419 = math.tanh %418 : vector<16x128xf32>
    %cst_136 = arith.constant 5.000000e-01 : f32
    %420 = vector.broadcast %cst_136 : f32 to vector<16x128xf32>
    %421 = arith.mulf %420, %419 : vector<16x128xf32>
    %cst_137 = arith.constant 5.000000e-01 : f32
    %422 = vector.broadcast %cst_137 : f32 to vector<16x128xf32>
    %423 = arith.addf %421, %422 : vector<16x128xf32>
    %424 = vector.extract_strided_slice %403 {offsets = [0, 256], sizes = [16, 128], strides = [1, 1]} : vector<16x512xf32> to vector<16x128xf32>
    %425 = math.tanh %424 : vector<16x128xf32>
    %426 = vector.extract_strided_slice %403 {offsets = [0, 384], sizes = [16, 128], strides = [1, 1]} : vector<16x512xf32> to vector<16x128xf32>
    %cst_138 = arith.constant 5.000000e-01 : f32
    %427 = vector.broadcast %cst_138 : f32 to vector<16x128xf32>
    %428 = arith.mulf %427, %426 : vector<16x128xf32>
    %429 = math.tanh %428 : vector<16x128xf32>
    %cst_139 = arith.constant 5.000000e-01 : f32
    %430 = vector.broadcast %cst_139 : f32 to vector<16x128xf32>
    %431 = arith.mulf %430, %429 : vector<16x128xf32>
    %cst_140 = arith.constant 5.000000e-01 : f32
    %432 = vector.broadcast %cst_140 : f32 to vector<16x128xf32>
    %433 = arith.addf %431, %432 : vector<16x128xf32>
    %434 = arith.mulf %423, %342 : vector<16x128xf32>
    %435 = arith.mulf %415, %425 : vector<16x128xf32>
    %436 = arith.addf %434, %435 : vector<16x128xf32>
    %437 = math.tanh %436 : vector<16x128xf32>
    %438 = arith.mulf %433, %437 : vector<16x128xf32>
    %439 = vector.extract_strided_slice %407 {offsets = [0, 0], sizes = [16, 128], strides = [1, 1]} : vector<16x512xf32> to vector<16x128xf32>
    %cst_141 = arith.constant 5.000000e-01 : f32
    %440 = vector.broadcast %cst_141 : f32 to vector<16x128xf32>
    %441 = arith.mulf %440, %439 : vector<16x128xf32>
    %442 = math.tanh %441 : vector<16x128xf32>
    %cst_142 = arith.constant 5.000000e-01 : f32
    %443 = vector.broadcast %cst_142 : f32 to vector<16x128xf32>
    %444 = arith.mulf %443, %442 : vector<16x128xf32>
    %cst_143 = arith.constant 5.000000e-01 : f32
    %445 = vector.broadcast %cst_143 : f32 to vector<16x128xf32>
    %446 = arith.addf %444, %445 : vector<16x128xf32>
    %447 = vector.extract_strided_slice %407 {offsets = [0, 128], sizes = [16, 128], strides = [1, 1]} : vector<16x512xf32> to vector<16x128xf32>
    %cst_144 = arith.constant 5.000000e-01 : f32
    %448 = vector.broadcast %cst_144 : f32 to vector<16x128xf32>
    %449 = arith.mulf %448, %447 : vector<16x128xf32>
    %450 = math.tanh %449 : vector<16x128xf32>
    %cst_145 = arith.constant 5.000000e-01 : f32
    %451 = vector.broadcast %cst_145 : f32 to vector<16x128xf32>
    %452 = arith.mulf %451, %450 : vector<16x128xf32>
    %cst_146 = arith.constant 5.000000e-01 : f32
    %453 = vector.broadcast %cst_146 : f32 to vector<16x128xf32>
    %454 = arith.addf %452, %453 : vector<16x128xf32>
    %455 = vector.extract_strided_slice %407 {offsets = [0, 256], sizes = [16, 128], strides = [1, 1]} : vector<16x512xf32> to vector<16x128xf32>
    %456 = math.tanh %455 : vector<16x128xf32>
    %457 = vector.extract_strided_slice %407 {offsets = [0, 384], sizes = [16, 128], strides = [1, 1]} : vector<16x512xf32> to vector<16x128xf32>
    %cst_147 = arith.constant 5.000000e-01 : f32
    %458 = vector.broadcast %cst_147 : f32 to vector<16x128xf32>
    %459 = arith.mulf %458, %457 : vector<16x128xf32>
    %460 = math.tanh %459 : vector<16x128xf32>
    %cst_148 = arith.constant 5.000000e-01 : f32
    %461 = vector.broadcast %cst_148 : f32 to vector<16x128xf32>
    %462 = arith.mulf %461, %460 : vector<16x128xf32>
    %cst_149 = arith.constant 5.000000e-01 : f32
    %463 = vector.broadcast %cst_149 : f32 to vector<16x128xf32>
    %464 = arith.addf %462, %463 : vector<16x128xf32>
    %465 = arith.mulf %454, %389 : vector<16x128xf32>
    %466 = arith.mulf %446, %456 : vector<16x128xf32>
    %467 = arith.addf %465, %466 : vector<16x128xf32>
    %468 = math.tanh %467 : vector<16x128xf32>
    %469 = arith.mulf %464, %468 : vector<16x128xf32>
    %470 = arith.index_cast %392 : i32 to index
    %c0_150 = arith.constant 0 : index
    %471 = vector.load %arg7[%470, %c0_150] : memref<128x128xf32, #tpu.memory_space<vmem>>, vector<16x128xf32>
    %472 = arith.index_cast %394 : i32 to index
    %c0_151 = arith.constant 0 : index
    %473 = vector.load %arg7[%472, %c0_151] : memref<128x128xf32, #tpu.memory_space<vmem>>, vector<16x128xf32>
    %474 = arith.mulf %438, %471 : vector<16x128xf32>
    %475 = arith.index_cast %392 : i32 to index
    %c0_152 = arith.constant 0 : index
    %476 = vector.load %arg5[%475, %c0_152] : memref<128x256xf32, #tpu.memory_space<vmem>>, vector<16x128xf32>
    tpu.vector_store %arg5[%475, %c0_152], %474 {strides = array<i32>} : memref<128x256xf32, #tpu.memory_space<vmem>>, vector<16x128xf32>,
    %477 = arith.mulf %469, %473 : vector<16x128xf32>
    %478 = arith.index_cast %394 : i32 to index
    %c128_153 = arith.constant 128 : index
    %479 = vector.load %arg5[%478, %c128_153] : memref<128x256xf32, #tpu.memory_space<vmem>>, vector<16x128xf32>
    tpu.vector_store %arg5[%478, %c128_153], %477 {strides = array<i32>} : memref<128x256xf32, #tpu.memory_space<vmem>>, vector<16x128xf32>,
    %cst_154 = arith.constant 0.000000e+00 : f32
    %480 = vector.broadcast %cst_154 : f32 to vector<16x128xf32>
    %481 = arith.cmpf ogt, %473, %480 : vector<16x128xf32>
    %482 = arith.select %481, %469, %388 : vector<16x128xi1>, vector<16x128xf32>
    %483 = arith.select %481, %467, %389 : vector<16x128xi1>, vector<16x128xf32>
    %c5_i32 = arith.constant 5 : i32
    %c7_i32_155 = arith.constant 7 : i32
    %484 = arith.subi %c7_i32_155, %c5_i32 : i32
    %c16_i32_156 = arith.constant 16 : i32
    %485 = arith.muli %c5_i32, %c16_i32_156 : i32
    %486 = tpu.assume_multiple %485, 16 : i32
    %c16_i32_157 = arith.constant 16 : i32
    %487 = arith.muli %484, %c16_i32_157 : i32
    %488 = tpu.assume_multiple %487, 16 : i32
    %489 = tpu.concatenate %438, %482 in 1 : vector<16x128xf32>, vector<16x128xf32> -> vector<16x256xf32>
    %490 = arith.truncf %489 : vector<16x256xf32> to vector<16x256xbf16>
    %cst_158 = arith.constant dense<0.000000e+00> : vector<16x1024xf32>
    %491 = tpu.matmul %490, %12, %cst_158 {dimension_numbers = #tpu.dot_dimension_numbers<[1], [0], [0], [1], [0, 0, 1, 1], [], []>} : vector<16x256xbf16>, vector<256x1024xbf16>, vector<16x1024xf32> -> vector<16x1024xf32>
    %492 = vector.extract_strided_slice %491 {offsets = [0, 0], sizes = [16, 512], strides = [1, 1]} : vector<16x1024xf32> to vector<16x512xf32>
    %493 = vector.extract_strided_slice %491 {offsets = [0, 512], sizes = [16, 512], strides = [1, 1]} : vector<16x1024xf32> to vector<16x512xf32>
    %494 = arith.index_cast %486 : i32 to index
    %c0_159 = arith.constant 0 : index
    %495 = vector.load %arg6[%494, %c0_159] : memref<128x1024xbf16, #tpu.memory_space<vmem>>, vector<16x512xbf16>
    %496 = arith.extf %495 : vector<16x512xbf16> to vector<16x512xf32>
    %497 = arith.addf %492, %496 : vector<16x512xf32>
    %498 = arith.index_cast %488 : i32 to index
    %c512_160 = arith.constant 512 : index
    %499 = vector.load %arg6[%498, %c512_160] : memref<128x1024xbf16, #tpu.memory_space<vmem>>, vector<16x512xbf16>
    %500 = arith.extf %499 : vector<16x512xbf16> to vector<16x512xf32>
    %501 = arith.addf %493, %500 : vector<16x512xf32>
    %502 = vector.extract_strided_slice %497 {offsets = [0, 0], sizes = [16, 128], strides = [1, 1]} : vector<16x512xf32> to vector<16x128xf32>
    %cst_161 = arith.constant 5.000000e-01 : f32
    %503 = vector.broadcast %cst_161 : f32 to vector<16x128xf32>
    %504 = arith.mulf %503, %502 : vector<16x128xf32>
    %505 = math.tanh %504 : vector<16x128xf32>
    %cst_162 = arith.constant 5.000000e-01 : f32
    %506 = vector.broadcast %cst_162 : f32 to vector<16x128xf32>
    %507 = arith.mulf %506, %505 : vector<16x128xf32>
    %cst_163 = arith.constant 5.000000e-01 : f32
    %508 = vector.broadcast %cst_163 : f32 to vector<16x128xf32>
    %509 = arith.addf %507, %508 : vector<16x128xf32>
    %510 = vector.extract_strided_slice %497 {offsets = [0, 128], sizes = [16, 128], strides = [1, 1]} : vector<16x512xf32> to vector<16x128xf32>
    %cst_164 = arith.constant 5.000000e-01 : f32
    %511 = vector.broadcast %cst_164 : f32 to vector<16x128xf32>
    %512 = arith.mulf %511, %510 : vector<16x128xf32>
    %513 = math.tanh %512 : vector<16x128xf32>
    %cst_165 = arith.constant 5.000000e-01 : f32
    %514 = vector.broadcast %cst_165 : f32 to vector<16x128xf32>
    %515 = arith.mulf %514, %513 : vector<16x128xf32>
    %cst_166 = arith.constant 5.000000e-01 : f32
    %516 = vector.broadcast %cst_166 : f32 to vector<16x128xf32>
    %517 = arith.addf %515, %516 : vector<16x128xf32>
    %518 = vector.extract_strided_slice %497 {offsets = [0, 256], sizes = [16, 128], strides = [1, 1]} : vector<16x512xf32> to vector<16x128xf32>
    %519 = math.tanh %518 : vector<16x128xf32>
    %520 = vector.extract_strided_slice %497 {offsets = [0, 384], sizes = [16, 128], strides = [1, 1]} : vector<16x512xf32> to vector<16x128xf32>
    %cst_167 = arith.constant 5.000000e-01 : f32
    %521 = vector.broadcast %cst_167 : f32 to vector<16x128xf32>
    %522 = arith.mulf %521, %520 : vector<16x128xf32>
    %523 = math.tanh %522 : vector<16x128xf32>
    %cst_168 = arith.constant 5.000000e-01 : f32
    %524 = vector.broadcast %cst_168 : f32 to vector<16x128xf32>
    %525 = arith.mulf %524, %523 : vector<16x128xf32>
    %cst_169 = arith.constant 5.000000e-01 : f32
    %526 = vector.broadcast %cst_169 : f32 to vector<16x128xf32>
    %527 = arith.addf %525, %526 : vector<16x128xf32>
    %528 = arith.mulf %517, %436 : vector<16x128xf32>
    %529 = arith.mulf %509, %519 : vector<16x128xf32>
    %530 = arith.addf %528, %529 : vector<16x128xf32>
    %531 = math.tanh %530 : vector<16x128xf32>
    %532 = arith.mulf %527, %531 : vector<16x128xf32>
    %533 = vector.extract_strided_slice %501 {offsets = [0, 0], sizes = [16, 128], strides = [1, 1]} : vector<16x512xf32> to vector<16x128xf32>
    %cst_170 = arith.constant 5.000000e-01 : f32
    %534 = vector.broadcast %cst_170 : f32 to vector<16x128xf32>
    %535 = arith.mulf %534, %533 : vector<16x128xf32>
    %536 = math.tanh %535 : vector<16x128xf32>
    %cst_171 = arith.constant 5.000000e-01 : f32
    %537 = vector.broadcast %cst_171 : f32 to vector<16x128xf32>
    %538 = arith.mulf %537, %536 : vector<16x128xf32>
    %cst_172 = arith.constant 5.000000e-01 : f32
    %539 = vector.broadcast %cst_172 : f32 to vector<16x128xf32>
    %540 = arith.addf %538, %539 : vector<16x128xf32>
    %541 = vector.extract_strided_slice %501 {offsets = [0, 128], sizes = [16, 128], strides = [1, 1]} : vector<16x512xf32> to vector<16x128xf32>
    %cst_173 = arith.constant 5.000000e-01 : f32
    %542 = vector.broadcast %cst_173 : f32 to vector<16x128xf32>
    %543 = arith.mulf %542, %541 : vector<16x128xf32>
    %544 = math.tanh %543 : vector<16x128xf32>
    %cst_174 = arith.constant 5.000000e-01 : f32
    %545 = vector.broadcast %cst_174 : f32 to vector<16x128xf32>
    %546 = arith.mulf %545, %544 : vector<16x128xf32>
    %cst_175 = arith.constant 5.000000e-01 : f32
    %547 = vector.broadcast %cst_175 : f32 to vector<16x128xf32>
    %548 = arith.addf %546, %547 : vector<16x128xf32>
    %549 = vector.extract_strided_slice %501 {offsets = [0, 256], sizes = [16, 128], strides = [1, 1]} : vector<16x512xf32> to vector<16x128xf32>
    %550 = math.tanh %549 : vector<16x128xf32>
    %551 = vector.extract_strided_slice %501 {offsets = [0, 384], sizes = [16, 128], strides = [1, 1]} : vector<16x512xf32> to vector<16x128xf32>
    %cst_176 = arith.constant 5.000000e-01 : f32
    %552 = vector.broadcast %cst_176 : f32 to vector<16x128xf32>
    %553 = arith.mulf %552, %551 : vector<16x128xf32>
    %554 = math.tanh %553 : vector<16x128xf32>
    %cst_177 = arith.constant 5.000000e-01 : f32
    %555 = vector.broadcast %cst_177 : f32 to vector<16x128xf32>
    %556 = arith.mulf %555, %554 : vector<16x128xf32>
    %cst_178 = arith.constant 5.000000e-01 : f32
    %557 = vector.broadcast %cst_178 : f32 to vector<16x128xf32>
    %558 = arith.addf %556, %557 : vector<16x128xf32>
    %559 = arith.mulf %548, %483 : vector<16x128xf32>
    %560 = arith.mulf %540, %550 : vector<16x128xf32>
    %561 = arith.addf %559, %560 : vector<16x128xf32>
    %562 = math.tanh %561 : vector<16x128xf32>
    %563 = arith.mulf %558, %562 : vector<16x128xf32>
    %564 = arith.index_cast %486 : i32 to index
    %c0_179 = arith.constant 0 : index
    %565 = vector.load %arg7[%564, %c0_179] : memref<128x128xf32, #tpu.memory_space<vmem>>, vector<16x128xf32>
    %566 = arith.index_cast %488 : i32 to index
    %c0_180 = arith.constant 0 : index
    %567 = vector.load %arg7[%566, %c0_180] : memref<128x128xf32, #tpu.memory_space<vmem>>, vector<16x128xf32>
    %568 = arith.mulf %532, %565 : vector<16x128xf32>
    %569 = arith.index_cast %486 : i32 to index
    %c0_181 = arith.constant 0 : index
    %570 = vector.load %arg5[%569, %c0_181] : memref<128x256xf32, #tpu.memory_space<vmem>>, vector<16x128xf32>
    tpu.vector_store %arg5[%569, %c0_181], %568 {strides = array<i32>} : memref<128x256xf32, #tpu.memory_space<vmem>>, vector<16x128xf32>,
    %571 = arith.mulf %563, %567 : vector<16x128xf32>
    %572 = arith.index_cast %488 : i32 to index
    %c128_182 = arith.constant 128 : index
    %573 = vector.load %arg5[%572, %c128_182] : memref<128x256xf32, #tpu.memory_space<vmem>>, vector<16x128xf32>
    tpu.vector_store %arg5[%572, %c128_182], %571 {strides = array<i32>} : memref<128x256xf32, #tpu.memory_space<vmem>>, vector<16x128xf32>,
    %cst_183 = arith.constant 0.000000e+00 : f32
    %574 = vector.broadcast %cst_183 : f32 to vector<16x128xf32>
    %575 = arith.cmpf ogt, %567, %574 : vector<16x128xf32>
    %576 = arith.select %575, %563, %482 : vector<16x128xi1>, vector<16x128xf32>
    %577 = arith.select %575, %561, %483 : vector<16x128xi1>, vector<16x128xf32>
    %c6_i32 = arith.constant 6 : i32
    %c7_i32_184 = arith.constant 7 : i32
    %578 = arith.subi %c7_i32_184, %c6_i32 : i32
    %c16_i32_185 = arith.constant 16 : i32
    %579 = arith.muli %c6_i32, %c16_i32_185 : i32
    %580 = tpu.assume_multiple %579, 16 : i32
    %c16_i32_186 = arith.constant 16 : i32
    %581 = arith.muli %578, %c16_i32_186 : i32
    %582 = tpu.assume_multiple %581, 16 : i32
    %583 = tpu.concatenate %532, %576 in 1 : vector<16x128xf32>, vector<16x128xf32> -> vector<16x256xf32>
    %584 = arith.truncf %583 : vector<16x256xf32> to vector<16x256xbf16>
    %cst_187 = arith.constant dense<0.000000e+00> : vector<16x1024xf32>
    %585 = tpu.matmul %584, %12, %cst_187 {dimension_numbers = #tpu.dot_dimension_numbers<[1], [0], [0], [1], [0, 0, 1, 1], [], []>} : vector<16x256xbf16>, vector<256x1024xbf16>, vector<16x1024xf32> -> vector<16x1024xf32>
    %586 = vector.extract_strided_slice %585 {offsets = [0, 0], sizes = [16, 512], strides = [1, 1]} : vector<16x1024xf32> to vector<16x512xf32>
    %587 = vector.extract_strided_slice %585 {offsets = [0, 512], sizes = [16, 512], strides = [1, 1]} : vector<16x1024xf32> to vector<16x512xf32>
    %588 = arith.index_cast %580 : i32 to index
    %c0_188 = arith.constant 0 : index
    %589 = vector.load %arg6[%588, %c0_188] : memref<128x1024xbf16, #tpu.memory_space<vmem>>, vector<16x512xbf16>
    %590 = arith.extf %589 : vector<16x512xbf16> to vector<16x512xf32>
    %591 = arith.addf %586, %590 : vector<16x512xf32>
    %592 = arith.index_cast %582 : i32 to index
    %c512_189 = arith.constant 512 : index
    %593 = vector.load %arg6[%592, %c512_189] : memref<128x1024xbf16, #tpu.memory_space<vmem>>, vector<16x512xbf16>
    %594 = arith.extf %593 : vector<16x512xbf16> to vector<16x512xf32>
    %595 = arith.addf %587, %594 : vector<16x512xf32>
    %596 = vector.extract_strided_slice %591 {offsets = [0, 0], sizes = [16, 128], strides = [1, 1]} : vector<16x512xf32> to vector<16x128xf32>
    %cst_190 = arith.constant 5.000000e-01 : f32
    %597 = vector.broadcast %cst_190 : f32 to vector<16x128xf32>
    %598 = arith.mulf %597, %596 : vector<16x128xf32>
    %599 = math.tanh %598 : vector<16x128xf32>
    %cst_191 = arith.constant 5.000000e-01 : f32
    %600 = vector.broadcast %cst_191 : f32 to vector<16x128xf32>
    %601 = arith.mulf %600, %599 : vector<16x128xf32>
    %cst_192 = arith.constant 5.000000e-01 : f32
    %602 = vector.broadcast %cst_192 : f32 to vector<16x128xf32>
    %603 = arith.addf %601, %602 : vector<16x128xf32>
    %604 = vector.extract_strided_slice %591 {offsets = [0, 128], sizes = [16, 128], strides = [1, 1]} : vector<16x512xf32> to vector<16x128xf32>
    %cst_193 = arith.constant 5.000000e-01 : f32
    %605 = vector.broadcast %cst_193 : f32 to vector<16x128xf32>
    %606 = arith.mulf %605, %604 : vector<16x128xf32>
    %607 = math.tanh %606 : vector<16x128xf32>
    %cst_194 = arith.constant 5.000000e-01 : f32
    %608 = vector.broadcast %cst_194 : f32 to vector<16x128xf32>
    %609 = arith.mulf %608, %607 : vector<16x128xf32>
    %cst_195 = arith.constant 5.000000e-01 : f32
    %610 = vector.broadcast %cst_195 : f32 to vector<16x128xf32>
    %611 = arith.addf %609, %610 : vector<16x128xf32>
    %612 = vector.extract_strided_slice %591 {offsets = [0, 256], sizes = [16, 128], strides = [1, 1]} : vector<16x512xf32> to vector<16x128xf32>
    %613 = math.tanh %612 : vector<16x128xf32>
    %614 = vector.extract_strided_slice %591 {offsets = [0, 384], sizes = [16, 128], strides = [1, 1]} : vector<16x512xf32> to vector<16x128xf32>
    %cst_196 = arith.constant 5.000000e-01 : f32
    %615 = vector.broadcast %cst_196 : f32 to vector<16x128xf32>
    %616 = arith.mulf %615, %614 : vector<16x128xf32>
    %617 = math.tanh %616 : vector<16x128xf32>
    %cst_197 = arith.constant 5.000000e-01 : f32
    %618 = vector.broadcast %cst_197 : f32 to vector<16x128xf32>
    %619 = arith.mulf %618, %617 : vector<16x128xf32>
    %cst_198 = arith.constant 5.000000e-01 : f32
    %620 = vector.broadcast %cst_198 : f32 to vector<16x128xf32>
    %621 = arith.addf %619, %620 : vector<16x128xf32>
    %622 = arith.mulf %611, %530 : vector<16x128xf32>
    %623 = arith.mulf %603, %613 : vector<16x128xf32>
    %624 = arith.addf %622, %623 : vector<16x128xf32>
    %625 = math.tanh %624 : vector<16x128xf32>
    %626 = arith.mulf %621, %625 : vector<16x128xf32>
    %627 = vector.extract_strided_slice %595 {offsets = [0, 0], sizes = [16, 128], strides = [1, 1]} : vector<16x512xf32> to vector<16x128xf32>
    %cst_199 = arith.constant 5.000000e-01 : f32
    %628 = vector.broadcast %cst_199 : f32 to vector<16x128xf32>
    %629 = arith.mulf %628, %627 : vector<16x128xf32>
    %630 = math.tanh %629 : vector<16x128xf32>
    %cst_200 = arith.constant 5.000000e-01 : f32
    %631 = vector.broadcast %cst_200 : f32 to vector<16x128xf32>
    %632 = arith.mulf %631, %630 : vector<16x128xf32>
    %cst_201 = arith.constant 5.000000e-01 : f32
    %633 = vector.broadcast %cst_201 : f32 to vector<16x128xf32>
    %634 = arith.addf %632, %633 : vector<16x128xf32>
    %635 = vector.extract_strided_slice %595 {offsets = [0, 128], sizes = [16, 128], strides = [1, 1]} : vector<16x512xf32> to vector<16x128xf32>
    %cst_202 = arith.constant 5.000000e-01 : f32
    %636 = vector.broadcast %cst_202 : f32 to vector<16x128xf32>
    %637 = arith.mulf %636, %635 : vector<16x128xf32>
    %638 = math.tanh %637 : vector<16x128xf32>
    %cst_203 = arith.constant 5.000000e-01 : f32
    %639 = vector.broadcast %cst_203 : f32 to vector<16x128xf32>
    %640 = arith.mulf %639, %638 : vector<16x128xf32>
    %cst_204 = arith.constant 5.000000e-01 : f32
    %641 = vector.broadcast %cst_204 : f32 to vector<16x128xf32>
    %642 = arith.addf %640, %641 : vector<16x128xf32>
    %643 = vector.extract_strided_slice %595 {offsets = [0, 256], sizes = [16, 128], strides = [1, 1]} : vector<16x512xf32> to vector<16x128xf32>
    %644 = math.tanh %643 : vector<16x128xf32>
    %645 = vector.extract_strided_slice %595 {offsets = [0, 384], sizes = [16, 128], strides = [1, 1]} : vector<16x512xf32> to vector<16x128xf32>
    %cst_205 = arith.constant 5.000000e-01 : f32
    %646 = vector.broadcast %cst_205 : f32 to vector<16x128xf32>
    %647 = arith.mulf %646, %645 : vector<16x128xf32>
    %648 = math.tanh %647 : vector<16x128xf32>
    %cst_206 = arith.constant 5.000000e-01 : f32
    %649 = vector.broadcast %cst_206 : f32 to vector<16x128xf32>
    %650 = arith.mulf %649, %648 : vector<16x128xf32>
    %cst_207 = arith.constant 5.000000e-01 : f32
    %651 = vector.broadcast %cst_207 : f32 to vector<16x128xf32>
    %652 = arith.addf %650, %651 : vector<16x128xf32>
    %653 = arith.mulf %642, %577 : vector<16x128xf32>
    %654 = arith.mulf %634, %644 : vector<16x128xf32>
    %655 = arith.addf %653, %654 : vector<16x128xf32>
    %656 = math.tanh %655 : vector<16x128xf32>
    %657 = arith.mulf %652, %656 : vector<16x128xf32>
    %658 = arith.index_cast %580 : i32 to index
    %c0_208 = arith.constant 0 : index
    %659 = vector.load %arg7[%658, %c0_208] : memref<128x128xf32, #tpu.memory_space<vmem>>, vector<16x128xf32>
    %660 = arith.index_cast %582 : i32 to index
    %c0_209 = arith.constant 0 : index
    %661 = vector.load %arg7[%660, %c0_209] : memref<128x128xf32, #tpu.memory_space<vmem>>, vector<16x128xf32>
    %662 = arith.mulf %626, %659 : vector<16x128xf32>
    %663 = arith.index_cast %580 : i32 to index
    %c0_210 = arith.constant 0 : index
    %664 = vector.load %arg5[%663, %c0_210] : memref<128x256xf32, #tpu.memory_space<vmem>>, vector<16x128xf32>
    tpu.vector_store %arg5[%663, %c0_210], %662 {strides = array<i32>} : memref<128x256xf32, #tpu.memory_space<vmem>>, vector<16x128xf32>,
    %665 = arith.mulf %657, %661 : vector<16x128xf32>
    %666 = arith.index_cast %582 : i32 to index
    %c128_211 = arith.constant 128 : index
    %667 = vector.load %arg5[%666, %c128_211] : memref<128x256xf32, #tpu.memory_space<vmem>>, vector<16x128xf32>
    tpu.vector_store %arg5[%666, %c128_211], %665 {strides = array<i32>} : memref<128x256xf32, #tpu.memory_space<vmem>>, vector<16x128xf32>,
    %cst_212 = arith.constant 0.000000e+00 : f32
    %668 = vector.broadcast %cst_212 : f32 to vector<16x128xf32>
    %669 = arith.cmpf ogt, %661, %668 : vector<16x128xf32>
    %670 = arith.select %669, %657, %576 : vector<16x128xi1>, vector<16x128xf32>
    %671 = arith.select %669, %655, %577 : vector<16x128xi1>, vector<16x128xf32>
    %c7_i32_213 = arith.constant 7 : i32
    %c7_i32_214 = arith.constant 7 : i32
    %672 = arith.subi %c7_i32_214, %c7_i32_213 : i32
    %c16_i32_215 = arith.constant 16 : i32
    %673 = arith.muli %c7_i32_213, %c16_i32_215 : i32
    %674 = tpu.assume_multiple %673, 16 : i32
    %c16_i32_216 = arith.constant 16 : i32
    %675 = arith.muli %672, %c16_i32_216 : i32
    %676 = tpu.assume_multiple %675, 16 : i32
    %677 = tpu.concatenate %626, %670 in 1 : vector<16x128xf32>, vector<16x128xf32> -> vector<16x256xf32>
    %678 = arith.truncf %677 : vector<16x256xf32> to vector<16x256xbf16>
    %cst_217 = arith.constant dense<0.000000e+00> : vector<16x1024xf32>
    %679 = tpu.matmul %678, %12, %cst_217 {dimension_numbers = #tpu.dot_dimension_numbers<[1], [0], [0], [1], [0, 0, 1, 1], [], []>} : vector<16x256xbf16>, vector<256x1024xbf16>, vector<16x1024xf32> -> vector<16x1024xf32>
    %680 = vector.extract_strided_slice %679 {offsets = [0, 0], sizes = [16, 512], strides = [1, 1]} : vector<16x1024xf32> to vector<16x512xf32>
    %681 = vector.extract_strided_slice %679 {offsets = [0, 512], sizes = [16, 512], strides = [1, 1]} : vector<16x1024xf32> to vector<16x512xf32>
    %682 = arith.index_cast %674 : i32 to index
    %c0_218 = arith.constant 0 : index
    %683 = vector.load %arg6[%682, %c0_218] : memref<128x1024xbf16, #tpu.memory_space<vmem>>, vector<16x512xbf16>
    %684 = arith.extf %683 : vector<16x512xbf16> to vector<16x512xf32>
    %685 = arith.addf %680, %684 : vector<16x512xf32>
    %686 = arith.index_cast %676 : i32 to index
    %c512_219 = arith.constant 512 : index
    %687 = vector.load %arg6[%686, %c512_219] : memref<128x1024xbf16, #tpu.memory_space<vmem>>, vector<16x512xbf16>
    %688 = arith.extf %687 : vector<16x512xbf16> to vector<16x512xf32>
    %689 = arith.addf %681, %688 : vector<16x512xf32>
    %690 = vector.extract_strided_slice %685 {offsets = [0, 0], sizes = [16, 128], strides = [1, 1]} : vector<16x512xf32> to vector<16x128xf32>
    %cst_220 = arith.constant 5.000000e-01 : f32
    %691 = vector.broadcast %cst_220 : f32 to vector<16x128xf32>
    %692 = arith.mulf %691, %690 : vector<16x128xf32>
    %693 = math.tanh %692 : vector<16x128xf32>
    %cst_221 = arith.constant 5.000000e-01 : f32
    %694 = vector.broadcast %cst_221 : f32 to vector<16x128xf32>
    %695 = arith.mulf %694, %693 : vector<16x128xf32>
    %cst_222 = arith.constant 5.000000e-01 : f32
    %696 = vector.broadcast %cst_222 : f32 to vector<16x128xf32>
    %697 = arith.addf %695, %696 : vector<16x128xf32>
    %698 = vector.extract_strided_slice %685 {offsets = [0, 128], sizes = [16, 128], strides = [1, 1]} : vector<16x512xf32> to vector<16x128xf32>
    %cst_223 = arith.constant 5.000000e-01 : f32
    %699 = vector.broadcast %cst_223 : f32 to vector<16x128xf32>
    %700 = arith.mulf %699, %698 : vector<16x128xf32>
    %701 = math.tanh %700 : vector<16x128xf32>
    %cst_224 = arith.constant 5.000000e-01 : f32
    %702 = vector.broadcast %cst_224 : f32 to vector<16x128xf32>
    %703 = arith.mulf %702, %701 : vector<16x128xf32>
    %cst_225 = arith.constant 5.000000e-01 : f32
    %704 = vector.broadcast %cst_225 : f32 to vector<16x128xf32>
    %705 = arith.addf %703, %704 : vector<16x128xf32>
    %706 = vector.extract_strided_slice %685 {offsets = [0, 256], sizes = [16, 128], strides = [1, 1]} : vector<16x512xf32> to vector<16x128xf32>
    %707 = math.tanh %706 : vector<16x128xf32>
    %708 = vector.extract_strided_slice %685 {offsets = [0, 384], sizes = [16, 128], strides = [1, 1]} : vector<16x512xf32> to vector<16x128xf32>
    %cst_226 = arith.constant 5.000000e-01 : f32
    %709 = vector.broadcast %cst_226 : f32 to vector<16x128xf32>
    %710 = arith.mulf %709, %708 : vector<16x128xf32>
    %711 = math.tanh %710 : vector<16x128xf32>
    %cst_227 = arith.constant 5.000000e-01 : f32
    %712 = vector.broadcast %cst_227 : f32 to vector<16x128xf32>
    %713 = arith.mulf %712, %711 : vector<16x128xf32>
    %cst_228 = arith.constant 5.000000e-01 : f32
    %714 = vector.broadcast %cst_228 : f32 to vector<16x128xf32>
    %715 = arith.addf %713, %714 : vector<16x128xf32>
    %716 = arith.mulf %705, %624 : vector<16x128xf32>
    %717 = arith.mulf %697, %707 : vector<16x128xf32>
    %718 = arith.addf %716, %717 : vector<16x128xf32>
    %719 = math.tanh %718 : vector<16x128xf32>
    %720 = arith.mulf %715, %719 : vector<16x128xf32>
    %721 = vector.extract_strided_slice %689 {offsets = [0, 0], sizes = [16, 128], strides = [1, 1]} : vector<16x512xf32> to vector<16x128xf32>
    %cst_229 = arith.constant 5.000000e-01 : f32
    %722 = vector.broadcast %cst_229 : f32 to vector<16x128xf32>
    %723 = arith.mulf %722, %721 : vector<16x128xf32>
    %724 = math.tanh %723 : vector<16x128xf32>
    %cst_230 = arith.constant 5.000000e-01 : f32
    %725 = vector.broadcast %cst_230 : f32 to vector<16x128xf32>
    %726 = arith.mulf %725, %724 : vector<16x128xf32>
    %cst_231 = arith.constant 5.000000e-01 : f32
    %727 = vector.broadcast %cst_231 : f32 to vector<16x128xf32>
    %728 = arith.addf %726, %727 : vector<16x128xf32>
    %729 = vector.extract_strided_slice %689 {offsets = [0, 128], sizes = [16, 128], strides = [1, 1]} : vector<16x512xf32> to vector<16x128xf32>
    %cst_232 = arith.constant 5.000000e-01 : f32
    %730 = vector.broadcast %cst_232 : f32 to vector<16x128xf32>
    %731 = arith.mulf %730, %729 : vector<16x128xf32>
    %732 = math.tanh %731 : vector<16x128xf32>
    %cst_233 = arith.constant 5.000000e-01 : f32
    %733 = vector.broadcast %cst_233 : f32 to vector<16x128xf32>
    %734 = arith.mulf %733, %732 : vector<16x128xf32>
    %cst_234 = arith.constant 5.000000e-01 : f32
    %735 = vector.broadcast %cst_234 : f32 to vector<16x128xf32>
    %736 = arith.addf %734, %735 : vector<16x128xf32>
    %737 = vector.extract_strided_slice %689 {offsets = [0, 256], sizes = [16, 128], strides = [1, 1]} : vector<16x512xf32> to vector<16x128xf32>
    %738 = math.tanh %737 : vector<16x128xf32>
    %739 = vector.extract_strided_slice %689 {offsets = [0, 384], sizes = [16, 128], strides = [1, 1]} : vector<16x512xf32> to vector<16x128xf32>
    %cst_235 = arith.constant 5.000000e-01 : f32
    %740 = vector.broadcast %cst_235 : f32 to vector<16x128xf32>
    %741 = arith.mulf %740, %739 : vector<16x128xf32>
    %742 = math.tanh %741 : vector<16x128xf32>
    %cst_236 = arith.constant 5.000000e-01 : f32
    %743 = vector.broadcast %cst_236 : f32 to vector<16x128xf32>
    %744 = arith.mulf %743, %742 : vector<16x128xf32>
    %cst_237 = arith.constant 5.000000e-01 : f32
    %745 = vector.broadcast %cst_237 : f32 to vector<16x128xf32>
    %746 = arith.addf %744, %745 : vector<16x128xf32>
    %747 = arith.mulf %736, %671 : vector<16x128xf32>
    %748 = arith.mulf %728, %738 : vector<16x128xf32>
    %749 = arith.addf %747, %748 : vector<16x128xf32>
    %750 = math.tanh %749 : vector<16x128xf32>
    %751 = arith.mulf %746, %750 : vector<16x128xf32>
    %752 = arith.index_cast %674 : i32 to index
    %c0_238 = arith.constant 0 : index
    %753 = vector.load %arg7[%752, %c0_238] : memref<128x128xf32, #tpu.memory_space<vmem>>, vector<16x128xf32>
    %754 = arith.index_cast %676 : i32 to index
    %c0_239 = arith.constant 0 : index
    %755 = vector.load %arg7[%754, %c0_239] : memref<128x128xf32, #tpu.memory_space<vmem>>, vector<16x128xf32>
    %756 = arith.mulf %720, %753 : vector<16x128xf32>
    %757 = arith.index_cast %674 : i32 to index
    %c0_240 = arith.constant 0 : index
    %758 = vector.load %arg5[%757, %c0_240] : memref<128x256xf32, #tpu.memory_space<vmem>>, vector<16x128xf32>
    tpu.vector_store %arg5[%757, %c0_240], %756 {strides = array<i32>} : memref<128x256xf32, #tpu.memory_space<vmem>>, vector<16x128xf32>,
    %759 = arith.mulf %751, %755 : vector<16x128xf32>
    %760 = arith.index_cast %676 : i32 to index
    %c128_241 = arith.constant 128 : index
    %761 = vector.load %arg5[%760, %c128_241] : memref<128x256xf32, #tpu.memory_space<vmem>>, vector<16x128xf32>
    tpu.vector_store %arg5[%760, %c128_241], %759 {strides = array<i32>} : memref<128x256xf32, #tpu.memory_space<vmem>>, vector<16x128xf32>,
    %cst_242 = arith.constant 0.000000e+00 : f32
    %762 = vector.broadcast %cst_242 : f32 to vector<16x128xf32>
    %763 = arith.cmpf ogt, %755, %762 : vector<16x128xf32>
    %764 = arith.select %763, %751, %670 : vector<16x128xi1>, vector<16x128xf32>
    %765 = arith.select %763, %749, %671 : vector<16x128xi1>, vector<16x128xf32>
    %c8_i32 = arith.constant 8 : i32
    return
  }
}

</mosaic_0001>

<llo_original>
// kernel: denote_model_forward.1
$region0: #{denote_model_forward.1}
  #allocation0 [shape = 'u32[]', space=smem, size = 0x4, offset = 0x4, fixed_abs, tag = 'smem constant byte address 0x4 - core index']
  #allocation1 [shape = 'u32[144,128]{1,0:T(1,128)}', space=vmem, size = 0x12000, scoped, tag = 'internal scratch']
  #allocation2 [shape = 'bf16[128,1024]{1,0:T(16,128)(2,1)}', space=vmem, size = 0x40000, scoped, tag = 'scratch operand']
  #allocation3 [shape = 'f32[128,128]{1,0:T(8,128)}', space=vmem, size = 0x10000, scoped, tag = 'scratch operand']
  %s0 = inlined_call_operand.vmem [shape: bf16[128,32], index: 0, kind: input, shape index: {}]
  %s1 = inlined_call_operand.vmem [shape: f32[128,1], index: 1, kind: input, shape index: {}]
  %s2 = inlined_call_operand.vmem [shape: bf16[32,1024], index: 2, kind: input, shape index: {}]
  %s3 = inlined_call_operand.vmem [shape: bf16[256,1024], index: 3, kind: input, shape index: {}]
  %s4 = inlined_call_operand.vmem [shape: f32[1,1024], index: 4, kind: input, shape index: {}]
  %s5 = inlined_call_operand.vmem [shape: f32[128,256], index: 5, kind: output, shape index: {}]
  %s6 = sld [smem:[#allocation0]]
  $region30: #{denote_model_forward.1} parent=0
    _
  %s8 = ssub.s32 1, %s6
  %s9 = scalar_select 0, %s8, %s6
  // Predicated region
  $region2: #{denote_model_forward.1} parent=0 // pred_check
    _
  $region3: #{denote_model_forward.1} parent=0 // pred_check_branch
    %11 = sbr.rel (0) target = $region5
  $region4: #{denote_model_forward.1} parent=0 // pred_region
    _
  $region5: #{denote_model_forward.1} parent=0 // pred_fallthru
    _
  // Predicated region
  $region6: #{denote_model_forward.1} parent=0 // pred_check
    _
  $region7: #{denote_model_forward.1} parent=0 // pred_check_branch
    %13 = sbr.rel (0) target = $region9
  $region8: #{denote_model_forward.1} parent=0 // pred_region
    _
  $region9: #{denote_model_forward.1} parent=0 // pred_fallthru
    _
  // Predicated region
  $region10: #{denote_model_forward.1} parent=0 // pred_check
    _
  $region11: #{denote_model_forward.1} parent=0 // pred_check_branch
    %15 = sbr.rel (0) target = $region13
  $region12: #{denote_model_forward.1} parent=0 // pred_region
    _
  $region13: #{denote_model_forward.1} parent=0 // pred_fallthru
    _
  // Predicated region
  $region14: #{denote_model_forward.1} parent=0 // pred_check
    _
  $region15: #{denote_model_forward.1} parent=0 // pred_check_branch
    %17 = sbr.rel (0) target = $region17
  $region16: #{denote_model_forward.1} parent=0 // pred_region
    _
  $region17: #{denote_model_forward.1} parent=0 // pred_fallthru
    _
  // Predicated region
  $region18: #{denote_model_forward.1} parent=0 // pred_check
    _
  $region19: #{denote_model_forward.1} parent=0 // pred_check_branch
    %19 = sbr.rel (0) target = $region21
  $region20: #{denote_model_forward.1} parent=0 // pred_region
    _
  $region21: #{denote_model_forward.1} parent=0 // pred_fallthru
    _
  %v21 = vld [vmem:[%s0] sm:$0xf]
  %v22 = vld [vmem:[%s0 + $0x4] sm:$0xf]
  %v23 = vld [vmem:[%s0 + $0x8] sm:$0xf]
  %v24 = vld [vmem:[%s0 + $0xc] sm:$0xf]
  %v25 = vld [vmem:[%s0 + $0x10] sm:$0xf]
  %v26 = vld [vmem:[%s0 + $0x14] sm:$0xf]
  %v27 = vld [vmem:[%s0 + $0x18] sm:$0xf]
  %v28 = vld [vmem:[%s0 + $0x1c] sm:$0xf]
  %v29 = vld [vmem:[%s0 + $0x20] sm:$0xf]
  %v30 = vld [vmem:[%s0 + $0x24] sm:$0xf]
  %v31 = vld [vmem:[%s0 + $0x28] sm:$0xf]
  %v32 = vld [vmem:[%s0 + $0x2c] sm:$0xf]
  %v33 = vld [vmem:[%s0 + $0x30] sm:$0xf]
  %v34 = vld [vmem:[%s0 + $0x34] sm:$0xf]
  %v35 = vld [vmem:[%s0 + $0x38] sm:$0xf]
  %v36 = vld [vmem:[%s0 + $0x3c] sm:$0xf]
  %v37 = vld [vmem:[%s2] sm:$0xff]
  %v38 = vld [vmem:[%s2 + $0x8] sm:$0xff]
  %v39 = vld [vmem:[%s2 + $0x10] sm:$0xff]
  %v40 = vld [vmem:[%s2 + $0x18] sm:$0xff]
  %v41 = vld [vmem:[%s2 + $0x20] sm:$0xff]
  %v42 = vld [vmem:[%s2 + $0x28] sm:$0xff]
  %v43 = vld [vmem:[%s2 + $0x30] sm:$0xff]
  %v44 = vld [vmem:[%s2 + $0x38] sm:$0xff]
  %v45 = vld [vmem:[%s2 + $0x40] sm:$0xff]
  %v46 = vld [vmem:[%s2 + $0x48] sm:$0xff]
  %v47 = vld [vmem:[%s2 + $0x50] sm:$0xff]
  %v48 = vld [vmem:[%s2 + $0x58] sm:$0xff]
  %v49 = vld [vmem:[%s2 + $0x60] sm:$0xff]
  %v50 = vld [vmem:[%s2 + $0x68] sm:$0xff]
  %v51 = vld [vmem:[%s2 + $0x70] sm:$0xff]
  %v52 = vld [vmem:[%s2 + $0x78] sm:$0xff]
  %v53 = vld [vmem:[%s4] sm:$0xff]
  %v55 = vlaneseq
  %v56 = vshrl.u32 %v55, 7
  %v57 = vsub.s32 0, %v56
  %v58 = vrot.slane %v53, %v57
  %v59 = vlaneseq
  %v60 = vshrl.u32 %v59, 7
  %v61 = vsub.s32 1, %v60
  %v62 = vrot.slane %v53, %v61
  %v63 = vlaneseq
  %v64 = vshrl.u32 %v63, 7
  %v65 = vsub.s32 2, %v64
  %v66 = vrot.slane %v53, %v65
  %v67 = vlaneseq
  %v68 = vshrl.u32 %v67, 7
  %v69 = vsub.s32 3, %v68
  %v70 = vrot.slane %v53, %v69
  %v71 = vlaneseq
  %v72 = vshrl.u32 %v71, 7
  %v73 = vsub.s32 4, %v72
  %v74 = vrot.slane %v53, %v73
  %v75 = vlaneseq
  %v76 = vshrl.u32 %v75, 7
  %v77 = vsub.s32 5, %v76
  %v78 = vrot.slane %v53, %v77
  %v79 = vlaneseq
  %v80 = vshrl.u32 %v79, 7
  %v81 = vsub.s32 6, %v80
  %v82 = vrot.slane %v53, %v81
  %v83 = vlaneseq
  %v84 = vshrl.u32 %v83, 7
  %v85 = vsub.s32 7, %v84
  %v86 = vrot.slane %v53, %v85
  %v111 = vunpack.c.l.b16 %v21
  %v112 = vunpack.c.l.b16 %v22
  %v113 = vunpack.c.l.b16 %v23
  %v114 = vunpack.c.l.b16 %v24
  %v115 = vunpack.c.l.b16 %v25
  %v116 = vunpack.c.l.b16 %v26
  %v117 = vunpack.c.l.b16 %v27
  %v118 = vunpack.c.l.b16 %v28
  %v119 = vunpack.c.l.b16 %v29
  %v120 = vunpack.c.l.b16 %v30
  %v121 = vunpack.c.l.b16 %v31
  %v122 = vunpack.c.l.b16 %v32
  %v123 = vunpack.c.l.b16 %v33
  %v124 = vunpack.c.l.b16 %v34
  %v125 = vunpack.c.l.b16 %v35
  %v126 = vunpack.c.l.b16 %v36
  %v127 = vpack.c.b16 %v112, %v111
  %v128 = vpack.c.b16 %v114, %v113
  %v129 = vpack.c.b16 %v116, %v115
  %v130 = vpack.c.b16 %v118, %v117
  %v131 = vpack.c.b16 %v120, %v119
  %v132 = vpack.c.b16 %v122, %v121
  %v133 = vpack.c.b16 %v124, %v123
  %v134 = vpack.c.b16 %v126, %v125
  %v151 = vunpack.c.l.b16 %v37
  %v152 = vunpack.c.h.b16 %v37
  %v153 = vunpack.c.l.b16 %v38
  %v154 = vunpack.c.h.b16 %v38
  %v155 = vunpack.c.l.b16 %v39
  %v156 = vunpack.c.h.b16 %v39
  %v157 = vunpack.c.l.b16 %v40
  %v158 = vunpack.c.h.b16 %v40
  %v159 = vunpack.c.l.b16 %v41
  %v160 = vunpack.c.h.b16 %v41
  %v161 = vunpack.c.l.b16 %v42
  %v162 = vunpack.c.h.b16 %v42
  %v163 = vunpack.c.l.b16 %v43
  %v164 = vunpack.c.h.b16 %v43
  %v165 = vunpack.c.l.b16 %v44
  %v166 = vunpack.c.h.b16 %v44
  %v167 = vunpack.c.l.b16 %v45
  %v168 = vunpack.c.h.b16 %v45
  %v169 = vunpack.c.l.b16 %v46
  %v170 = vunpack.c.h.b16 %v46
  %v171 = vunpack.c.l.b16 %v47
  %v172 = vunpack.c.h.b16 %v47
  %v173 = vunpack.c.l.b16 %v48
  %v174 = vunpack.c.h.b16 %v48
  %v175 = vunpack.c.l.b16 %v49
  %v176 = vunpack.c.h.b16 %v49
  %v177 = vunpack.c.l.b16 %v50
  %v178 = vunpack.c.h.b16 %v50
  %v179 = vunpack.c.l.b16 %v51
  %v180 = vunpack.c.h.b16 %v51
  %v181 = vunpack.c.l.b16 %v52
  %v182 = vunpack.c.h.b16 %v52
  %v183 = vpack.c.b16 %v159, %v151
  %v184 = vpack.c.b16 %v160, %v152
  %v185 = vpack.c.b16 %v161, %v153
  %v186 = vpack.c.b16 %v162, %v154
  %v187 = vpack.c.b16 %v163, %v155
  %v188 = vpack.c.b16 %v164, %v156
  %v189 = vpack.c.b16 %v165, %v157
  %v190 = vpack.c.b16 %v166, %v158
  %v191 = vpack.c.b16 %v175, %v167
  %v192 = vpack.c.b16 %v176, %v168
  %v193 = vpack.c.b16 %v177, %v169
  %v194 = vpack.c.b16 %v178, %v170
  %v195 = vpack.c.b16 %v179, %v171
  %v196 = vpack.c.b16 %v180, %v172
  %v197 = vpack.c.b16 %v181, %v173
  %v198 = vpack.c.b16 %v182, %v174
  %vm215 = vcmask 261120
  %v217 = vsel %vm215, %v127, 0
  %v220 = vsel %vm215, %v128, 0
  %v223 = vsel %vm215, %v129, 0
  %v226 = vsel %vm215, %v130, 0
  %v229 = vsel %vm215, %v131, 0
  %v232 = vsel %vm215, %v132, 0
  %v235 = vsel %vm215, %v133, 0
  %v238 = vsel %vm215, %v134, 0
  %240 = vmatprep.subr.bf16.mxu0 %v184
  %241 = vmatpush1.bf16.msra.mxu0 %v183
  %242 = vmatprep.subr.bf16.mxu0 %v192
  %243 = vmatpush1.bf16.msra.mxu0 %v191
  %244 = vmatprep.subr.bf16.mxu0 0
  %245 = vmatpush1.bf16.msra.mxu0 0
  %246 = vmatprep.subr.bf16.mxu0 0
  %247 = vmatpush1.bf16.msra.mxu0 0
  %248 = vmatprep.subr.bf16.mxu0 0
  %249 = vmatpush1.bf16.msra.mxu0 0
  %250 = vmatprep.subr.bf16.mxu0 0
  %251 = vmatpush1.bf16.msra.mxu0 0
  %252 = vmatprep.subr.bf16.mxu0 0
  %253 = vmatpush1.bf16.msra.mxu0 0
  %254 = vmatprep.subr.bf16.mxu0 0
  %255 = vmatpush1.bf16.msra.mxu0 0
  %256 = vmatprep.subr.bf16.mxu0 0
  %257 = vmatpush1.bf16.msra.mxu0 0
  %258 = vmatprep.subr.bf16.mxu0 0
  %259 = vmatpush1.bf16.msra.mxu0 0
  %260 = vmatprep.subr.bf16.mxu0 0
  %261 = vmatpush1.bf16.msra.mxu0 0
  %262 = vmatprep.subr.bf16.mxu0 0
  %263 = vmatpush1.bf16.msra.mxu0 0
  %264 = vmatprep.subr.bf16.mxu0 0
  %265 = vmatpush1.bf16.msra.mxu0 0
  %266 = vmatprep.subr.bf16.mxu0 0
  %267 = vmatpush1.bf16.msra.mxu0 0
  %268 = vmatprep.subr.bf16.mxu0 0
  %269 = vmatpush1.bf16.msra.mxu0 0
  %270 = vmatprep.subr.bf16.mxu0 0
  %271 = vmatpush1.bf16.msra.mxu0 0
  %272 = vmatprep.mubr.bf16.mxu0 0
  %273 = vmatmul.mubr.bf16.gmra.mrb[0].mxu0 %v217
  %v274 = vpop.f32.mrb[0].mxu0
  %v275 = vadd.f32 %v58, %v274
  %v276 = vpop.f32.mrb[0].mxu0
  %v277 = vadd.f32 %v62, %v276
  %v278 = vpop.f32.mrb[0].mxu0
  %v279 = vadd.f32 %v58, %v278
  %v280 = vpop.f32.mrb[0].mxu0
  %v281 = vadd.f32 %v62, %v280
  %282 = vmatprep.mubr.bf16.mxu0 0
  %283 = vmatmul.mubr.bf16.gmra.mrb[0].mxu0 %v220
  %v284 = vpop.f32.mrb[0].mxu0
  %v285 = vadd.f32 %v58, %v284
  %v286 = vpop.f32.mrb[0].mxu0
  %v287 = vadd.f32 %v62, %v286
  %v288 = vpop.f32.mrb[0].mxu0
  %v289 = vadd.f32 %v58, %v288
  %v290 = vpop.f32.mrb[0].mxu0
  %v291 = vadd.f32 %v62, %v290
  %292 = vmatprep.mubr.bf16.mxu0 0
  %293 = vmatmul.mubr.bf16.gmra.mrb[0].mxu0 %v223
  %v294 = vpop.f32.mrb[0].mxu0
  %v295 = vadd.f32 %v58, %v294
  %v296 = vpop.f32.mrb[0].mxu0
  %v297 = vadd.f32 %v62, %v296
  %v298 = vpop.f32.mrb[0].mxu0
  %v299 = vadd.f32 %v58, %v298
  %v300 = vpop.f32.mrb[0].mxu0
  %v301 = vadd.f32 %v62, %v300
  %302 = vmatprep.mubr.bf16.mxu0 0
  %303 = vmatmul.mubr.bf16.gmra.mrb[0].mxu0 %v226
  %v304 = vpop.f32.mrb[0].mxu0
  %v305 = vadd.f32 %v58, %v304
  %v306 = vpop.f32.mrb[0].mxu0
  %v307 = vadd.f32 %v62, %v306
  %v308 = vpop.f32.mrb[0].mxu0
  %v309 = vadd.f32 %v58, %v308
  %v310 = vpop.f32.mrb[0].mxu0
  %v311 = vadd.f32 %v62, %v310
  %312 = vmatprep.mubr.bf16.mxu0 0
  %313 = vmatmul.mubr.bf16.gmra.mrb[0].mxu0 %v229
  %v314 = vpop.f32.mrb[0].mxu0
  %v315 = vadd.f32 %v58, %v314
  %v316 = vpop.f32.mrb[0].mxu0
  %v317 = vadd.f32 %v62, %v316
  %v318 = vpop.f32.mrb[0].mxu0
  %v319 = vadd.f32 %v58, %v318
  %v320 = vpop.f32.mrb[0].mxu0
  %v321 = vadd.f32 %v62, %v320
  %322 = vmatprep.mubr.bf16.mxu0 0
  %323 = vmatmul.mubr.bf16.gmra.mrb[0].mxu0 %v232
  %v324 = vpop.f32.mrb[0].mxu0
  %v325 = vadd.f32 %v58, %v324
  %v326 = vpop.f32.mrb[0].mxu0
  %v327 = vadd.f32 %v62, %v326
  %v328 = vpop.f32.mrb[0].mxu0
  %v329 = vadd.f32 %v58, %v328
  %v330 = vpop.f32.mrb[0].mxu0
  %v331 = vadd.f32 %v62, %v330
  %332 = vmatprep.mubr.bf16.mxu0 0
  %333 = vmatmul.mubr.bf16.gmra.mrb[0].mxu0 %v235
  %v334 = vpop.f32.mrb[0].mxu0
  %v335 = vadd.f32 %v58, %v334
  %v336 = vpop.f32.mrb[0].mxu0
  %v337 = vadd.f32 %v62, %v336
  %v338 = vpop.f32.mrb[0].mxu0
  %v339 = vadd.f32 %v58, %v338
  %v340 = vpop.f32.mrb[0].mxu0
  %v341 = vadd.f32 %v62, %v340
  %342 = vmatprep.mubr.bf16.mxu0 0
  %343 = vmatmul.mubr.bf16.gmra.mrb[0].mxu0 %v238
  %v344 = vpop.f32.mrb[0].mxu0
  %v345 = vadd.f32 %v58, %v344
  %v346 = vpop.f32.mrb[0].mxu0
  %v347 = vadd.f32 %v62, %v346
  %v348 = vpop.f32.mrb[0].mxu0
  %v349 = vadd.f32 %v58, %v348
  %v350 = vpop.f32.mrb[0].mxu0
  %v351 = vadd.f32 %v62, %v350
  %352 = vdwg.mxu0
  %353 = vmatprep.subr.bf16.mxu0 %v186
  %354 = vmatpush1.bf16.msra.mxu0 %v185
  %355 = vmatprep.subr.bf16.mxu0 %v194
  %356 = vmatpush1.bf16.msra.mxu0 %v193
  %357 = vmatprep.subr.bf16.mxu0 0
  %358 = vmatpush1.bf16.msra.mxu0 0
  %359 = vmatprep.subr.bf16.mxu0 0
  %360 = vmatpush1.bf16.msra.mxu0 0
  %361 = vmatprep.subr.bf16.mxu0 0
  %362 = vmatpush1.bf16.msra.mxu0 0
  %363 = vmatprep.subr.bf16.mxu0 0
  %364 = vmatpush1.bf16.msra.mxu0 0
  %365 = vmatprep.subr.bf16.mxu0 0
  %366 = vmatpush1.bf16.msra.mxu0 0
  %367 = vmatprep.subr.bf16.mxu0 0
  %368 = vmatpush1.bf16.msra.mxu0 0
  %369 = vmatprep.subr.bf16.mxu0 0
  %370 = vmatpush1.bf16.msra.mxu0 0
  %371 = vmatprep.subr.bf16.mxu0 0
  %372 = vmatpush1.bf16.msra.mxu0 0
  %373 = vmatprep.subr.bf16.mxu0 0
  %374 = vmatpush1.bf16.msra.mxu0 0
  %375 = vmatprep.subr.bf16.mxu0 0
  %376 = vmatpush1.bf16.msra.mxu0 0
  %377 = vmatprep.subr.bf16.mxu0 0
  %378 = vmatpush1.bf16.msra.mxu0 0
  %379 = vmatprep.subr.bf16.mxu0 0
  %380 = vmatpush1.bf16.msra.mxu0 0
  %381 = vmatprep.subr.bf16.mxu0 0
  %382 = vmatpush1.bf16.msra.mxu0 0
  %383 = vmatprep.subr.bf16.mxu0 0
  %384 = vmatpush1.bf16.msra.mxu0 0
  %385 = vmatprep.mubr.bf16.mxu0 0
  %386 = vmatmul.mubr.bf16.gmra.mrb[0].mxu0 %v217
  %v387 = vpop.f32.mrb[0].mxu0
  %v388 = vadd.f32 %v66, %v387
  %v389 = vpop.f32.mrb[0].mxu0
  %v390 = vadd.f32 %v70, %v389
  %v391 = vpop.f32.mrb[0].mxu0
  %v392 = vadd.f32 %v66, %v391
  %v393 = vpop.f32.mrb[0].mxu0
  %v394 = vadd.f32 %v70, %v393
  %395 = vmatprep.mubr.bf16.mxu0 0
  %396 = vmatmul.mubr.bf16.gmra.mrb[0].mxu0 %v220
  %v397 = vpop.f32.mrb[0].mxu0
  %v398 = vadd.f32 %v66, %v397
  %v399 = vpop.f32.mrb[0].mxu0
  %v400 = vadd.f32 %v70, %v399
  %v401 = vpop.f32.mrb[0].mxu0
  %v402 = vadd.f32 %v66, %v401
  %v403 = vpop.f32.mrb[0].mxu0
  %v404 = vadd.f32 %v70, %v403
  %405 = vmatprep.mubr.bf16.mxu0 0
  %406 = vmatmul.mubr.bf16.gmra.mrb[0].mxu0 %v223
  %v407 = vpop.f32.mrb[0].mxu0
  %v408 = vadd.f32 %v66, %v407
  %v409 = vpop.f32.mrb[0].mxu0
  %v410 = vadd.f32 %v70, %v409
  %v411 = vpop.f32.mrb[0].mxu0
  %v412 = vadd.f32 %v66, %v411
  %v413 = vpop.f32.mrb[0].mxu0
  %v414 = vadd.f32 %v70, %v413
  %415 = vmatprep.mubr.bf16.mxu0 0
  %416 = vmatmul.mubr.bf16.gmra.mrb[0].mxu0 %v226
  %v417 = vpop.f32.mrb[0].mxu0
  %v418 = vadd.f32 %v66, %v417
  %v419 = vpop.f32.mrb[0].mxu0
  %v420 = vadd.f32 %v70, %v419
  %v421 = vpop.f32.mrb[0].mxu0
  %v422 = vadd.f32 %v66, %v421
  %v423 = vpop.f32.mrb[0].mxu0
  %v424 = vadd.f32 %v70, %v423
  %425 = vmatprep.mubr.bf16.mxu0 0
  %426 = vmatmul.mubr.bf16.gmra.mrb[0].mxu0 %v229
  %v427 = vpop.f32.mrb[0].mxu0
  %v428 = vadd.f32 %v66, %v427
  %v429 = vpop.f32.mrb[0].mxu0
  %v430 = vadd.f32 %v70, %v429
  %v431 = vpop.f32.mrb[0].mxu0
  %v432 = vadd.f32 %v66, %v431
  %v433 = vpop.f32.mrb[0].mxu0
  %v434 = vadd.f32 %v70, %v433
  %435 = vmatprep.mubr.bf16.mxu0 0
  %436 = vmatmul.mubr.bf16.gmra.mrb[0].mxu0 %v232
  %v437 = vpop.f32.mrb[0].mxu0
  %v438 = vadd.f32 %v66, %v437
  %v439 = vpop.f32.mrb[0].mxu0
  %v440 = vadd.f32 %v70, %v439
  %v441 = vpop.f32.mrb[0].mxu0
  %v442 = vadd.f32 %v66, %v441
  %v443 = vpop.f32.mrb[0].mxu0
  %v444 = vadd.f32 %v70, %v443
  %445 = vmatprep.mubr.bf16.mxu0 0
  %446 = vmatmul.mubr.bf16.gmra.mrb[0].mxu0 %v235
  %v447 = vpop.f32.mrb[0].mxu0
  %v448 = vadd.f32 %v66, %v447
  %v449 = vpop.f32.mrb[0].mxu0
  %v450 = vadd.f32 %v70, %v449
  %v451 = vpop.f32.mrb[0].mxu0
  %v452 = vadd.f32 %v66, %v451
  %v453 = vpop.f32.mrb[0].mxu0
  %v454 = vadd.f32 %v70, %v453
  %455 = vmatprep.mubr.bf16.mxu0 0
  %456 = vmatmul.mubr.bf16.gmra.mrb[0].mxu0 %v238
  %v457 = vpop.f32.mrb[0].mxu0
  %v458 = vadd.f32 %v66, %v457
  %v459 = vpop.f32.mrb[0].mxu0
  %v460 = vadd.f32 %v70, %v459
  %v461 = vpop.f32.mrb[0].mxu0
  %v462 = vadd.f32 %v66, %v461
  %v463 = vpop.f32.mrb[0].mxu0
  %v464 = vadd.f32 %v70, %v463
  %465 = vdwg.mxu0
  %466 = vmatprep.subr.bf16.mxu0 %v188
  %467 = vmatpush1.bf16.msra.mxu0 %v187
  %468 = vmatprep.subr.bf16.mxu0 %v196
  %469 = vmatpush1.bf16.msra.mxu0 %v195
  %470 = vmatprep.subr.bf16.mxu0 0
  %471 = vmatpush1.bf16.msra.mxu0 0
  %472 = vmatprep.subr.bf16.mxu0 0
  %473 = vmatpush1.bf16.msra.mxu0 0
  %474 = vmatprep.subr.bf16.mxu0 0
  %475 = vmatpush1.bf16.msra.mxu0 0
  %476 = vmatprep.subr.bf16.mxu0 0
  %477 = vmatpush1.bf16.msra.mxu0 0
  %478 = vmatprep.subr.bf16.mxu0 0
  %479 = vmatpush1.bf16.msra.mxu0 0
  %480 = vmatprep.subr.bf16.mxu0 0
  %481 = vmatpush1.bf16.msra.mxu0 0
  %482 = vmatprep.subr.bf16.mxu0 0
  %483 = vmatpush1.bf16.msra.mxu0 0
  %484 = vmatprep.subr.bf16.mxu0 0
  %485 = vmatpush1.bf16.msra.mxu0 0
  %486 = vmatprep.subr.bf16.mxu0 0
  %487 = vmatpush1.bf16.msra.mxu0 0
  %488 = vmatprep.subr.bf16.mxu0 0
  %489 = vmatpush1.bf16.msra.mxu0 0
  %490 = vmatprep.subr.bf16.mxu0 0
  %491 = vmatpush1.bf16.msra.mxu0 0
  %492 = vmatprep.subr.bf16.mxu0 0
  %493 = vmatpush1.bf16.msra.mxu0 0
  %494 = vmatprep.subr.bf16.mxu0 0
  %495 = vmatpush1.bf16.msra.mxu0 0
  %496 = vmatprep.subr.bf16.mxu0 0
  %497 = vmatpush1.bf16.msra.mxu0 0
  %498 = vmatprep.mubr.bf16.mxu0 0
  %499 = vmatmul.mubr.bf16.gmra.mrb[0].mxu0 %v217
  %v500 = vpop.f32.mrb[0].mxu0
  %v501 = vadd.f32 %v74, %v500
  %v502 = vpop.f32.mrb[0].mxu0
  %v503 = vadd.f32 %v78, %v502
  %v504 = vpop.f32.mrb[0].mxu0
  %v505 = vadd.f32 %v74, %v504
  %v506 = vpop.f32.mrb[0].mxu0
  %v507 = vadd.f32 %v78, %v506
  %508 = vmatprep.mubr.bf16.mxu0 0
  %509 = vmatmul.mubr.bf16.gmra.mrb[0].mxu0 %v220
  %v510 = vpop.f32.mrb[0].mxu0
  %v511 = vadd.f32 %v74, %v510
  %v512 = vpop.f32.mrb[0].mxu0
  %v513 = vadd.f32 %v78, %v512
  %v514 = vpop.f32.mrb[0].mxu0
  %v515 = vadd.f32 %v74, %v514
  %v516 = vpop.f32.mrb[0].mxu0
  %v517 = vadd.f32 %v78, %v516
  %518 = vmatprep.mubr.bf16.mxu0 0
  %519 = vmatmul.mubr.bf16.gmra.mrb[0].mxu0 %v223
  %v520 = vpop.f32.mrb[0].mxu0
  %v521 = vadd.f32 %v74, %v520
  %v522 = vpop.f32.mrb[0].mxu0
  %v523 = vadd.f32 %v78, %v522
  %v524 = vpop.f32.mrb[0].mxu0
  %v525 = vadd.f32 %v74, %v524
  %v526 = vpop.f32.mrb[0].mxu0
  %v527 = vadd.f32 %v78, %v526
  %528 = vmatprep.mubr.bf16.mxu0 0
  %529 = vmatmul.mubr.bf16.gmra.mrb[0].mxu0 %v226
  %v530 = vpop.f32.mrb[0].mxu0
  %v531 = vadd.f32 %v74, %v530
  %v532 = vpop.f32.mrb[0].mxu0
  %v533 = vadd.f32 %v78, %v532
  %v534 = vpop.f32.mrb[0].mxu0
  %v535 = vadd.f32 %v74, %v534
  %v536 = vpop.f32.mrb[0].mxu0
  %v537 = vadd.f32 %v78, %v536
  %538 = vmatprep.mubr.bf16.mxu0 0
  %539 = vmatmul.mubr.bf16.gmra.mrb[0].mxu0 %v229
  %v540 = vpop.f32.mrb[0].mxu0
  %v541 = vadd.f32 %v74, %v540
  %v542 = vpop.f32.mrb[0].mxu0
  %v543 = vadd.f32 %v78, %v542
  %v544 = vpop.f32.mrb[0].mxu0
  %v545 = vadd.f32 %v74, %v544
  %v546 = vpop.f32.mrb[0].mxu0
  %v547 = vadd.f32 %v78, %v546
  %548 = vmatprep.mubr.bf16.mxu0 0
  %549 = vmatmul.mubr.bf16.gmra.mrb[0].mxu0 %v232
  %v550 = vpop.f32.mrb[0].mxu0
  %v551 = vadd.f32 %v74, %v550
  %v552 = vpop.f32.mrb[0].mxu0
  %v553 = vadd.f32 %v78, %v552
  %v554 = vpop.f32.mrb[0].mxu0
  %v555 = vadd.f32 %v74, %v554
  %v556 = vpop.f32.mrb[0].mxu0
  %v557 = vadd.f32 %v78, %v556
  %558 = vmatprep.mubr.bf16.mxu0 0
  %559 = vmatmul.mubr.bf16.gmra.mrb[0].mxu0 %v235
  %v560 = vpop.f32.mrb[0].mxu0
  %v561 = vadd.f32 %v74, %v560
  %v562 = vpop.f32.mrb[0].mxu0
  %v563 = vadd.f32 %v78, %v562
  %v564 = vpop.f32.mrb[0].mxu0
  %v565 = vadd.f32 %v74, %v564
  %v566 = vpop.f32.mrb[0].mxu0
  %v567 = vadd.f32 %v78, %v566
  %568 = vmatprep.mubr.bf16.mxu0 0
  %569 = vmatmul.mubr.bf16.gmra.mrb[0].mxu0 %v238
  %v570 = vpop.f32.mrb[0].mxu0
  %v571 = vadd.f32 %v74, %v570
  %v572 = vpop.f32.mrb[0].mxu0
  %v573 = vadd.f32 %v78, %v572
  %v574 = vpop.f32.mrb[0].mxu0
  %v575 = vadd.f32 %v74, %v574
  %v576 = vpop.f32.mrb[0].mxu0
  %v577 = vadd.f32 %v78, %v576
  %578 = vdwg.mxu0
  %579 = vmatprep.subr.bf16.mxu0 %v190
  %580 = vmatpush1.bf16.msra.mxu0 %v189
  %581 = vmatprep.subr.bf16.mxu0 %v198
  %582 = vmatpush1.bf16.msra.mxu0 %v197
  %583 = vmatprep.subr.bf16.mxu0 0
  %584 = vmatpush1.bf16.msra.mxu0 0
  %585 = vmatprep.subr.bf16.mxu0 0
  %586 = vmatpush1.bf16.msra.mxu0 0
  %587 = vmatprep.subr.bf16.mxu0 0
  %588 = vmatpush1.bf16.msra.mxu0 0
  %589 = vmatprep.subr.bf16.mxu0 0
  %590 = vmatpush1.bf16.msra.mxu0 0
  %591 = vmatprep.subr.bf16.mxu0 0
  %592 = vmatpush1.bf16.msra.mxu0 0
  %593 = vmatprep.subr.bf16.mxu0 0
  %594 = vmatpush1.bf16.msra.mxu0 0
  %595 = vmatprep.subr.bf16.mxu0 0
  %596 = vmatpush1.bf16.msra.mxu0 0
  %597 = vmatprep.subr.bf16.mxu0 0
  %598 = vmatpush1.bf16.msra.mxu0 0
  %599 = vmatprep.subr.bf16.mxu0 0
  %600 = vmatpush1.bf16.msra.mxu0 0
  %601 = vmatprep.subr.bf16.mxu0 0
  %602 = vmatpush1.bf16.msra.mxu0 0
  %603 = vmatprep.subr.bf16.mxu0 0
  %604 = vmatpush1.bf16.msra.mxu0 0
  %605 = vmatprep.subr.bf16.mxu0 0
  %606 = vmatpush1.bf16.msra.mxu0 0
  %607 = vmatprep.subr.bf16.mxu0 0
  %608 = vmatpush1.bf16.msra.mxu0 0
  %609 = vmatprep.subr.bf16.mxu0 0
  %610 = vmatpush1.bf16.msra.mxu0 0
  %611 = vmatprep.mubr.bf16.mxu0 0
  %612 = vmatmul.mubr.bf16.gmra.mrb[0].mxu0 %v217
  %v613 = vpop.f32.mrb[0].mxu0
  %v614 = vadd.f32 %v82, %v613
  %v615 = vpop.f32.mrb[0].mxu0
  %v616 = vadd.f32 %v86, %v615
  %v617 = vpop.f32.mrb[0].mxu0
  %v618 = vadd.f32 %v82, %v617
  %v619 = vpop.f32.mrb[0].mxu0
  %v620 = vadd.f32 %v86, %v619
  %621 = vmatprep.mubr.bf16.mxu0 0
  %622 = vmatmul.mubr.bf16.gmra.mrb[0].mxu0 %v220
  %v623 = vpop.f32.mrb[0].mxu0
  %v624 = vadd.f32 %v82, %v623
  %v625 = vpop.f32.mrb[0].mxu0
  %v626 = vadd.f32 %v86, %v625
  %v627 = vpop.f32.mrb[0].mxu0
  %v628 = vadd.f32 %v82, %v627
  %v629 = vpop.f32.mrb[0].mxu0
  %v630 = vadd.f32 %v86, %v629
  %631 = vmatprep.mubr.bf16.mxu0 0
  %632 = vmatmul.mubr.bf16.gmra.mrb[0].mxu0 %v223
  %v633 = vpop.f32.mrb[0].mxu0
  %v634 = vadd.f32 %v82, %v633
  %v635 = vpop.f32.mrb[0].mxu0
  %v636 = vadd.f32 %v86, %v635
  %v637 = vpop.f32.mrb[0].mxu0
  %v638 = vadd.f32 %v82, %v637
  %v639 = vpop.f32.mrb[0].mxu0
  %v640 = vadd.f32 %v86, %v639
  %641 = vmatprep.mubr.bf16.mxu0 0
  %642 = vmatmul.mubr.bf16.gmra.mrb[0].mxu0 %v226
  %v643 = vpop.f32.mrb[0].mxu0
  %v644 = vadd.f32 %v82, %v643
  %v645 = vpop.f32.mrb[0].mxu0
  %v646 = vadd.f32 %v86, %v645
  %v647 = vpop.f32.mrb[0].mxu0
  %v648 = vadd.f32 %v82, %v647
  %v649 = vpop.f32.mrb[0].mxu0
  %v650 = vadd.f32 %v86, %v649
  %651 = vmatprep.mubr.bf16.mxu0 0
  %652 = vmatmul.mubr.bf16.gmra.mrb[0].mxu0 %v229
  %v653 = vpop.f32.mrb[0].mxu0
  %v654 = vadd.f32 %v82, %v653
  %v655 = vpop.f32.mrb[0].mxu0
  %v656 = vadd.f32 %v86, %v655
  %v657 = vpop.f32.mrb[0].mxu0
  %v658 = vadd.f32 %v82, %v657
  %v659 = vpop.f32.mrb[0].mxu0
  %v660 = vadd.f32 %v86, %v659
  %661 = vmatprep.mubr.bf16.mxu0 0
  %662 = vmatmul.mubr.bf16.gmra.mrb[0].mxu0 %v232
  %v663 = vpop.f32.mrb[0].mxu0
  %v664 = vadd.f32 %v82, %v663
  %v665 = vpop.f32.mrb[0].mxu0
  %v666 = vadd.f32 %v86, %v665
  %v667 = vpop.f32.mrb[0].mxu0
  %v668 = vadd.f32 %v82, %v667
  %v669 = vpop.f32.mrb[0].mxu0
  %v670 = vadd.f32 %v86, %v669
  %671 = vmatprep.mubr.bf16.mxu0 0
  %672 = vmatmul.mubr.bf16.gmra.mrb[0].mxu0 %v235
  %v673 = vpop.f32.mrb[0].mxu0
  %v674 = vadd.f32 %v82, %v673
  %v675 = vpop.f32.mrb[0].mxu0
  %v676 = vadd.f32 %v86, %v675
  %v677 = vpop.f32.mrb[0].mxu0
  %v678 = vadd.f32 %v82, %v677
  %v679 = vpop.f32.mrb[0].mxu0
  %v680 = vadd.f32 %v86, %v679
  %681 = vmatprep.mubr.bf16.mxu0 0
  %682 = vmatmul.mubr.bf16.gmra.mrb[0].mxu0 %v238
  %v683 = vpop.f32.mrb[0].mxu0
  %v684 = vadd.f32 %v82, %v683
  %v685 = vpop.f32.mrb[0].mxu0
  %v686 = vadd.f32 %v86, %v685
  %v687 = vpop.f32.mrb[0].mxu0
  %v688 = vadd.f32 %v82, %v687
  %v689 = vpop.f32.mrb[0].mxu0
  %v690 = vadd.f32 %v86, %v689
  %691 = vdwg.mxu0
  %v692 = vpack.c.bf16 %v279, %v275
  %v693 = vpack.c.bf16 %v281, %v277
  %v694 = vpack.c.bf16 %v392, %v388
  %v695 = vpack.c.bf16 %v394, %v390
  %v696 = vpack.c.bf16 %v505, %v501
  %v697 = vpack.c.bf16 %v507, %v503
  %v698 = vpack.c.bf16 %v618, %v614
  %v699 = vpack.c.bf16 %v620, %v616
  %v700 = vpack.c.bf16 %v289, %v285
  %v701 = vpack.c.bf16 %v291, %v287
  %v702 = vpack.c.bf16 %v402, %v398
  %v703 = vpack.c.bf16 %v404, %v400
  %v704 = vpack.c.bf16 %v515, %v511
  %v705 = vpack.c.bf16 %v517, %v513
  %v706 = vpack.c.bf16 %v628, %v624
  %v707 = vpack.c.bf16 %v630, %v626
  %v708 = vpack.c.bf16 %v299, %v295
  %v709 = vpack.c.bf16 %v301, %v297
  %v710 = vpack.c.bf16 %v412, %v408
  %v711 = vpack.c.bf16 %v414, %v410
  %v712 = vpack.c.bf16 %v525, %v521
  %v713 = vpack.c.bf16 %v527, %v523
  %v714 = vpack.c.bf16 %v638, %v634
  %v715 = vpack.c.bf16 %v640, %v636
  %v716 = vpack.c.bf16 %v309, %v305
  %v717 = vpack.c.bf16 %v311, %v307
  %v718 = vpack.c.bf16 %v422, %v418
  %v719 = vpack.c.bf16 %v424, %v420
  %v720 = vpack.c.bf16 %v535, %v531
  %v721 = vpack.c.bf16 %v537, %v533
  %v722 = vpack.c.bf16 %v648, %v644
  %v723 = vpack.c.bf16 %v650, %v646
  %v724 = vpack.c.bf16 %v319, %v315
  %v725 = vpack.c.bf16 %v321, %v317
  %v726 = vpack.c.bf16 %v432, %v428
  %v727 = vpack.c.bf16 %v434, %v430
  %v728 = vpack.c.bf16 %v545, %v541
  %v729 = vpack.c.bf16 %v547, %v543
  %v730 = vpack.c.bf16 %v658, %v654
  %v731 = vpack.c.bf16 %v660, %v656
  %v732 = vpack.c.bf16 %v329, %v325
  %v733 = vpack.c.bf16 %v331, %v327
  %v734 = vpack.c.bf16 %v442, %v438
  %v735 = vpack.c.bf16 %v444, %v440
  %v736 = vpack.c.bf16 %v555, %v551
  %v737 = vpack.c.bf16 %v557, %v553
  %v738 = vpack.c.bf16 %v668, %v664
  %v739 = vpack.c.bf16 %v670, %v666
  %v740 = vpack.c.bf16 %v339, %v335
  %v741 = vpack.c.bf16 %v341, %v337
  %v742 = vpack.c.bf16 %v452, %v448
  %v743 = vpack.c.bf16 %v454, %v450
  %v744 = vpack.c.bf16 %v565, %v561
  %v745 = vpack.c.bf16 %v567, %v563
  %v746 = vpack.c.bf16 %v678, %v674
  %v747 = vpack.c.bf16 %v680, %v676
  %v748 = vpack.c.bf16 %v349, %v345
  %v749 = vpack.c.bf16 %v351, %v347
  %v750 = vpack.c.bf16 %v462, %v458
  %v751 = vpack.c.bf16 %v464, %v460
  %v752 = vpack.c.bf16 %v575, %v571
  %v753 = vpack.c.bf16 %v577, %v573
  %v754 = vpack.c.bf16 %v688, %v684
  %v755 = vpack.c.bf16 %v690, %v686
  %756 = vst [vmem:[#allocation2] sm:$0xff] %v692
  %757 = vst [vmem:[#allocation2 + $0x8] sm:$0xff] %v693
  %758 = vst [vmem:[#allocation2 + $0x10] sm:$0xff] %v694
  %759 = vst [vmem:[#allocation2 + $0x18] sm:$0xff] %v695
  %760 = vst [vmem:[#allocation2 + $0x20] sm:$0xff] %v696
  %761 = vst [vmem:[#allocation2 + $0x28] sm:$0xff] %v697
  %762 = vst [vmem:[#allocation2 + $0x30] sm:$0xff] %v698
  %763 = vst [vmem:[#allocation2 + $0x38] sm:$0xff] %v699
  %764 = vst [vmem:[#allocation2 + $0x40] sm:$0xff] %v700
  %765 = vst [vmem:[#allocation2 + $0x48] sm:$0xff] %v701
  %766 = vst [vmem:[#allocation2 + $0x50] sm:$0xff] %v702
  %767 = vst [vmem:[#allocation2 + $0x58] sm:$0xff] %v703
  %768 = vst [vmem:[#allocation2 + $0x60] sm:$0xff] %v704
  %769 = vst [vmem:[#allocation2 + $0x68] sm:$0xff] %v705
  %770 = vst [vmem:[#allocation2 + $0x70] sm:$0xff] %v706
  %771 = vst [vmem:[#allocation2 + $0x78] sm:$0xff] %v707
  %772 = vst [vmem:[#allocation2 + $0x80] sm:$0xff] %v708
  %773 = vst [vmem:[#allocation2 + $0x88] sm:$0xff] %v709
  %774 = vst [vmem:[#allocation2 + $0x90] sm:$0xff] %v710
  %775 = vst [vmem:[#allocation2 + $0x98] sm:$0xff] %v711
  %776 = vst [vmem:[#allocation2 + $0xa0] sm:$0xff] %v712
  %777 = vst [vmem:[#allocation2 + $0xa8] sm:$0xff] %v713
  %778 = vst [vmem:[#allocation2 + $0xb0] sm:$0xff] %v714
  %779 = vst [vmem:[#allocation2 + $0xb8] sm:$0xff] %v715
  %780 = vst [vmem:[#allocation2 + $0xc0] sm:$0xff] %v716
  %781 = vst [vmem:[#allocation2 + $0xc8] sm:$0xff] %v717
  %782 = vst [vmem:[#allocation2 + $0xd0] sm:$0xff] %v718
  %783 = vst [vmem:[#allocation2 + $0xd8] sm:$0xff] %v719
  %784 = vst [vmem:[#allocation2 + $0xe0] sm:$0xff] %v720
  %785 = vst [vmem:[#allocation2 + $0xe8] sm:$0xff] %v721
  %786 = vst [vmem:[#allocation2 + $0xf0] sm:$0xff] %v722
  %787 = vst [vmem:[#allocation2 + $0xf8] sm:$0xff] %v723
  %788 = vst [vmem:[#allocation2 + $0x100] sm:$0xff] %v724
  %789 = vst [vmem:[#allocation2 + $0x108] sm:$0xff] %v725
  %790 = vst [vmem:[#allocation2 + $0x110] sm:$0xff] %v726
  %791 = vst [vmem:[#allocation2 + $0x118] sm:$0xff] %v727
  %792 = vst [vmem:[#allocation2 + $0x120] sm:$0xff] %v728
  %793 = vst [vmem:[#allocation2 + $0x128] sm:$0xff] %v729
  %794 = vst [vmem:[#allocation2 + $0x130] sm:$0xff] %v730
  %795 = vst [vmem:[#allocation2 + $0x138] sm:$0xff] %v731
  %796 = vst [vmem:[#allocation2 + $0x140] sm:$0xff] %v732
  %797 = vst [vmem:[#allocation2 + $0x148] sm:$0xff] %v733
  %798 = vst [vmem:[#allocation2 + $0x150] sm:$0xff] %v734
  %799 = vst [vmem:[#allocation2 + $0x158] sm:$0xff] %v735
  %800 = vst [vmem:[#allocation2 + $0x160] sm:$0xff] %v736
  %801 = vst [vmem:[#allocation2 + $0x168] sm:$0xff] %v737
  %802 = vst [vmem:[#allocation2 + $0x170] sm:$0xff] %v738
  %803 = vst [vmem:[#allocation2 + $0x178] sm:$0xff] %v739
  %804 = vst [vmem:[#allocation2 + $0x180] sm:$0xff] %v740
  %805 = vst [vmem:[#allocation2 + $0x188] sm:$0xff] %v741
  %806 = vst [vmem:[#allocation2 + $0x190] sm:$0xff] %v742
  %807 = vst [vmem:[#allocation2 + $0x198] sm:$0xff] %v743
  %808 = vst [vmem:[#allocation2 + $0x1a0] sm:$0xff] %v744
  %809 = vst [vmem:[#allocation2 + $0x1a8] sm:$0xff] %v745
  %810 = vst [vmem:[#allocation2 + $0x1b0] sm:$0xff] %v746
  %811 = vst [vmem:[#allocation2 + $0x1b8] sm:$0xff] %v747
  %812 = vst [vmem:[#allocation2 + $0x1c0] sm:$0xff] %v748
  %813 = vst [vmem:[#allocation2 + $0x1c8] sm:$0xff] %v749
  %814 = vst [vmem:[#allocation2 + $0x1d0] sm:$0xff] %v750
  %815 = vst [vmem:[#allocation2 + $0x1d8] sm:$0xff] %v751
  %816 = vst [vmem:[#allocation2 + $0x1e0] sm:$0xff] %v752
  %817 = vst [vmem:[#allocation2 + $0x1e8] sm:$0xff] %v753
  %818 = vst [vmem:[#allocation2 + $0x1f0] sm:$0xff] %v754
  %819 = vst [vmem:[#allocation2 + $0x1f8] sm:$0xff] %v755
  %v820 = vld [vmem:[%s1] sm:$0xff]
  %v821 = vld [vmem:[%s1 + $0x8] sm:$0xff]
  %v822 = vld [vmem:[%s1 + $0x10] sm:$0xff]
  %v823 = vld [vmem:[%s1 + $0x18] sm:$0xff]
  %v824 = vld [vmem:[%s1 + $0x20] sm:$0xff]
  %v825 = vld [vmem:[%s1 + $0x28] sm:$0xff]
  %v826 = vld [vmem:[%s1 + $0x30] sm:$0xff]
  %v827 = vld [vmem:[%s1 + $0x38] sm:$0xff]
  %v828 = vld [vmem:[%s1 + $0x40] sm:$0xff]
  %v829 = vld [vmem:[%s1 + $0x48] sm:$0xff]
  %v830 = vld [vmem:[%s1 + $0x50] sm:$0xff]
  %v831 = vld [vmem:[%s1 + $0x58] sm:$0xff]
  %v832 = vld [vmem:[%s1 + $0x60] sm:$0xff]
  %v833 = vld [vmem:[%s1 + $0x68] sm:$0xff]
  %v834 = vld [vmem:[%s1 + $0x70] sm:$0xff]
  %v835 = vld [vmem:[%s1 + $0x78] sm:$0xff]
  %837 = vset.pattern.permute.xlu0 0
  %838 = vperm.xlu0 %837, %v820
  %v839 = vpop.permute.xlu0 %838
  %842 = vset.pattern.permute.xlu0 0
  %843 = vperm.xlu0 %842, %v821
  %v844 = vpop.permute.xlu0 %843
  %847 = vset.pattern.permute.xlu0 0
  %848 = vperm.xlu0 %847, %v822
  %v849 = vpop.permute.xlu0 %848
  %852 = vset.pattern.permute.xlu0 0
  %853 = vperm.xlu0 %852, %v823
  %v854 = vpop.permute.xlu0 %853
  %857 = vset.pattern.permute.xlu0 0
  %858 = vperm.xlu0 %857, %v824
  %v859 = vpop.permute.xlu0 %858
  %862 = vset.pattern.permute.xlu0 0
  %863 = vperm.xlu0 %862, %v825
  %v864 = vpop.permute.xlu0 %863
  %867 = vset.pattern.permute.xlu0 0
  %868 = vperm.xlu0 %867, %v826
  %v869 = vpop.permute.xlu0 %868
  %872 = vset.pattern.permute.xlu0 0
  %873 = vperm.xlu0 %872, %v827
  %v874 = vpop.permute.xlu0 %873
  %877 = vset.pattern.permute.xlu0 0
  %878 = vperm.xlu0 %877, %v828
  %v879 = vpop.permute.xlu0 %878
  %882 = vset.pattern.permute.xlu0 0
  %883 = vperm.xlu0 %882, %v829
  %v884 = vpop.permute.xlu0 %883
  %887 = vset.pattern.permute.xlu0 0
  %888 = vperm.xlu0 %887, %v830
  %v889 = vpop.permute.xlu0 %888
  %892 = vset.pattern.permute.xlu0 0
  %893 = vperm.xlu0 %892, %v831
  %v894 = vpop.permute.xlu0 %893
  %897 = vset.pattern.permute.xlu0 0
  %898 = vperm.xlu0 %897, %v832
  %v899 = vpop.permute.xlu0 %898
  %902 = vset.pattern.permute.xlu0 0
  %903 = vperm.xlu0 %902, %v833
  %v904 = vpop.permute.xlu0 %903
  %907 = vset.pattern.permute.xlu0 0
  %908 = vperm.xlu0 %907, %v834
  %v909 = vpop.permute.xlu0 %908
  %912 = vset.pattern.permute.xlu0 0
  %913 = vperm.xlu0 %912, %v835
  %v914 = vpop.permute.xlu0 %913
  %916 = vst [vmem:[#allocation3] sm:$0xff] %v839
  %917 = vst [vmem:[#allocation3 + $0x8] sm:$0xff] %v844
  %918 = vst [vmem:[#allocation3 + $0x10] sm:$0xff] %v849
  %919 = vst [vmem:[#allocation3 + $0x18] sm:$0xff] %v854
  %920 = vst [vmem:[#allocation3 + $0x20] sm:$0xff] %v859
  %921 = vst [vmem:[#allocation3 + $0x28] sm:$0xff] %v864
  %922 = vst [vmem:[#allocation3 + $0x30] sm:$0xff] %v869
  %923 = vst [vmem:[#allocation3 + $0x38] sm:$0xff] %v874
  %924 = vst [vmem:[#allocation3 + $0x40] sm:$0xff] %v879
  %925 = vst [vmem:[#allocation3 + $0x48] sm:$0xff] %v884
  %926 = vst [vmem:[#allocation3 + $0x50] sm:$0xff] %v889
  %927 = vst [vmem:[#allocation3 + $0x58] sm:$0xff] %v894
  %928 = vst [vmem:[#allocation3 + $0x60] sm:$0xff] %v899
  %929 = vst [vmem:[#allocation3 + $0x68] sm:$0xff] %v904
  %930 = vst [vmem:[#allocation3 + $0x70] sm:$0xff] %v909
  %931 = vst [vmem:[#allocation3 + $0x78] sm:$0xff] %v914
  %v932 = vld [vmem:[%s3] sm:$0xff]
  %v933 = vld [vmem:[%s3 + $0x8] sm:$0xff]
  %v934 = vld [vmem:[%s3 + $0x10] sm:$0xff]
  %v935 = vld [vmem:[%s3 + $0x18] sm:$0xff]
  %v936 = vld [vmem:[%s3 + $0x20] sm:$0xff]
  %v937 = vld [vmem:[%s3 + $0x28] sm:$0xff]
  %v938 = vld [vmem:[%s3 + $0x30] sm:$0xff]
  %v939 = vld [vmem:[%s3 + $0x38] sm:$0xff]
  %v940 = vld [vmem:[%s3 + $0x40] sm:$0xff]
  %v941 = vld [vmem:[%s3 + $0x48] sm:$0xff]
  %v942 = vld [vmem:[%s3 + $0x50] sm:$0xff]
  %v943 = vld [vmem:[%s3 + $0x58] sm:$0xff]
  %v944 = vld [vmem:[%s3 + $0x60] sm:$0xff]
  %v945 = vld [vmem:[%s3 + $0x68] sm:$0xff]
  %v946 = vld [vmem:[%s3 + $0x70] sm:$0xff]
  %v947 = vld [vmem:[%s3 + $0x78] sm:$0xff]
  %v948 = vld [vmem:[%s3 + $0x80] sm:$0xff]
  %v949 = vld [vmem:[%s3 + $0x88] sm:$0xff]
  %v950 = vld [vmem:[%s3 + $0x90] sm:$0xff]
  %v951 = vld [vmem:[%s3 + $0x98] sm:$0xff]
  %v952 = vld [vmem:[%s3 + $0xa0] sm:$0xff]
  %v953 = vld [vmem:[%s3 + $0xa8] sm:$0xff]
  %v954 = vld [vmem:[%s3 + $0xb0] sm:$0xff]
  %v955 = vld [vmem:[%s3 + $0xb8] sm:$0xff]
  %v956 = vld [vmem:[%s3 + $0xc0] sm:$0xff]
  %v957 = vld [vmem:[%s3 + $0xc8] sm:$0xff]
  %v958 = vld [vmem:[%s3 + $0xd0] sm:$0xff]
  %v959 = vld [vmem:[%s3 + $0xd8] sm:$0xff]
  %v960 = vld [vmem:[%s3 + $0xe0] sm:$0xff]
  %v961 = vld [vmem:[%s3 + $0xe8] sm:$0xff]
  %v962 = vld [vmem:[%s3 + $0xf0] sm:$0xff]
  %v963 = vld [vmem:[%s3 + $0xf8] sm:$0xff]
  %v964 = vld [vmem:[%s3 + $0x100] sm:$0xff]
  %v965 = vld [vmem:[%s3 + $0x108] sm:$0xff]
  %v966 = vld [vmem:[%s3 + $0x110] sm:$0xff]
  %v967 = vld [vmem:[%s3 + $0x118] sm:$0xff]
  %v968 = vld [vmem:[%s3 + $0x120] sm:$0xff]
  %v969 = vld [vmem:[%s3 + $0x128] sm:$0xff]
  %v970 = vld [vmem:[%s3 + $0x130] sm:$0xff]
  %v971 = vld [vmem:[%s3 + $0x138] sm:$0xff]
  %v972 = vld [vmem:[%s3 + $0x140] sm:$0xff]
  %v973 = vld [vmem:[%s3 + $0x148] sm:$0xff]
  %v974 = vld [vmem:[%s3 + $0x150] sm:$0xff]
  %v975 = vld [vmem:[%s3 + $0x158] sm:$0xff]
  %v976 = vld [vmem:[%s3 + $0x160] sm:$0xff]
  %v977 = vld [vmem:[%s3 + $0x168] sm:$0xff]
  %v978 = vld [vmem:[%s3 + $0x170] sm:$0xff]
  %v979 = vld [vmem:[%s3 + $0x178] sm:$0xff]
  %v980 = vld [vmem:[%s3 + $0x180] sm:$0xff]
  %v981 = vld [vmem:[%s3 + $0x188] sm:$0xff]
  %v982 = vld [vmem:[%s3 + $0x190] sm:$0xff]
  %v983 = vld [vmem:[%s3 + $0x198] sm:$0xff]
  %v984 = vld [vmem:[%s3 + $0x1a0] sm:$0xff]
  %v985 = vld [vmem:[%s3 + $0x1a8] sm:$0xff]
  %v986 = vld [vmem:[%s3 + $0x1b0] sm:$0xff]
  %v987 = vld [vmem:[%s3 + $0x1b8] sm:$0xff]
  %v988 = vld [vmem:[%s3 + $0x1c0] sm:$0xff]
  %v989 = vld [vmem:[%s3 + $0x1c8] sm:$0xff]
  %v990 = vld [vmem:[%s3 + $0x1d0] sm:$0xff]
  %v991 = vld [vmem:[%s3 + $0x1d8] sm:$0xff]
  %v992 = vld [vmem:[%s3 + $0x1e0] sm:$0xff]
  %v993 = vld [vmem:[%s3 + $0x1e8] sm:$0xff]
  %v994 = vld [vmem:[%s3 + $0x1f0] sm:$0xff]
  %v995 = vld [vmem:[%s3 + $0x1f8] sm:$0xff]
  %v996 = vld [vmem:[%s3 + $0x200] sm:$0xff]
  %v997 = vld [vmem:[%s3 + $0x208] sm:$0xff]
  %v998 = vld [vmem:[%s3 + $0x210] sm:$0xff]
  %v999 = vld [vmem:[%s3 + $0x218] sm:$0xff]
  %v1000 = vld [vmem:[%s3 + $0x220] sm:$0xff]
  %v1001 = vld [vmem:[%s3 + $0x228] sm:$0xff]
  %v1002 = vld [vmem:[%s3 + $0x230] sm:$0xff]
  %v1003 = vld [vmem:[%s3 + $0x238] sm:$0xff]
  %v1004 = vld [vmem:[%s3 + $0x240] sm:$0xff]
  %v1005 = vld [vmem:[%s3 + $0x248] sm:$0xff]
  %v1006 = vld [vmem:[%s3 + $0x250] sm:$0xff]
  %v1007 = vld [vmem:[%s3 + $0x258] sm:$0xff]
  %v1008 = vld [vmem:[%s3 + $0x260] sm:$0xff]
  %v1009 = vld [vmem:[%s3 + $0x268] sm:$0xff]
  %v1010 = vld [vmem:[%s3 + $0x270] sm:$0xff]
  %v1011 = vld [vmem:[%s3 + $0x278] sm:$0xff]
  %v1012 = vld [vmem:[%s3 + $0x280] sm:$0xff]
  %v1013 = vld [vmem:[%s3 + $0x288] sm:$0xff]
  %v1014 = vld [vmem:[%s3 + $0x290] sm:$0xff]
  %v1015 = vld [vmem:[%s3 + $0x298] sm:$0xff]
  %v1016 = vld [vmem:[%s3 + $0x2a0] sm:$0xff]
  %v1017 = vld [vmem:[%s3 + $0x2a8] sm:$0xff]
  %v1018 = vld [vmem:[%s3 + $0x2b0] sm:$0xff]
  %v1019 = vld [vmem:[%s3 + $0x2b8] sm:$0xff]
  %v1020 = vld [vmem:[%s3 + $0x2c0] sm:$0xff]
  %v1021 = vld [vmem:[%s3 + $0x2c8] sm:$0xff]
  %v1022 = vld [vmem:[%s3 + $0x2d0] sm:$0xff]
  %v1023 = vld [vmem:[%s3 + $0x2d8] sm:$0xff]
  %v1024 = vld [vmem:[%s3 + $0x2e0] sm:$0xff]
  %v1025 = vld [vmem:[%s3 + $0x2e8] sm:$0xff]
  %v1026 = vld [vmem:[%s3 + $0x2f0] sm:$0xff]
  %v1027 = vld [vmem:[%s3 + $0x2f8] sm:$0xff]
  %v1028 = vld [vmem:[%s3 + $0x300] sm:$0xff]
  %v1029 = vld [vmem:[%s3 + $0x308] sm:$0xff]
  %v1030 = vld [vmem:[%s3 + $0x310] sm:$0xff]
  %v1031 = vld [vmem:[%s3 + $0x318] sm:$0xff]
  %v1032 = vld [vmem:[%s3 + $0x320] sm:$0xff]
  %v1033 = vld [vmem:[%s3 + $0x328] sm:$0xff]
  %v1034 = vld [vmem:[%s3 + $0x330] sm:$0xff]
  %v1035 = vld [vmem:[%s3 + $0x338] sm:$0xff]
  %v1036 = vld [vmem:[%s3 + $0x340] sm:$0xff]
  %v1037 = vld [vmem:[%s3 + $0x348] sm:$0xff]
  %v1038 = vld [vmem:[%s3 + $0x350] sm:$0xff]
  %v1039 = vld [vmem:[%s3 + $0x358] sm:$0xff]
  %v1040 = vld [vmem:[%s3 + $0x360] sm:$0xff]
  %v1041 = vld [vmem:[%s3 + $0x368] sm:$0xff]
  %v1042 = vld [vmem:[%s3 + $0x370] sm:$0xff]
  %v1043 = vld [vmem:[%s3 + $0x378] sm:$0xff]
  %v1044 = vld [vmem:[%s3 + $0x380] sm:$0xff]
  %v1045 = vld [vmem:[%s3 + $0x388] sm:$0xff]
  %v1046 = vld [vmem:[%s3 + $0x390] sm:$0xff]
  %v1047 = vld [vmem:[%s3 + $0x398] sm:$0xff]
  %v1048 = vld [vmem:[%s3 + $0x3a0] sm:$0xff]
  %v1049 = vld [vmem:[%s3 + $0x3a8] sm:$0xff]
  %v1050 = vld [vmem:[%s3 + $0x3b0] sm:$0xff]
  %v1051 = vld [vmem:[%s3 + $0x3b8] sm:$0xff]
  %v1052 = vld [vmem:[%s3 + $0x3c0] sm:$0xff]
  %v1053 = vld [vmem:[%s3 + $0x3c8] sm:$0xff]
  %v1054 = vld [vmem:[%s3 + $0x3d0] sm:$0xff]
  %v1055 = vld [vmem:[%s3 + $0x3d8] sm:$0xff]
  %v1056 = vld [vmem:[%s3 + $0x3e0] sm:$0xff]
  %v1057 = vld [vmem:[%s3 + $0x3e8] sm:$0xff]
  %v1058 = vld [vmem:[%s3 + $0x3f0] sm:$0xff]
  %v1059 = vld [vmem:[%s3 + $0x3f8] sm:$0xff]
  %v1060 = vpack.c.bf16 0.0, 0.0
  %v1189 = vunpack.c.l.b16 %v932
  %v1190 = vunpack.c.h.b16 %v932
  %v1191 = vunpack.c.l.b16 %v933
  %v1192 = vunpack.c.h.b16 %v933
  %v1193 = vunpack.c.l.b16 %v934
  %v1194 = vunpack.c.h.b16 %v934
  %v1195 = vunpack.c.l.b16 %v935
  %v1196 = vunpack.c.h.b16 %v935
  %v1197 = vunpack.c.l.b16 %v936
  %v1198 = vunpack.c.h.b16 %v936
  %v1199 = vunpack.c.l.b16 %v937
  %v1200 = vunpack.c.h.b16 %v937
  %v1201 = vunpack.c.l.b16 %v938
  %v1202 = vunpack.c.h.b16 %v938
  %v1203 = vunpack.c.l.b16 %v939
  %v1204 = vunpack.c.h.b16 %v939
  %v1205 = vunpack.c.l.b16 %v940
  %v1206 = vunpack.c.h.b16 %v940
  %v1207 = vunpack.c.l.b16 %v941
  %v1208 = vunpack.c.h.b16 %v941
  %v1209 = vunpack.c.l.b16 %v942
  %v1210 = vunpack.c.h.b16 %v942
  %v1211 = vunpack.c.l.b16 %v943
  %v1212 = vunpack.c.h.b16 %v943
  %v1213 = vunpack.c.l.b16 %v944
  %v1214 = vunpack.c.h.b16 %v944
  %v1215 = vunpack.c.l.b16 %v945
  %v1216 = vunpack.c.h.b16 %v945
  %v1217 = vunpack.c.l.b16 %v946
  %v1218 = vunpack.c.h.b16 %v946
  %v1219 = vunpack.c.l.b16 %v947
  %v1220 = vunpack.c.h.b16 %v947
  %v1221 = vunpack.c.l.b16 %v948
  %v1222 = vunpack.c.h.b16 %v948
  %v1223 = vunpack.c.l.b16 %v949
  %v1224 = vunpack.c.h.b16 %v949
  %v1225 = vunpack.c.l.b16 %v950
  %v1226 = vunpack.c.h.b16 %v950
  %v1227 = vunpack.c.l.b16 %v951
  %v1228 = vunpack.c.h.b16 %v951
  %v1229 = vunpack.c.l.b16 %v952
  %v1230 = vunpack.c.h.b16 %v952
  %v1231 = vunpack.c.l.b16 %v953
  %v1232 = vunpack.c.h.b16 %v953
  %v1233 = vunpack.c.l.b16 %v954
  %v1234 = vunpack.c.h.b16 %v954
  %v1235 = vunpack.c.l.b16 %v955
  %v1236 = vunpack.c.h.b16 %v955
  %v1237 = vunpack.c.l.b16 %v956
  %v1238 = vunpack.c.h.b16 %v956
  %v1239 = vunpack.c.l.b16 %v957
  %v1240 = vunpack.c.h.b16 %v957
  %v1241 = vunpack.c.l.b16 %v958
  %v1242 = vunpack.c.h.b16 %v958
  %v1243 = vunpack.c.l.b16 %v959
  %v1244 = vunpack.c.h.b16 %v959
  %v1245 = vunpack.c.l.b16 %v960
  %v1246 = vunpack.c.h.b16 %v960
  %v1247 = vunpack.c.l.b16 %v961
  %v1248 = vunpack.c.h.b16 %v961
  %v1249 = vunpack.c.l.b16 %v962
  %v1250 = vunpack.c.h.b16 %v962
  %v1251 = vunpack.c.l.b16 %v963
  %v1252 = vunpack.c.h.b16 %v963
  %v1253 = vunpack.c.l.b16 %v964
  %v1254 = vunpack.c.h.b16 %v964
  %v1255 = vunpack.c.l.b16 %v965
  %v1256 = vunpack.c.h.b16 %v965
  %v1257 = vunpack.c.l.b16 %v966
  %v1258 = vunpack.c.h.b16 %v966
  %v1259 = vunpack.c.l.b16 %v967
  %v1260 = vunpack.c.h.b16 %v967
  %v1261 = vunpack.c.l.b16 %v968
  %v1262 = vunpack.c.h.b16 %v968
  %v1263 = vunpack.c.l.b16 %v969
  %v1264 = vunpack.c.h.b16 %v969
  %v1265 = vunpack.c.l.b16 %v970
  %v1266 = vunpack.c.h.b16 %v970
  %v1267 = vunpack.c.l.b16 %v971
  %v1268 = vunpack.c.h.b16 %v971
  %v1269 = vunpack.c.l.b16 %v972
  %v1270 = vunpack.c.h.b16 %v972
  %v1271 = vunpack.c.l.b16 %v973
  %v1272 = vunpack.c.h.b16 %v973
  %v1273 = vunpack.c.l.b16 %v974
  %v1274 = vunpack.c.h.b16 %v974
  %v1275 = vunpack.c.l.b16 %v975
  %v1276 = vunpack.c.h.b16 %v975
  %v1277 = vunpack.c.l.b16 %v976
  %v1278 = vunpack.c.h.b16 %v976
  %v1279 = vunpack.c.l.b16 %v977
  %v1280 = vunpack.c.h.b16 %v977
  %v1281 = vunpack.c.l.b16 %v978
  %v1282 = vunpack.c.h.b16 %v978
  %v1283 = vunpack.c.l.b16 %v979
  %v1284 = vunpack.c.h.b16 %v979
  %v1285 = vunpack.c.l.b16 %v980
  %v1286 = vunpack.c.h.b16 %v980
  %v1287 = vunpack.c.l.b16 %v981
  %v1288 = vunpack.c.h.b16 %v981
  %v1289 = vunpack.c.l.b16 %v982
  %v1290 = vunpack.c.h.b16 %v982
  %v1291 = vunpack.c.l.b16 %v983
  %v1292 = vunpack.c.h.b16 %v983
  %v1293 = vunpack.c.l.b16 %v984
  %v1294 = vunpack.c.h.b16 %v984
  %v1295 = vunpack.c.l.b16 %v985
  %v1296 = vunpack.c.h.b16 %v985
  %v1297 = vunpack.c.l.b16 %v986
  %v1298 = vunpack.c.h.b16 %v986
  %v1299 = vunpack.c.l.b16 %v987
  %v1300 = vunpack.c.h.b16 %v987
  %v1301 = vunpack.c.l.b16 %v988
  %v1302 = vunpack.c.h.b16 %v988
  %v1303 = vunpack.c.l.b16 %v989
  %v1304 = vunpack.c.h.b16 %v989
  %v1305 = vunpack.c.l.b16 %v990
  %v1306 = vunpack.c.h.b16 %v990
  %v1307 = vunpack.c.l.b16 %v991
  %v1308 = vunpack.c.h.b16 %v991
  %v1309 = vunpack.c.l.b16 %v992
  %v1310 = vunpack.c.h.b16 %v992
  %v1311 = vunpack.c.l.b16 %v993
  %v1312 = vunpack.c.h.b16 %v993
  %v1313 = vunpack.c.l.b16 %v994
  %v1314 = vunpack.c.h.b16 %v994
  %v1315 = vunpack.c.l.b16 %v995
  %v1316 = vunpack.c.h.b16 %v995
  %v1317 = vunpack.c.l.b16 %v996
  %v1318 = vunpack.c.h.b16 %v996
  %v1319 = vunpack.c.l.b16 %v997
  %v1320 = vunpack.c.h.b16 %v997
  %v1321 = vunpack.c.l.b16 %v998
  %v1322 = vunpack.c.h.b16 %v998
  %v1323 = vunpack.c.l.b16 %v999
  %v1324 = vunpack.c.h.b16 %v999
  %v1325 = vunpack.c.l.b16 %v1000
  %v1326 = vunpack.c.h.b16 %v1000
  %v1327 = vunpack.c.l.b16 %v1001
  %v1328 = vunpack.c.h.b16 %v1001
  %v1329 = vunpack.c.l.b16 %v1002
  %v1330 = vunpack.c.h.b16 %v1002
  %v1331 = vunpack.c.l.b16 %v1003
  %v1332 = vunpack.c.h.b16 %v1003
  %v1333 = vunpack.c.l.b16 %v1004
  %v1334 = vunpack.c.h.b16 %v1004
  %v1335 = vunpack.c.l.b16 %v1005
  %v1336 = vunpack.c.h.b16 %v1005
  %v1337 = vunpack.c.l.b16 %v1006
  %v1338 = vunpack.c.h.b16 %v1006
  %v1339 = vunpack.c.l.b16 %v1007
  %v1340 = vunpack.c.h.b16 %v1007
  %v1341 = vunpack.c.l.b16 %v1008
  %v1342 = vunpack.c.h.b16 %v1008
  %v1343 = vunpack.c.l.b16 %v1009
  %v1344 = vunpack.c.h.b16 %v1009
  %v1345 = vunpack.c.l.b16 %v1010
  %v1346 = vunpack.c.h.b16 %v1010
  %v1347 = vunpack.c.l.b16 %v1011
  %v1348 = vunpack.c.h.b16 %v1011
  %v1349 = vunpack.c.l.b16 %v1012
  %v1350 = vunpack.c.h.b16 %v1012
  %v1351 = vunpack.c.l.b16 %v1013
  %v1352 = vunpack.c.h.b16 %v1013
  %v1353 = vunpack.c.l.b16 %v1014
  %v1354 = vunpack.c.h.b16 %v1014
  %v1355 = vunpack.c.l.b16 %v1015
  %v1356 = vunpack.c.h.b16 %v1015
  %v1357 = vunpack.c.l.b16 %v1016
  %v1358 = vunpack.c.h.b16 %v1016
  %v1359 = vunpack.c.l.b16 %v1017
  %v1360 = vunpack.c.h.b16 %v1017
  %v1361 = vunpack.c.l.b16 %v1018
  %v1362 = vunpack.c.h.b16 %v1018
  %v1363 = vunpack.c.l.b16 %v1019
  %v1364 = vunpack.c.h.b16 %v1019
  %v1365 = vunpack.c.l.b16 %v1020
  %v1366 = vunpack.c.h.b16 %v1020
  %v1367 = vunpack.c.l.b16 %v1021
  %v1368 = vunpack.c.h.b16 %v1021
  %v1369 = vunpack.c.l.b16 %v1022
  %v1370 = vunpack.c.h.b16 %v1022
  %v1371 = vunpack.c.l.b16 %v1023
  %v1372 = vunpack.c.h.b16 %v1023
  %v1373 = vunpack.c.l.b16 %v1024
  %v1374 = vunpack.c.h.b16 %v1024
  %v1375 = vunpack.c.l.b16 %v1025
  %v1376 = vunpack.c.h.b16 %v1025
  %v1377 = vunpack.c.l.b16 %v1026
  %v1378 = vunpack.c.h.b16 %v1026
  %v1379 = vunpack.c.l.b16 %v1027
  %v1380 = vunpack.c.h.b16 %v1027
  %v1381 = vunpack.c.l.b16 %v1028
  %v1382 = vunpack.c.h.b16 %v1028
  %v1383 = vunpack.c.l.b16 %v1029
  %v1384 = vunpack.c.h.b16 %v1029
  %v1385 = vunpack.c.l.b16 %v1030
  %v1386 = vunpack.c.h.b16 %v1030
  %v1387 = vunpack.c.l.b16 %v1031
  %v1388 = vunpack.c.h.b16 %v1031
  %v1389 = vunpack.c.l.b16 %v1032
  %v1390 = vunpack.c.h.b16 %v1032
  %v1391 = vunpack.c.l.b16 %v1033
  %v1392 = vunpack.c.h.b16 %v1033
  %v1393 = vunpack.c.l.b16 %v1034
  %v1394 = vunpack.c.h.b16 %v1034
  %v1395 = vunpack.c.l.b16 %v1035
  %v1396 = vunpack.c.h.b16 %v1035
  %v1397 = vunpack.c.l.b16 %v1036
  %v1398 = vunpack.c.h.b16 %v1036
  %v1399 = vunpack.c.l.b16 %v1037
  %v1400 = vunpack.c.h.b16 %v1037
  %v1401 = vunpack.c.l.b16 %v1038
  %v1402 = vunpack.c.h.b16 %v1038
  %v1403 = vunpack.c.l.b16 %v1039
  %v1404 = vunpack.c.h.b16 %v1039
  %v1405 = vunpack.c.l.b16 %v1040
  %v1406 = vunpack.c.h.b16 %v1040
  %v1407 = vunpack.c.l.b16 %v1041
  %v1408 = vunpack.c.h.b16 %v1041
  %v1409 = vunpack.c.l.b16 %v1042
  %v1410 = vunpack.c.h.b16 %v1042
  %v1411 = vunpack.c.l.b16 %v1043
  %v1412 = vunpack.c.h.b16 %v1043
  %v1413 = vunpack.c.l.b16 %v1044
  %v1414 = vunpack.c.h.b16 %v1044
  %v1415 = vunpack.c.l.b16 %v1045
  %v1416 = vunpack.c.h.b16 %v1045
  %v1417 = vunpack.c.l.b16 %v1046
  %v1418 = vunpack.c.h.b16 %v1046
  %v1419 = vunpack.c.l.b16 %v1047
  %v1420 = vunpack.c.h.b16 %v1047
  %v1421 = vunpack.c.l.b16 %v1048
  %v1422 = vunpack.c.h.b16 %v1048
  %v1423 = vunpack.c.l.b16 %v1049
  %v1424 = vunpack.c.h.b16 %v1049
  %v1425 = vunpack.c.l.b16 %v1050
  %v1426 = vunpack.c.h.b16 %v1050
  %v1427 = vunpack.c.l.b16 %v1051
  %v1428 = vunpack.c.h.b16 %v1051
  %v1429 = vunpack.c.l.b16 %v1052
  %v1430 = vunpack.c.h.b16 %v1052
  %v1431 = vunpack.c.l.b16 %v1053
  %v1432 = vunpack.c.h.b16 %v1053
  %v1433 = vunpack.c.l.b16 %v1054
  %v1434 = vunpack.c.h.b16 %v1054
  %v1435 = vunpack.c.l.b16 %v1055
  %v1436 = vunpack.c.h.b16 %v1055
  %v1437 = vunpack.c.l.b16 %v1056
  %v1438 = vunpack.c.h.b16 %v1056
  %v1439 = vunpack.c.l.b16 %v1057
  %v1440 = vunpack.c.h.b16 %v1057
  %v1441 = vunpack.c.l.b16 %v1058
  %v1442 = vunpack.c.h.b16 %v1058
  %v1443 = vunpack.c.l.b16 %v1059
  %v1444 = vunpack.c.h.b16 %v1059
  %v1445 = vpack.c.b16 %v1197, %v1189
  %v1446 = vpack.c.b16 %v1198, %v1190
  %v1447 = vpack.c.b16 %v1199, %v1191
  %v1448 = vpack.c.b16 %v1200, %v1192
  %v1449 = vpack.c.b16 %v1201, %v1193
  %v1450 = vpack.c.b16 %v1202, %v1194
  %v1451 = vpack.c.b16 %v1203, %v1195
  %v1452 = vpack.c.b16 %v1204, %v1196
  %v1453 = vpack.c.b16 %v1213, %v1205
  %v1454 = vpack.c.b16 %v1214, %v1206
  %v1455 = vpack.c.b16 %v1215, %v1207
  %v1456 = vpack.c.b16 %v1216, %v1208
  %v1457 = vpack.c.b16 %v1217, %v1209
  %v1458 = vpack.c.b16 %v1218, %v1210
  %v1459 = vpack.c.b16 %v1219, %v1211
  %v1460 = vpack.c.b16 %v1220, %v1212
  %v1461 = vpack.c.b16 %v1229, %v1221
  %v1462 = vpack.c.b16 %v1230, %v1222
  %v1463 = vpack.c.b16 %v1231, %v1223
  %v1464 = vpack.c.b16 %v1232, %v1224
  %v1465 = vpack.c.b16 %v1233, %v1225
  %v1466 = vpack.c.b16 %v1234, %v1226
  %v1467 = vpack.c.b16 %v1235, %v1227
  %v1468 = vpack.c.b16 %v1236, %v1228
  %v1469 = vpack.c.b16 %v1245, %v1237
  %v1470 = vpack.c.b16 %v1246, %v1238
  %v1471 = vpack.c.b16 %v1247, %v1239
  %v1472 = vpack.c.b16 %v1248, %v1240
  %v1473 = vpack.c.b16 %v1249, %v1241
  %v1474 = vpack.c.b16 %v1250, %v1242
  %v1475 = vpack.c.b16 %v1251, %v1243
  %v1476 = vpack.c.b16 %v1252, %v1244
  %v1477 = vpack.c.b16 %v1261, %v1253
  %v1478 = vpack.c.b16 %v1262, %v1254
  %v1479 = vpack.c.b16 %v1263, %v1255
  %v1480 = vpack.c.b16 %v1264, %v1256
  %v1481 = vpack.c.b16 %v1265, %v1257
  %v1482 = vpack.c.b16 %v1266, %v1258
  %v1483 = vpack.c.b16 %v1267, %v1259
  %v1484 = vpack.c.b16 %v1268, %v1260
  %v1485 = vpack.c.b16 %v1277, %v1269
  %v1486 = vpack.c.b16 %v1278, %v1270
  %v1487 = vpack.c.b16 %v1279, %v1271
  %v1488 = vpack.c.b16 %v1280, %v1272
  %v1489 = vpack.c.b16 %v1281, %v1273
  %v1490 = vpack.c.b16 %v1282, %v1274
  %v1491 = vpack.c.b16 %v1283, %v1275
  %v1492 = vpack.c.b16 %v1284, %v1276
  %v1493 = vpack.c.b16 %v1293, %v1285
  %v1494 = vpack.c.b16 %v1294, %v1286
  %v1495 = vpack.c.b16 %v1295, %v1287
  %v1496 = vpack.c.b16 %v1296, %v1288
  %v1497 = vpack.c.b16 %v1297, %v1289
  %v1498 = vpack.c.b16 %v1298, %v1290
  %v1499 = vpack.c.b16 %v1299, %v1291
  %v1500 = vpack.c.b16 %v1300, %v1292
  %v1501 = vpack.c.b16 %v1309, %v1301
  %v1502 = vpack.c.b16 %v1310, %v1302
  %v1503 = vpack.c.b16 %v1311, %v1303
  %v1504 = vpack.c.b16 %v1312, %v1304
  %v1505 = vpack.c.b16 %v1313, %v1305
  %v1506 = vpack.c.b16 %v1314, %v1306
  %v1507 = vpack.c.b16 %v1315, %v1307
  %v1508 = vpack.c.b16 %v1316, %v1308
  %v1509 = vpack.c.b16 %v1325, %v1317
  %v1510 = vpack.c.b16 %v1326, %v1318
  %v1511 = vpack.c.b16 %v1327, %v1319
  %v1512 = vpack.c.b16 %v1328, %v1320
  %v1513 = vpack.c.b16 %v1329, %v1321
  %v1514 = vpack.c.b16 %v1330, %v1322
  %v1515 = vpack.c.b16 %v1331, %v1323
  %v1516 = vpack.c.b16 %v1332, %v1324
  %v1517 = vpack.c.b16 %v1341, %v1333
  %v1518 = vpack.c.b16 %v1342, %v1334
  %v1519 = vpack.c.b16 %v1343, %v1335
  %v1520 = vpack.c.b16 %v1344, %v1336
  %v1521 = vpack.c.b16 %v1345, %v1337
  %v1522 = vpack.c.b16 %v1346, %v1338
  %v1523 = vpack.c.b16 %v1347, %v1339
  %v1524 = vpack.c.b16 %v1348, %v1340
  %v1525 = vpack.c.b16 %v1357, %v1349
  %v1526 = vpack.c.b16 %v1358, %v1350
  %v1527 = vpack.c.b16 %v1359, %v1351
  %v1528 = vpack.c.b16 %v1360, %v1352
  %v1529 = vpack.c.b16 %v1361, %v1353
  %v1530 = vpack.c.b16 %v1362, %v1354
  %v1531 = vpack.c.b16 %v1363, %v1355
  %v1532 = vpack.c.b16 %v1364, %v1356
  %v1533 = vpack.c.b16 %v1373, %v1365
  %v1534 = vpack.c.b16 %v1374, %v1366
  %v1535 = vpack.c.b16 %v1375, %v1367
  %v1536 = vpack.c.b16 %v1376, %v1368
  %v1537 = vpack.c.b16 %v1377, %v1369
  %v1538 = vpack.c.b16 %v1378, %v1370
  %v1539 = vpack.c.b16 %v1379, %v1371
  %v1540 = vpack.c.b16 %v1380, %v1372
  %v1541 = vpack.c.b16 %v1389, %v1381
  %v1542 = vpack.c.b16 %v1390, %v1382
  %v1543 = vpack.c.b16 %v1391, %v1383
  %v1544 = vpack.c.b16 %v1392, %v1384
  %v1545 = vpack.c.b16 %v1393, %v1385
  %v1546 = vpack.c.b16 %v1394, %v1386
  %v1547 = vpack.c.b16 %v1395, %v1387
  %v1548 = vpack.c.b16 %v1396, %v1388
  %v1549 = vpack.c.b16 %v1405, %v1397
  %v1550 = vpack.c.b16 %v1406, %v1398
  %v1551 = vpack.c.b16 %v1407, %v1399
  %v1552 = vpack.c.b16 %v1408, %v1400
  %v1553 = vpack.c.b16 %v1409, %v1401
  %v1554 = vpack.c.b16 %v1410, %v1402
  %v1555 = vpack.c.b16 %v1411, %v1403
  %v1556 = vpack.c.b16 %v1412, %v1404
  %v1557 = vpack.c.b16 %v1421, %v1413
  %v1558 = vpack.c.b16 %v1422, %v1414
  %v1559 = vpack.c.b16 %v1423, %v1415
  %v1560 = vpack.c.b16 %v1424, %v1416
  %v1561 = vpack.c.b16 %v1425, %v1417
  %v1562 = vpack.c.b16 %v1426, %v1418
  %v1563 = vpack.c.b16 %v1427, %v1419
  %v1564 = vpack.c.b16 %v1428, %v1420
  %v1565 = vpack.c.b16 %v1437, %v1429
  %v1566 = vpack.c.b16 %v1438, %v1430
  %v1567 = vpack.c.b16 %v1439, %v1431
  %v1568 = vpack.c.b16 %v1440, %v1432
  %v1569 = vpack.c.b16 %v1441, %v1433
  %v1570 = vpack.c.b16 %v1442, %v1434
  %v1571 = vpack.c.b16 %v1443, %v1435
  %v1572 = vpack.c.b16 %v1444, %v1436
  %1701 = vmatprep.subr.bf16.mxu0 %v1446
  %1702 = vmatpush1.bf16.msra.mxu0 %v1445
  %1703 = vmatprep.subr.bf16.mxu0 %v1454
  %1704 = vmatpush1.bf16.msra.mxu0 %v1453
  %1705 = vmatprep.subr.bf16.mxu0 %v1462
  %1706 = vmatpush1.bf16.msra.mxu0 %v1461
  %1707 = vmatprep.subr.bf16.mxu0 %v1470
  %1708 = vmatpush1.bf16.msra.mxu0 %v1469
  %1709 = vmatprep.subr.bf16.mxu0 %v1478
  %1710 = vmatpush1.bf16.msra.mxu0 %v1477
  %1711 = vmatprep.subr.bf16.mxu0 %v1486
  %1712 = vmatpush1.bf16.msra.mxu0 %v1485
  %1713 = vmatprep.subr.bf16.mxu0 %v1494
  %1714 = vmatpush1.bf16.msra.mxu0 %v1493
  %1715 = vmatprep.subr.bf16.mxu0 %v1502
  %1716 = vmatpush1.bf16.msra.mxu0 %v1501
  %1717 = vmatprep.subr.bf16.mxu0 %v1510
  %1718 = vmatpush1.bf16.msra.mxu0 %v1509
  %1719 = vmatprep.subr.bf16.mxu0 %v1518
  %1720 = vmatpush1.bf16.msra.mxu0 %v1517
  %1721 = vmatprep.subr.bf16.mxu0 %v1526
  %1722 = vmatpush1.bf16.msra.mxu0 %v1525
  %1723 = vmatprep.subr.bf16.mxu0 %v1534
  %1724 = vmatpush1.bf16.msra.mxu0 %v1533
  %1725 = vmatprep.subr.bf16.mxu0 %v1542
  %1726 = vmatpush1.bf16.msra.mxu0 %v1541
  %1727 = vmatprep.subr.bf16.mxu0 %v1550
  %1728 = vmatpush1.bf16.msra.mxu0 %v1549
  %1729 = vmatprep.subr.bf16.mxu0 %v1558
  %1730 = vmatpush1.bf16.msra.mxu0 %v1557
  %1731 = vmatprep.subr.bf16.mxu0 %v1566
  %1732 = vmatpush1.bf16.msra.mxu0 %v1565
  %1733 = vmatprep.mubr.bf16.mxu0 %v1060
  %1734 = vmatmul.mubr.bf16.gmra.mrb[0].mxu0 %v1060
  %v1735 = vpop.f32.mrb[0].mxu0
  %v1736 = vadd.f32 0.0, %v1735
  %v1737 = vpop.f32.mrb[0].mxu0
  %v1738 = vadd.f32 0.0, %v1737
  %v1739 = vpop.f32.mrb[0].mxu0
  %v1740 = vadd.f32 0.0, %v1739
  %v1741 = vpop.f32.mrb[0].mxu0
  %v1742 = vadd.f32 0.0, %v1741
  %1743 = vdwg.mxu0
  %1744 = vmatprep.subr.bf16.mxu0 %v1448
  %1745 = vmatpush1.bf16.msra.mxu0 %v1447
  %1746 = vmatprep.subr.bf16.mxu0 %v1456
  %1747 = vmatpush1.bf16.msra.mxu0 %v1455
  %1748 = vmatprep.subr.bf16.mxu0 %v1464
  %1749 = vmatpush1.bf16.msra.mxu0 %v1463
  %1750 = vmatprep.subr.bf16.mxu0 %v1472
  %1751 = vmatpush1.bf16.msra.mxu0 %v1471
  %1752 = vmatprep.subr.bf16.mxu0 %v1480
  %1753 = vmatpush1.bf16.msra.mxu0 %v1479
  %1754 = vmatprep.subr.bf16.mxu0 %v1488
  %1755 = vmatpush1.bf16.msra.mxu0 %v1487
  %1756 = vmatprep.subr.bf16.mxu0 %v1496
  %1757 = vmatpush1.bf16.msra.mxu0 %v1495
  %1758 = vmatprep.subr.bf16.mxu0 %v1504
  %1759 = vmatpush1.bf16.msra.mxu0 %v1503
  %1760 = vmatprep.subr.bf16.mxu0 %v1512
  %1761 = vmatpush1.bf16.msra.mxu0 %v1511
  %1762 = vmatprep.subr.bf16.mxu0 %v1520
  %1763 = vmatpush1.bf16.msra.mxu0 %v1519
  %1764 = vmatprep.subr.bf16.mxu0 %v1528
  %1765 = vmatpush1.bf16.msra.mxu0 %v1527
  %1766 = vmatprep.subr.bf16.mxu0 %v1536
  %1767 = vmatpush1.bf16.msra.mxu0 %v1535
  %1768 = vmatprep.subr.bf16.mxu0 %v1544
  %1769 = vmatpush1.bf16.msra.mxu0 %v1543
  %1770 = vmatprep.subr.bf16.mxu0 %v1552
  %1771 = vmatpush1.bf16.msra.mxu0 %v1551
  %1772 = vmatprep.subr.bf16.mxu0 %v1560
  %1773 = vmatpush1.bf16.msra.mxu0 %v1559
  %1774 = vmatprep.subr.bf16.mxu0 %v1568
  %1775 = vmatpush1.bf16.msra.mxu0 %v1567
  %1776 = vmatprep.mubr.bf16.mxu0 %v1060
  %1777 = vmatmul.mubr.bf16.gmra.mrb[0].mxu0 %v1060
  %v1778 = vpop.f32.mrb[0].mxu0
  %v1779 = vadd.f32 0.0, %v1778
  %v1780 = vpop.f32.mrb[0].mxu0
  %v1781 = vadd.f32 0.0, %v1780
  %v1782 = vpop.f32.mrb[0].mxu0
  %v1783 = vadd.f32 0.0, %v1782
  %v1784 = vpop.f32.mrb[0].mxu0
  %v1785 = vadd.f32 0.0, %v1784
  %1786 = vdwg.mxu0
  %1787 = vmatprep.subr.bf16.mxu0 %v1450
  %1788 = vmatpush1.bf16.msra.mxu0 %v1449
  %1789 = vmatprep.subr.bf16.mxu0 %v1458
  %1790 = vmatpush1.bf16.msra.mxu0 %v1457
  %1791 = vmatprep.subr.bf16.mxu0 %v1466
  %1792 = vmatpush1.bf16.msra.mxu0 %v1465
  %1793 = vmatprep.subr.bf16.mxu0 %v1474
  %1794 = vmatpush1.bf16.msra.mxu0 %v1473
  %1795 = vmatprep.subr.bf16.mxu0 %v1482
  %1796 = vmatpush1.bf16.msra.mxu0 %v1481
  %1797 = vmatprep.subr.bf16.mxu0 %v1490
  %1798 = vmatpush1.bf16.msra.mxu0 %v1489
  %1799 = vmatprep.subr.bf16.mxu0 %v1498
  %1800 = vmatpush1.bf16.msra.mxu0 %v1497
  %1801 = vmatprep.subr.bf16.mxu0 %v1506
  %1802 = vmatpush1.bf16.msra.mxu0 %v1505
  %1803 = vmatprep.subr.bf16.mxu0 %v1514
  %1804 = vmatpush1.bf16.msra.mxu0 %v1513
  %1805 = vmatprep.subr.bf16.mxu0 %v1522
  %1806 = vmatpush1.bf16.msra.mxu0 %v1521
  %1807 = vmatprep.subr.bf16.mxu0 %v1530
  %1808 = vmatpush1.bf16.msra.mxu0 %v1529
  %1809 = vmatprep.subr.bf16.mxu0 %v1538
  %1810 = vmatpush1.bf16.msra.mxu0 %v1537
  %1811 = vmatprep.subr.bf16.mxu0 %v1546
  %1812 = vmatpush1.bf16.msra.mxu0 %v1545
  %1813 = vmatprep.subr.bf16.mxu0 %v1554
  %1814 = vmatpush1.bf16.msra.mxu0 %v1553
  %1815 = vmatprep.subr.bf16.mxu0 %v1562
  %1816 = vmatpush1.bf16.msra.mxu0 %v1561
  %1817 = vmatprep.subr.bf16.mxu0 %v1570
  %1818 = vmatpush1.bf16.msra.mxu0 %v1569
  %1819 = vmatprep.mubr.bf16.mxu0 %v1060
  %1820 = vmatmul.mubr.bf16.gmra.mrb[0].mxu0 %v1060
  %v1821 = vpop.f32.mrb[0].mxu0
  %v1822 = vadd.f32 0.0, %v1821
  %v1823 = vpop.f32.mrb[0].mxu0
  %v1824 = vadd.f32 0.0, %v1823
  %v1825 = vpop.f32.mrb[0].mxu0
  %v1826 = vadd.f32 0.0, %v1825
  %v1827 = vpop.f32.mrb[0].mxu0
  %v1828 = vadd.f32 0.0, %v1827
  %1829 = vdwg.mxu0
  %1830 = vmatprep.subr.bf16.mxu0 %v1452
  %1831 = vmatpush1.bf16.msra.mxu0 %v1451
  %1832 = vmatprep.subr.bf16.mxu0 %v1460
  %1833 = vmatpush1.bf16.msra.mxu0 %v1459
  %1834 = vmatprep.subr.bf16.mxu0 %v1468
  %1835 = vmatpush1.bf16.msra.mxu0 %v1467
  %1836 = vmatprep.subr.bf16.mxu0 %v1476
  %1837 = vmatpush1.bf16.msra.mxu0 %v1475
  %1838 = vmatprep.subr.bf16.mxu0 %v1484
  %1839 = vmatpush1.bf16.msra.mxu0 %v1483
  %1840 = vmatprep.subr.bf16.mxu0 %v1492
  %1841 = vmatpush1.bf16.msra.mxu0 %v1491
  %1842 = vmatprep.subr.bf16.mxu0 %v1500
  %1843 = vmatpush1.bf16.msra.mxu0 %v1499
  %1844 = vmatprep.subr.bf16.mxu0 %v1508
  %1845 = vmatpush1.bf16.msra.mxu0 %v1507
  %1846 = vmatprep.subr.bf16.mxu0 %v1516
  %1847 = vmatpush1.bf16.msra.mxu0 %v1515
  %1848 = vmatprep.subr.bf16.mxu0 %v1524
  %1849 = vmatpush1.bf16.msra.mxu0 %v1523
  %1850 = vmatprep.subr.bf16.mxu0 %v1532
  %1851 = vmatpush1.bf16.msra.mxu0 %v1531
  %1852 = vmatprep.subr.bf16.mxu0 %v1540
  %1853 = vmatpush1.bf16.msra.mxu0 %v1539
  %1854 = vmatprep.subr.bf16.mxu0 %v1548
  %1855 = vmatpush1.bf16.msra.mxu0 %v1547
  %1856 = vmatprep.subr.bf16.mxu0 %v1556
  %1857 = vmatpush1.bf16.msra.mxu0 %v1555
  %1858 = vmatprep.subr.bf16.mxu0 %v1564
  %1859 = vmatpush1.bf16.msra.mxu0 %v1563
  %1860 = vmatprep.subr.bf16.mxu0 %v1572
  %1861 = vmatpush1.bf16.msra.mxu0 %v1571
  %1862 = vmatprep.mubr.bf16.mxu0 %v1060
  %1863 = vmatmul.mubr.bf16.gmra.mrb[0].mxu0 %v1060
  %v1864 = vpop.f32.mrb[0].mxu0
  %v1865 = vadd.f32 0.0, %v1864
  %v1866 = vpop.f32.mrb[0].mxu0
  %v1867 = vadd.f32 0.0, %v1866
  %v1868 = vpop.f32.mrb[0].mxu0
  %v1869 = vadd.f32 0.0, %v1868
  %v1870 = vpop.f32.mrb[0].mxu0
  %v1871 = vadd.f32 0.0, %v1870
  %1872 = vdwg.mxu0
  %s1873 = smul.u32 0, 8
  %s1874 = smul.addr %s1873, 8
  %s1875 = scalar_lea.vmem [#allocation2], %s1874
  %v1876 = vld [vmem:[%s1875] sm:$0xff]
  %v1877 = vld [vmem:[%s1875 + $0x8] sm:$0xff]
  %v1878 = vld [vmem:[%s1875 + $0x10] sm:$0xff]
  %v1879 = vld [vmem:[%s1875 + $0x18] sm:$0xff]
  %v1880 = vunpack.c.l.bf16 %v1876
  %v1881 = vunpack.c.l.bf16 %v1877
  %v1882 = vunpack.c.l.bf16 %v1878
  %v1883 = vunpack.c.l.bf16 %v1879
  %v1884 = vunpack.c.h.bf16 %v1876
  %v1885 = vunpack.c.h.bf16 %v1877
  %v1886 = vunpack.c.h.bf16 %v1878
  %v1887 = vunpack.c.h.bf16 %v1879
  %v1888 = vadd.f32 %v1736, %v1880
  %v1889 = vadd.f32 %v1738, %v1881
  %v1890 = vadd.f32 %v1779, %v1882
  %v1891 = vadd.f32 %v1781, %v1883
  %v1892 = vadd.f32 %v1740, %v1884
  %v1893 = vadd.f32 %v1742, %v1885
  %v1894 = vadd.f32 %v1783, %v1886
  %v1895 = vadd.f32 %v1785, %v1887
  %s1896 = smul.u32 7, 8
  %s1897 = smul.addr %s1896, 8
  %s1898 = scalar_lea.vmem [#allocation2], %s1897
  %v1899 = vld [vmem:[%s1898 + $0x20] sm:$0xff]
  %v1900 = vld [vmem:[%s1898 + $0x28] sm:$0xff]
  %v1901 = vld [vmem:[%s1898 + $0x30] sm:$0xff]
  %v1902 = vld [vmem:[%s1898 + $0x38] sm:$0xff]
  %v1903 = vunpack.c.l.bf16 %v1899
  %v1904 = vunpack.c.l.bf16 %v1900
  %v1905 = vunpack.c.l.bf16 %v1901
  %v1906 = vunpack.c.l.bf16 %v1902
  %v1907 = vunpack.c.h.bf16 %v1899
  %v1908 = vunpack.c.h.bf16 %v1900
  %v1909 = vunpack.c.h.bf16 %v1901
  %v1910 = vunpack.c.h.bf16 %v1902
  %v1911 = vadd.f32 %v1822, %v1903
  %v1912 = vadd.f32 %v1824, %v1904
  %v1913 = vadd.f32 %v1865, %v1905
  %v1914 = vadd.f32 %v1867, %v1906
  %v1915 = vadd.f32 %v1826, %v1907
  %v1916 = vadd.f32 %v1828, %v1908
  %v1917 = vadd.f32 %v1869, %v1909
  %v1918 = vadd.f32 %v1871, %v1910
  %v1919 = vmul.f32 %v1888, 0.5
  %v1920 = vmul.f32 %v1892, 0.5
  %v1921 = vtanh.pop %v1919
  %v1922 = vtanh.pop %v1920
  %v1923 = vmul.f32 %v1921, 0.5
  %v1924 = vmul.f32 %v1922, 0.5
  %v1925 = vadd.f32 %v1923, 0.5
  %v1926 = vadd.f32 %v1924, 0.5
  %v1927 = vmul.f32 %v1889, 0.5
  %v1928 = vmul.f32 %v1893, 0.5
  %v1929 = vtanh.pop %v1927
  %v1930 = vtanh.pop %v1928
  %v1931 = vmul.f32 %v1929, 0.5
  %v1932 = vmul.f32 %v1930, 0.5
  %v1933 = vadd.f32 %v1931, 0.5
  %v1934 = vadd.f32 %v1932, 0.5
  %v1935 = vtanh.pop %v1890
  %v1936 = vtanh.pop %v1894
  %v1937 = vmul.f32 %v1891, 0.5
  %v1938 = vmul.f32 %v1895, 0.5
  %v1939 = vtanh.pop %v1937
  %v1940 = vtanh.pop %v1938
  %v1941 = vmul.f32 %v1939, 0.5
  %v1942 = vmul.f32 %v1940, 0.5
  %v1943 = vadd.f32 %v1941, 0.5
  %v1944 = vadd.f32 %v1942, 0.5
  %v1945 = vmul.f32 %v1933, 0.0
  %v1946 = vmul.f32 %v1934, 0.0
  %v1947 = vmul.f32 %v1925, %v1935
  %v1948 = vmul.f32 %v1926, %v1936
  %v1949 = vadd.f32 %v1945, %v1947
  %v1950 = vadd.f32 %v1946, %v1948
  %v1951 = vtanh.pop %v1949
  %v1952 = vtanh.pop %v1950
  %v1953 = vmul.f32 %v1943, %v1951
  %v1954 = vmul.f32 %v1944, %v1952
  %v1955 = vmul.f32 %v1911, 0.5
  %v1956 = vmul.f32 %v1915, 0.5
  %v1957 = vtanh.pop %v1955
  %v1958 = vtanh.pop %v1956
  %v1959 = vmul.f32 %v1957, 0.5
  %v1960 = vmul.f32 %v1958, 0.5
  %v1961 = vadd.f32 %v1959, 0.5
  %v1962 = vadd.f32 %v1960, 0.5
  %v1963 = vmul.f32 %v1912, 0.5
  %v1964 = vmul.f32 %v1916, 0.5
  %v1965 = vtanh.pop %v1963
  %v1966 = vtanh.pop %v1964
  %v1967 = vmul.f32 %v1965, 0.5
  %v1968 = vmul.f32 %v1966, 0.5
  %v1969 = vadd.f32 %v1967, 0.5
  %v1970 = vadd.f32 %v1968, 0.5
  %v1971 = vtanh.pop %v1913
  %v1972 = vtanh.pop %v1917
  %v1973 = vmul.f32 %v1914, 0.5
  %v1974 = vmul.f32 %v1918, 0.5
  %v1975 = vtanh.pop %v1973
  %v1976 = vtanh.pop %v1974
  %v1977 = vmul.f32 %v1975, 0.5
  %v1978 = vmul.f32 %v1976, 0.5
  %v1979 = vadd.f32 %v1977, 0.5
  %v1980 = vadd.f32 %v1978, 0.5
  %v1981 = vmul.f32 %v1969, 0.0
  %v1982 = vmul.f32 %v1970, 0.0
  %v1983 = vmul.f32 %v1961, %v1971
  %v1984 = vmul.f32 %v1962, %v1972
  %v1985 = vadd.f32 %v1981, %v1983
  %v1986 = vadd.f32 %v1982, %v1984
  %v1987 = vtanh.pop %v1985
  %v1988 = vtanh.pop %v1986
  %v1989 = vmul.f32 %v1979, %v1987
  %v1990 = vmul.f32 %v1980, %v1988
  %v1991 = vld [vmem:[#allocation3] sm:$0xff]
  %v1992 = vld [vmem:[#allocation3 + $0x8] sm:$0xff]
  %s1993 = scalar_lea.vmem [#allocation3], 112
  %v1994 = vld [vmem:[%s1993] sm:$0xff]
  %v1995 = vld [vmem:[%s1993 + $0x8] sm:$0xff]
  %v1996 = vmul.f32 %v1953, %v1991
  %v1997 = vmul.f32 %v1954, %v1992
  %s1998 = smul.u32 0, 2
  %s1999 = smul.addr %s1998, 8
  %s2000 = scalar_lea.vmem %s5, %s1999
  %2001 = vst [vmem:[%s2000] sm:$0xff] %v1996
  %2002 = vst [vmem:[%s2000 + $0x10] sm:$0xff] %v1997
  %v2003 = vmul.f32 %v1989, %v1994
  %v2004 = vmul.f32 %v1990, %v1995
  %s2005 = smul.u32 14, 2
  %s2006 = smul.addr %s2005, 8
  %s2007 = scalar_lea.vmem %s5, %s2006
  %2008 = vst [vmem:[%s2007 + $0x8] sm:$0xff] %v2003
  %2009 = vst [vmem:[%s2007 + $0x18] sm:$0xff] %v2004
  %vm2010 = vcmp.gt.f32.partialorder %v1994, 0.0
  %vm2011 = vcmp.gt.f32.partialorder %v1995, 0.0
  %v2012 = vsel %vm2010, %v1989, 0.0
  %v2013 = vsel %vm2011, %v1990, 0.0
  %v2014 = vsel %vm2010, %v1985, 0.0
  %v2015 = vsel %vm2011, %v1986, 0.0
  %v2016 = vpack.c.bf16 %v1954, %v1953
  %v2017 = vpack.c.bf16 %v2013, %v2012
  %2018 = vmatprep.subr.bf16.mxu0 %v1446
  %2019 = vmatpush1.bf16.msra.mxu0 %v1445
  %2020 = vmatprep.subr.bf16.mxu0 %v1454
  %2021 = vmatpush1.bf16.msra.mxu0 %v1453
  %2022 = vmatprep.subr.bf16.mxu0 %v1462
  %2023 = vmatpush1.bf16.msra.mxu0 %v1461
  %2024 = vmatprep.subr.bf16.mxu0 %v1470
  %2025 = vmatpush1.bf16.msra.mxu0 %v1469
  %2026 = vmatprep.subr.bf16.mxu0 %v1478
  %2027 = vmatpush1.bf16.msra.mxu0 %v1477
  %2028 = vmatprep.subr.bf16.mxu0 %v1486
  %2029 = vmatpush1.bf16.msra.mxu0 %v1485
  %2030 = vmatprep.subr.bf16.mxu0 %v1494
  %2031 = vmatpush1.bf16.msra.mxu0 %v1493
  %2032 = vmatprep.subr.bf16.mxu0 %v1502
  %2033 = vmatpush1.bf16.msra.mxu0 %v1501
  %2034 = vmatprep.subr.bf16.mxu0 %v1510
  %2035 = vmatpush1.bf16.msra.mxu0 %v1509
  %2036 = vmatprep.subr.bf16.mxu0 %v1518
  %2037 = vmatpush1.bf16.msra.mxu0 %v1517
  %2038 = vmatprep.subr.bf16.mxu0 %v1526
  %2039 = vmatpush1.bf16.msra.mxu0 %v1525
  %2040 = vmatprep.subr.bf16.mxu0 %v1534
  %2041 = vmatpush1.bf16.msra.mxu0 %v1533
  %2042 = vmatprep.subr.bf16.mxu0 %v1542
  %2043 = vmatpush1.bf16.msra.mxu0 %v1541
  %2044 = vmatprep.subr.bf16.mxu0 %v1550
  %2045 = vmatpush1.bf16.msra.mxu0 %v1549
  %2046 = vmatprep.subr.bf16.mxu0 %v1558
  %2047 = vmatpush1.bf16.msra.mxu0 %v1557
  %2048 = vmatprep.subr.bf16.mxu0 %v1566
  %2049 = vmatpush1.bf16.msra.mxu0 %v1565
  %2050 = vmatprep.mubr.bf16.mxu0 %v2017
  %2051 = vmatmul.mubr.bf16.gmra.mrb[0].mxu0 %v2016
  %v2052 = vpop.f32.mrb[0].mxu0
  %v2053 = vadd.f32 0.0, %v2052
  %v2054 = vpop.f32.mrb[0].mxu0
  %v2055 = vadd.f32 0.0, %v2054
  %v2056 = vpop.f32.mrb[0].mxu0
  %v2057 = vadd.f32 0.0, %v2056
  %v2058 = vpop.f32.mrb[0].mxu0
  %v2059 = vadd.f32 0.0, %v2058
  %2060 = vdwg.mxu0
  %2061 = vmatprep.subr.bf16.mxu0 %v1448
  %2062 = vmatpush1.bf16.msra.mxu0 %v1447
  %2063 = vmatprep.subr.bf16.mxu0 %v1456
  %2064 = vmatpush1.bf16.msra.mxu0 %v1455
  %2065 = vmatprep.subr.bf16.mxu0 %v1464
  %2066 = vmatpush1.bf16.msra.mxu0 %v1463
  %2067 = vmatprep.subr.bf16.mxu0 %v1472
  %2068 = vmatpush1.bf16.msra.mxu0 %v1471
  %2069 = vmatprep.subr.bf16.mxu0 %v1480
  %2070 = vmatpush1.bf16.msra.mxu0 %v1479
  %2071 = vmatprep.subr.bf16.mxu0 %v1488
  %2072 = vmatpush1.bf16.msra.mxu0 %v1487
  %2073 = vmatprep.subr.bf16.mxu0 %v1496
  %2074 = vmatpush1.bf16.msra.mxu0 %v1495
  %2075 = vmatprep.subr.bf16.mxu0 %v1504
  %2076 = vmatpush1.bf16.msra.mxu0 %v1503
  %2077 = vmatprep.subr.bf16.mxu0 %v1512
  %2078 = vmatpush1.bf16.msra.mxu0 %v1511
  %2079 = vmatprep.subr.bf16.mxu0 %v1520
  %2080 = vmatpush1.bf16.msra.mxu0 %v1519
  %2081 = vmatprep.subr.bf16.mxu0 %v1528
  %2082 = vmatpush1.bf16.msra.mxu0 %v1527
  %2083 = vmatprep.subr.bf16.mxu0 %v1536
  %2084 = vmatpush1.bf16.msra.mxu0 %v1535
  %2085 = vmatprep.subr.bf16.mxu0 %v1544
  %2086 = vmatpush1.bf16.msra.mxu0 %v1543
  %2087 = vmatprep.subr.bf16.mxu0 %v1552
  %2088 = vmatpush1.bf16.msra.mxu0 %v1551
  %2089 = vmatprep.subr.bf16.mxu0 %v1560
  %2090 = vmatpush1.bf16.msra.mxu0 %v1559
  %2091 = vmatprep.subr.bf16.mxu0 %v1568
  %2092 = vmatpush1.bf16.msra.mxu0 %v1567
  %2093 = vmatprep.mubr.bf16.mxu0 %v2017
  %2094 = vmatmul.mubr.bf16.gmra.mrb[0].mxu0 %v2016
  %v2095 = vpop.f32.mrb[0].mxu0
  %v2096 = vadd.f32 0.0, %v2095
  %v2097 = vpop.f32.mrb[0].mxu0
  %v2098 = vadd.f32 0.0, %v2097
  %v2099 = vpop.f32.mrb[0].mxu0
  %v2100 = vadd.f32 0.0, %v2099
  %v2101 = vpop.f32.mrb[0].mxu0
  %v2102 = vadd.f32 0.0, %v2101
  %2103 = vdwg.mxu0
  %2104 = vmatprep.subr.bf16.mxu0 %v1450
  %2105 = vmatpush1.bf16.msra.mxu0 %v1449
  %2106 = vmatprep.subr.bf16.mxu0 %v1458
  %2107 = vmatpush1.bf16.msra.mxu0 %v1457
  %2108 = vmatprep.subr.bf16.mxu0 %v1466
  %2109 = vmatpush1.bf16.msra.mxu0 %v1465
  %2110 = vmatprep.subr.bf16.mxu0 %v1474
  %2111 = vmatpush1.bf16.msra.mxu0 %v1473
  %2112 = vmatprep.subr.bf16.mxu0 %v1482
  %2113 = vmatpush1.bf16.msra.mxu0 %v1481
  %2114 = vmatprep.subr.bf16.mxu0 %v1490
  %2115 = vmatpush1.bf16.msra.mxu0 %v1489
  %2116 = vmatprep.subr.bf16.mxu0 %v1498
  %2117 = vmatpush1.bf16.msra.mxu0 %v1497
  %2118 = vmatprep.subr.bf16.mxu0 %v1506
  %2119 = vmatpush1.bf16.msra.mxu0 %v1505
  %2120 = vmatprep.subr.bf16.mxu0 %v1514
  %2121 = vmatpush1.bf16.msra.mxu0 %v1513
  %2122 = vmatprep.subr.bf16.mxu0 %v1522
  %2123 = vmatpush1.bf16.msra.mxu0 %v1521
  %2124 = vmatprep.subr.bf16.mxu0 %v1530
  %2125 = vmatpush1.bf16.msra.mxu0 %v1529
  %2126 = vmatprep.subr.bf16.mxu0 %v1538
  %2127 = vmatpush1.bf16.msra.mxu0 %v1537
  %2128 = vmatprep.subr.bf16.mxu0 %v1546
  %2129 = vmatpush1.bf16.msra.mxu0 %v1545
  %2130 = vmatprep.subr.bf16.mxu0 %v1554
  %2131 = vmatpush1.bf16.msra.mxu0 %v1553
  %2132 = vmatprep.subr.bf16.mxu0 %v1562
  %2133 = vmatpush1.bf16.msra.mxu0 %v1561
  %2134 = vmatprep.subr.bf16.mxu0 %v1570
  %2135 = vmatpush1.bf16.msra.mxu0 %v1569
  %2136 = vmatprep.mubr.bf16.mxu0 %v2017
  %2137 = vmatmul.mubr.bf16.gmra.mrb[0].mxu0 %v2016
  %v2138 = vpop.f32.mrb[0].mxu0
  %v2139 = vadd.f32 0.0, %v2138
  %v2140 = vpop.f32.mrb[0].mxu0
  %v2141 = vadd.f32 0.0, %v2140
  %v2142 = vpop.f32.mrb[0].mxu0
  %v2143 = vadd.f32 0.0, %v2142
  %v2144 = vpop.f32.mrb[0].mxu0
  %v2145 = vadd.f32 0.0, %v2144
  %2146 = vdwg.mxu0
  %2147 = vmatprep.subr.bf16.mxu0 %v1452
  %2148 = vmatpush1.bf16.msra.mxu0 %v1451
  %2149 = vmatprep.subr.bf16.mxu0 %v1460
  %2150 = vmatpush1.bf16.msra.mxu0 %v1459
  %2151 = vmatprep.subr.bf16.mxu0 %v1468
  %2152 = vmatpush1.bf16.msra.mxu0 %v1467
  %2153 = vmatprep.subr.bf16.mxu0 %v1476
  %2154 = vmatpush1.bf16.msra.mxu0 %v1475
  %2155 = vmatprep.subr.bf16.mxu0 %v1484
  %2156 = vmatpush1.bf16.msra.mxu0 %v1483
  %2157 = vmatprep.subr.bf16.mxu0 %v1492
  %2158 = vmatpush1.bf16.msra.mxu0 %v1491
  %2159 = vmatprep.subr.bf16.mxu0 %v1500
  %2160 = vmatpush1.bf16.msra.mxu0 %v1499
  %2161 = vmatprep.subr.bf16.mxu0 %v1508
  %2162 = vmatpush1.bf16.msra.mxu0 %v1507
  %2163 = vmatprep.subr.bf16.mxu0 %v1516
  %2164 = vmatpush1.bf16.msra.mxu0 %v1515
  %2165 = vmatprep.subr.bf16.mxu0 %v1524
  %2166 = vmatpush1.bf16.msra.mxu0 %v1523
  %2167 = vmatprep.subr.bf16.mxu0 %v1532
  %2168 = vmatpush1.bf16.msra.mxu0 %v1531
  %2169 = vmatprep.subr.bf16.mxu0 %v1540
  %2170 = vmatpush1.bf16.msra.mxu0 %v1539
  %2171 = vmatprep.subr.bf16.mxu0 %v1548
  %2172 = vmatpush1.bf16.msra.mxu0 %v1547
  %2173 = vmatprep.subr.bf16.mxu0 %v1556
  %2174 = vmatpush1.bf16.msra.mxu0 %v1555
  %2175 = vmatprep.subr.bf16.mxu0 %v1564
  %2176 = vmatpush1.bf16.msra.mxu0 %v1563
  %2177 = vmatprep.subr.bf16.mxu0 %v1572
  %2178 = vmatpush1.bf16.msra.mxu0 %v1571
  %2179 = vmatprep.mubr.bf16.mxu0 %v2017
  %2180 = vmatmul.mubr.bf16.gmra.mrb[0].mxu0 %v2016
  %v2181 = vpop.f32.mrb[0].mxu0
  %v2182 = vadd.f32 0.0, %v2181
  %v2183 = vpop.f32.mrb[0].mxu0
  %v2184 = vadd.f32 0.0, %v2183
  %v2185 = vpop.f32.mrb[0].mxu0
  %v2186 = vadd.f32 0.0, %v2185
  %v2187 = vpop.f32.mrb[0].mxu0
  %v2188 = vadd.f32 0.0, %v2187
  %2189 = vdwg.mxu0
  %s2190 = smul.u32 1, 8
  %s2191 = smul.addr %s2190, 8
  %s2192 = scalar_lea.vmem [#allocation2], %s2191
  %v2193 = vld [vmem:[%s2192] sm:$0xff]
  %v2194 = vld [vmem:[%s2192 + $0x8] sm:$0xff]
  %v2195 = vld [vmem:[%s2192 + $0x10] sm:$0xff]
  %v2196 = vld [vmem:[%s2192 + $0x18] sm:$0xff]
  %v2197 = vunpack.c.l.bf16 %v2193
  %v2198 = vunpack.c.l.bf16 %v2194
  %v2199 = vunpack.c.l.bf16 %v2195
  %v2200 = vunpack.c.l.bf16 %v2196
  %v2201 = vunpack.c.h.bf16 %v2193
  %v2202 = vunpack.c.h.bf16 %v2194
  %v2203 = vunpack.c.h.bf16 %v2195
  %v2204 = vunpack.c.h.bf16 %v2196
  %v2205 = vadd.f32 %v2053, %v2197
  %v2206 = vadd.f32 %v2055, %v2198
  %v2207 = vadd.f32 %v2096, %v2199
  %v2208 = vadd.f32 %v2098, %v2200
  %v2209 = vadd.f32 %v2057, %v2201
  %v2210 = vadd.f32 %v2059, %v2202
  %v2211 = vadd.f32 %v2100, %v2203
  %v2212 = vadd.f32 %v2102, %v2204
  %s2213 = smul.u32 6, 8
  %s2214 = smul.addr %s2213, 8
  %s2215 = scalar_lea.vmem [#allocation2], %s2214
  %v2216 = vld [vmem:[%s2215 + $0x20] sm:$0xff]
  %v2217 = vld [vmem:[%s2215 + $0x28] sm:$0xff]
  %v2218 = vld [vmem:[%s2215 + $0x30] sm:$0xff]
  %v2219 = vld [vmem:[%s2215 + $0x38] sm:$0xff]
  %v2220 = vunpack.c.l.bf16 %v2216
  %v2221 = vunpack.c.l.bf16 %v2217
  %v2222 = vunpack.c.l.bf16 %v2218
  %v2223 = vunpack.c.l.bf16 %v2219
  %v2224 = vunpack.c.h.bf16 %v2216
  %v2225 = vunpack.c.h.bf16 %v2217
  %v2226 = vunpack.c.h.bf16 %v2218
  %v2227 = vunpack.c.h.bf16 %v2219
  %v2228 = vadd.f32 %v2139, %v2220
  %v2229 = vadd.f32 %v2141, %v2221
  %v2230 = vadd.f32 %v2182, %v2222
  %v2231 = vadd.f32 %v2184, %v2223
  %v2232 = vadd.f32 %v2143, %v2224
  %v2233 = vadd.f32 %v2145, %v2225
  %v2234 = vadd.f32 %v2186, %v2226
  %v2235 = vadd.f32 %v2188, %v2227
  %v2236 = vmul.f32 %v2205, 0.5
  %v2237 = vmul.f32 %v2209, 0.5
  %v2238 = vtanh.pop %v2236
  %v2239 = vtanh.pop %v2237
  %v2240 = vmul.f32 %v2238, 0.5
  %v2241 = vmul.f32 %v2239, 0.5
  %v2242 = vadd.f32 %v2240, 0.5
  %v2243 = vadd.f32 %v2241, 0.5
  %v2244 = vmul.f32 %v2206, 0.5
  %v2245 = vmul.f32 %v2210, 0.5
  %v2246 = vtanh.pop %v2244
  %v2247 = vtanh.pop %v2245
  %v2248 = vmul.f32 %v2246, 0.5
  %v2249 = vmul.f32 %v2247, 0.5
  %v2250 = vadd.f32 %v2248, 0.5
  %v2251 = vadd.f32 %v2249, 0.5
  %v2252 = vtanh.pop %v2207
  %v2253 = vtanh.pop %v2211
  %v2254 = vmul.f32 %v2208, 0.5
  %v2255 = vmul.f32 %v2212, 0.5
  %v2256 = vtanh.pop %v2254
  %v2257 = vtanh.pop %v2255
  %v2258 = vmul.f32 %v2256, 0.5
  %v2259 = vmul.f32 %v2257, 0.5
  %v2260 = vadd.f32 %v2258, 0.5
  %v2261 = vadd.f32 %v2259, 0.5
  %v2262 = vmul.f32 %v2250, %v1949
  %v2263 = vmul.f32 %v2251, %v1950
  %v2264 = vmul.f32 %v2242, %v2252
  %v2265 = vmul.f32 %v2243, %v2253
  %v2266 = vadd.f32 %v2262, %v2264
  %v2267 = vadd.f32 %v2263, %v2265
  %v2268 = vtanh.pop %v2266
  %v2269 = vtanh.pop %v2267
  %v2270 = vmul.f32 %v2260, %v2268
  %v2271 = vmul.f32 %v2261, %v2269
  %v2272 = vmul.f32 %v2228, 0.5
  %v2273 = vmul.f32 %v2232, 0.5
  %v2274 = vtanh.pop %v2272
  %v2275 = vtanh.pop %v2273
  %v2276 = vmul.f32 %v2274, 0.5
  %v2277 = vmul.f32 %v2275, 0.5
  %v2278 = vadd.f32 %v2276, 0.5
  %v2279 = vadd.f32 %v2277, 0.5
  %v2280 = vmul.f32 %v2229, 0.5
  %v2281 = vmul.f32 %v2233, 0.5
  %v2282 = vtanh.pop %v2280
  %v2283 = vtanh.pop %v2281
  %v2284 = vmul.f32 %v2282, 0.5
  %v2285 = vmul.f32 %v2283, 0.5
  %v2286 = vadd.f32 %v2284, 0.5
  %v2287 = vadd.f32 %v2285, 0.5
  %v2288 = vtanh.pop %v2230
  %v2289 = vtanh.pop %v2234
  %v2290 = vmul.f32 %v2231, 0.5
  %v2291 = vmul.f32 %v2235, 0.5
  %v2292 = vtanh.pop %v2290
  %v2293 = vtanh.pop %v2291
  %v2294 = vmul.f32 %v2292, 0.5
  %v2295 = vmul.f32 %v2293, 0.5
  %v2296 = vadd.f32 %v2294, 0.5
  %v2297 = vadd.f32 %v2295, 0.5
  %v2298 = vmul.f32 %v2286, %v2014
  %v2299 = vmul.f32 %v2287, %v2015
  %v2300 = vmul.f32 %v2278, %v2288
  %v2301 = vmul.f32 %v2279, %v2289
  %v2302 = vadd.f32 %v2298, %v2300
  %v2303 = vadd.f32 %v2299, %v2301
  %v2304 = vtanh.pop %v2302
  %v2305 = vtanh.pop %v2303
  %v2306 = vmul.f32 %v2296, %v2304
  %v2307 = vmul.f32 %v2297, %v2305
  %s2308 = scalar_lea.vmem [#allocation3], 16
  %v2309 = vld [vmem:[%s2308] sm:$0xff]
  %v2310 = vld [vmem:[%s2308 + $0x8] sm:$0xff]
  %s2311 = scalar_lea.vmem [#allocation3], 96
  %v2312 = vld [vmem:[%s2311] sm:$0xff]
  %v2313 = vld [vmem:[%s2311 + $0x8] sm:$0xff]
  %v2314 = vmul.f32 %v2270, %v2309
  %v2315 = vmul.f32 %v2271, %v2310
  %s2316 = smul.u32 2, 2
  %s2317 = smul.addr %s2316, 8
  %s2318 = scalar_lea.vmem %s5, %s2317
  %2319 = vst [vmem:[%s2318] sm:$0xff] %v2314
  %2320 = vst [vmem:[%s2318 + $0x10] sm:$0xff] %v2315
  %v2321 = vmul.f32 %v2306, %v2312
  %v2322 = vmul.f32 %v2307, %v2313
  %s2323 = smul.u32 12, 2
  %s2324 = smul.addr %s2323, 8
  %s2325 = scalar_lea.vmem %s5, %s2324
  %2326 = vst [vmem:[%s2325 + $0x8] sm:$0xff] %v2321
  %2327 = vst [vmem:[%s2325 + $0x18] sm:$0xff] %v2322
  %vm2328 = vcmp.gt.f32.partialorder %v2312, 0.0
  %vm2329 = vcmp.gt.f32.partialorder %v2313, 0.0
  %v2330 = vsel %vm2328, %v2306, %v2012
  %v2331 = vsel %vm2329, %v2307, %v2013
  %v2332 = vsel %vm2328, %v2302, %v2014
  %v2333 = vsel %vm2329, %v2303, %v2015
  %v2334 = vpack.c.bf16 %v2271, %v2270
  %v2335 = vpack.c.bf16 %v2331, %v2330
  %2336 = vmatprep.subr.bf16.mxu0 %v1446
  %2337 = vmatpush1.bf16.msra.mxu0 %v1445
  %2338 = vmatprep.subr.bf16.mxu0 %v1454
  %2339 = vmatpush1.bf16.msra.mxu0 %v1453
  %2340 = vmatprep.subr.bf16.mxu0 %v1462
  %2341 = vmatpush1.bf16.msra.mxu0 %v1461
  %2342 = vmatprep.subr.bf16.mxu0 %v1470
  %2343 = vmatpush1.bf16.msra.mxu0 %v1469
  %2344 = vmatprep.subr.bf16.mxu0 %v1478
  %2345 = vmatpush1.bf16.msra.mxu0 %v1477
  %2346 = vmatprep.subr.bf16.mxu0 %v1486
  %2347 = vmatpush1.bf16.msra.mxu0 %v1485
  %2348 = vmatprep.subr.bf16.mxu0 %v1494
  %2349 = vmatpush1.bf16.msra.mxu0 %v1493
  %2350 = vmatprep.subr.bf16.mxu0 %v1502
  %2351 = vmatpush1.bf16.msra.mxu0 %v1501
  %2352 = vmatprep.subr.bf16.mxu0 %v1510
  %2353 = vmatpush1.bf16.msra.mxu0 %v1509
  %2354 = vmatprep.subr.bf16.mxu0 %v1518
  %2355 = vmatpush1.bf16.msra.mxu0 %v1517
  %2356 = vmatprep.subr.bf16.mxu0 %v1526
  %2357 = vmatpush1.bf16.msra.mxu0 %v1525
  %2358 = vmatprep.subr.bf16.mxu0 %v1534
  %2359 = vmatpush1.bf16.msra.mxu0 %v1533
  %2360 = vmatprep.subr.bf16.mxu0 %v1542
  %2361 = vmatpush1.bf16.msra.mxu0 %v1541
  %2362 = vmatprep.subr.bf16.mxu0 %v1550
  %2363 = vmatpush1.bf16.msra.mxu0 %v1549
  %2364 = vmatprep.subr.bf16.mxu0 %v1558
  %2365 = vmatpush1.bf16.msra.mxu0 %v1557
  %2366 = vmatprep.subr.bf16.mxu0 %v1566
  %2367 = vmatpush1.bf16.msra.mxu0 %v1565
  %2368 = vmatprep.mubr.bf16.mxu0 %v2335
  %2369 = vmatmul.mubr.bf16.gmra.mrb[0].mxu0 %v2334
  %v2370 = vpop.f32.mrb[0].mxu0
  %v2371 = vadd.f32 0.0, %v2370
  %v2372 = vpop.f32.mrb[0].mxu0
  %v2373 = vadd.f32 0.0, %v2372
  %v2374 = vpop.f32.mrb[0].mxu0
  %v2375 = vadd.f32 0.0, %v2374
  %v2376 = vpop.f32.mrb[0].mxu0
  %v2377 = vadd.f32 0.0, %v2376
  %2378 = vdwg.mxu0
  %2379 = vmatprep.subr.bf16.mxu0 %v1448
  %2380 = vmatpush1.bf16.msra.mxu0 %v1447
  %2381 = vmatprep.subr.bf16.mxu0 %v1456
  %2382 = vmatpush1.bf16.msra.mxu0 %v1455
  %2383 = vmatprep.subr.bf16.mxu0 %v1464
  %2384 = vmatpush1.bf16.msra.mxu0 %v1463
  %2385 = vmatprep.subr.bf16.mxu0 %v1472
  %2386 = vmatpush1.bf16.msra.mxu0 %v1471
  %2387 = vmatprep.subr.bf16.mxu0 %v1480
  %2388 = vmatpush1.bf16.msra.mxu0 %v1479
  %2389 = vmatprep.subr.bf16.mxu0 %v1488
  %2390 = vmatpush1.bf16.msra.mxu0 %v1487
  %2391 = vmatprep.subr.bf16.mxu0 %v1496
  %2392 = vmatpush1.bf16.msra.mxu0 %v1495
  %2393 = vmatprep.subr.bf16.mxu0 %v1504
  %2394 = vmatpush1.bf16.msra.mxu0 %v1503
  %2395 = vmatprep.subr.bf16.mxu0 %v1512
  %2396 = vmatpush1.bf16.msra.mxu0 %v1511
  %2397 = vmatprep.subr.bf16.mxu0 %v1520
  %2398 = vmatpush1.bf16.msra.mxu0 %v1519
  %2399 = vmatprep.subr.bf16.mxu0 %v1528
  %2400 = vmatpush1.bf16.msra.mxu0 %v1527
  %2401 = vmatprep.subr.bf16.mxu0 %v1536
  %2402 = vmatpush1.bf16.msra.mxu0 %v1535
  %2403 = vmatprep.subr.bf16.mxu0 %v1544
  %2404 = vmatpush1.bf16.msra.mxu0 %v1543
  %2405 = vmatprep.subr.bf16.mxu0 %v1552
  %2406 = vmatpush1.bf16.msra.mxu0 %v1551
  %2407 = vmatprep.subr.bf16.mxu0 %v1560
  %2408 = vmatpush1.bf16.msra.mxu0 %v1559
  %2409 = vmatprep.subr.bf16.mxu0 %v1568
  %2410 = vmatpush1.bf16.msra.mxu0 %v1567
  %2411 = vmatprep.mubr.bf16.mxu0 %v2335
  %2412 = vmatmul.mubr.bf16.gmra.mrb[0].mxu0 %v2334
  %v2413 = vpop.f32.mrb[0].mxu0
  %v2414 = vadd.f32 0.0, %v2413
  %v2415 = vpop.f32.mrb[0].mxu0
  %v2416 = vadd.f32 0.0, %v2415
  %v2417 = vpop.f32.mrb[0].mxu0
  %v2418 = vadd.f32 0.0, %v2417
  %v2419 = vpop.f32.mrb[0].mxu0
  %v2420 = vadd.f32 0.0, %v2419
  %2421 = vdwg.mxu0
  %2422 = vmatprep.subr.bf16.mxu0 %v1450
  %2423 = vmatpush1.bf16.msra.mxu0 %v1449
  %2424 = vmatprep.subr.bf16.mxu0 %v1458
  %2425 = vmatpush1.bf16.msra.mxu0 %v1457
  %2426 = vmatprep.subr.bf16.mxu0 %v1466
  %2427 = vmatpush1.bf16.msra.mxu0 %v1465
  %2428 = vmatprep.subr.bf16.mxu0 %v1474
  %2429 = vmatpush1.bf16.msra.mxu0 %v1473
  %2430 = vmatprep.subr.bf16.mxu0 %v1482
  %2431 = vmatpush1.bf16.msra.mxu0 %v1481
  %2432 = vmatprep.subr.bf16.mxu0 %v1490
  %2433 = vmatpush1.bf16.msra.mxu0 %v1489
  %2434 = vmatprep.subr.bf16.mxu0 %v1498
  %2435 = vmatpush1.bf16.msra.mxu0 %v1497
  %2436 = vmatprep.subr.bf16.mxu0 %v1506
  %2437 = vmatpush1.bf16.msra.mxu0 %v1505
  %2438 = vmatprep.subr.bf16.mxu0 %v1514
  %2439 = vmatpush1.bf16.msra.mxu0 %v1513
  %2440 = vmatprep.subr.bf16.mxu0 %v1522
  %2441 = vmatpush1.bf16.msra.mxu0 %v1521
  %2442 = vmatprep.subr.bf16.mxu0 %v1530
  %2443 = vmatpush1.bf16.msra.mxu0 %v1529
  %2444 = vmatprep.subr.bf16.mxu0 %v1538
  %2445 = vmatpush1.bf16.msra.mxu0 %v1537
  %2446 = vmatprep.subr.bf16.mxu0 %v1546
  %2447 = vmatpush1.bf16.msra.mxu0 %v1545
  %2448 = vmatprep.subr.bf16.mxu0 %v1554
  %2449 = vmatpush1.bf16.msra.mxu0 %v1553
  %2450 = vmatprep.subr.bf16.mxu0 %v1562
  %2451 = vmatpush1.bf16.msra.mxu0 %v1561
  %2452 = vmatprep.subr.bf16.mxu0 %v1570
  %2453 = vmatpush1.bf16.msra.mxu0 %v1569
  %2454 = vmatprep.mubr.bf16.mxu0 %v2335
  %2455 = vmatmul.mubr.bf16.gmra.mrb[0].mxu0 %v2334
  %v2456 = vpop.f32.mrb[0].mxu0
  %v2457 = vadd.f32 0.0, %v2456
  %v2458 = vpop.f32.mrb[0].mxu0
  %v2459 = vadd.f32 0.0, %v2458
  %v2460 = vpop.f32.mrb[0].mxu0
  %v2461 = vadd.f32 0.0, %v2460
  %v2462 = vpop.f32.mrb[0].mxu0
  %v2463 = vadd.f32 0.0, %v2462
  %2464 = vdwg.mxu0
  %2465 = vmatprep.subr.bf16.mxu0 %v1452
  %2466 = vmatpush1.bf16.msra.mxu0 %v1451
  %2467 = vmatprep.subr.bf16.mxu0 %v1460
  %2468 = vmatpush1.bf16.msra.mxu0 %v1459
  %2469 = vmatprep.subr.bf16.mxu0 %v1468
  %2470 = vmatpush1.bf16.msra.mxu0 %v1467
  %2471 = vmatprep.subr.bf16.mxu0 %v1476
  %2472 = vmatpush1.bf16.msra.mxu0 %v1475
  %2473 = vmatprep.subr.bf16.mxu0 %v1484
  %2474 = vmatpush1.bf16.msra.mxu0 %v1483
  %2475 = vmatprep.subr.bf16.mxu0 %v1492
  %2476 = vmatpush1.bf16.msra.mxu0 %v1491
  %2477 = vmatprep.subr.bf16.mxu0 %v1500
  %2478 = vmatpush1.bf16.msra.mxu0 %v1499
  %2479 = vmatprep.subr.bf16.mxu0 %v1508
  %2480 = vmatpush1.bf16.msra.mxu0 %v1507
  %2481 = vmatprep.subr.bf16.mxu0 %v1516
  %2482 = vmatpush1.bf16.msra.mxu0 %v1515
  %2483 = vmatprep.subr.bf16.mxu0 %v1524
  %2484 = vmatpush1.bf16.msra.mxu0 %v1523
  %2485 = vmatprep.subr.bf16.mxu0 %v1532
  %2486 = vmatpush1.bf16.msra.mxu0 %v1531
  %2487 = vmatprep.subr.bf16.mxu0 %v1540
  %2488 = vmatpush1.bf16.msra.mxu0 %v1539
  %2489 = vmatprep.subr.bf16.mxu0 %v1548
  %2490 = vmatpush1.bf16.msra.mxu0 %v1547
  %2491 = vmatprep.subr.bf16.mxu0 %v1556
  %2492 = vmatpush1.bf16.msra.mxu0 %v1555
  %2493 = vmatprep.subr.bf16.mxu0 %v1564
  %2494 = vmatpush1.bf16.msra.mxu0 %v1563
  %2495 = vmatprep.subr.bf16.mxu0 %v1572
  %2496 = vmatpush1.bf16.msra.mxu0 %v1571
  %2497 = vmatprep.mubr.bf16.mxu0 %v2335
  %2498 = vmatmul.mubr.bf16.gmra.mrb[0].mxu0 %v2334
  %v2499 = vpop.f32.mrb[0].mxu0
  %v2500 = vadd.f32 0.0, %v2499
  %v2501 = vpop.f32.mrb[0].mxu0
  %v2502 = vadd.f32 0.0, %v2501
  %v2503 = vpop.f32.mrb[0].mxu0
  %v2504 = vadd.f32 0.0, %v2503
  %v2505 = vpop.f32.mrb[0].mxu0
  %v2506 = vadd.f32 0.0, %v2505
  %2507 = vdwg.mxu0
  %s2508 = smul.u32 2, 8
  %s2509 = smul.addr %s2508, 8
  %s2510 = scalar_lea.vmem [#allocation2], %s2509
  %v2511 = vld [vmem:[%s2510] sm:$0xff]
  %v2512 = vld [vmem:[%s2510 + $0x8] sm:$0xff]
  %v2513 = vld [vmem:[%s2510 + $0x10] sm:$0xff]
  %v2514 = vld [vmem:[%s2510 + $0x18] sm:$0xff]
  %v2515 = vunpack.c.l.bf16 %v2511
  %v2516 = vunpack.c.l.bf16 %v2512
  %v2517 = vunpack.c.l.bf16 %v2513
  %v2518 = vunpack.c.l.bf16 %v2514
  %v2519 = vunpack.c.h.bf16 %v2511
  %v2520 = vunpack.c.h.bf16 %v2512
  %v2521 = vunpack.c.h.bf16 %v2513
  %v2522 = vunpack.c.h.bf16 %v2514
  %v2523 = vadd.f32 %v2371, %v2515
  %v2524 = vadd.f32 %v2373, %v2516
  %v2525 = vadd.f32 %v2414, %v2517
  %v2526 = vadd.f32 %v2416, %v2518
  %v2527 = vadd.f32 %v2375, %v2519
  %v2528 = vadd.f32 %v2377, %v2520
  %v2529 = vadd.f32 %v2418, %v2521
  %v2530 = vadd.f32 %v2420, %v2522
  %s2531 = smul.u32 5, 8
  %s2532 = smul.addr %s2531, 8
  %s2533 = scalar_lea.vmem [#allocation2], %s2532
  %v2534 = vld [vmem:[%s2533 + $0x20] sm:$0xff]
  %v2535 = vld [vmem:[%s2533 + $0x28] sm:$0xff]
  %v2536 = vld [vmem:[%s2533 + $0x30] sm:$0xff]
  %v2537 = vld [vmem:[%s2533 + $0x38] sm:$0xff]
  %v2538 = vunpack.c.l.bf16 %v2534
  %v2539 = vunpack.c.l.bf16 %v2535
  %v2540 = vunpack.c.l.bf16 %v2536
  %v2541 = vunpack.c.l.bf16 %v2537
  %v2542 = vunpack.c.h.bf16 %v2534
  %v2543 = vunpack.c.h.bf16 %v2535
  %v2544 = vunpack.c.h.bf16 %v2536
  %v2545 = vunpack.c.h.bf16 %v2537
  %v2546 = vadd.f32 %v2457, %v2538
  %v2547 = vadd.f32 %v2459, %v2539
  %v2548 = vadd.f32 %v2500, %v2540
  %v2549 = vadd.f32 %v2502, %v2541
  %v2550 = vadd.f32 %v2461, %v2542
  %v2551 = vadd.f32 %v2463, %v2543
  %v2552 = vadd.f32 %v2504, %v2544
  %v2553 = vadd.f32 %v2506, %v2545
  %v2554 = vmul.f32 %v2523, 0.5
  %v2555 = vmul.f32 %v2527, 0.5
  %v2556 = vtanh.pop %v2554
  %v2557 = vtanh.pop %v2555
  %v2558 = vmul.f32 %v2556, 0.5
  %v2559 = vmul.f32 %v2557, 0.5
  %v2560 = vadd.f32 %v2558, 0.5
  %v2561 = vadd.f32 %v2559, 0.5
  %v2562 = vmul.f32 %v2524, 0.5
  %v2563 = vmul.f32 %v2528, 0.5
  %v2564 = vtanh.pop %v2562
  %v2565 = vtanh.pop %v2563
  %v2566 = vmul.f32 %v2564, 0.5
  %v2567 = vmul.f32 %v2565, 0.5
  %v2568 = vadd.f32 %v2566, 0.5
  %v2569 = vadd.f32 %v2567, 0.5
  %v2570 = vtanh.pop %v2525
  %v2571 = vtanh.pop %v2529
  %v2572 = vmul.f32 %v2526, 0.5
  %v2573 = vmul.f32 %v2530, 0.5
  %v2574 = vtanh.pop %v2572
  %v2575 = vtanh.pop %v2573
  %v2576 = vmul.f32 %v2574, 0.5
  %v2577 = vmul.f32 %v2575, 0.5
  %v2578 = vadd.f32 %v2576, 0.5
  %v2579 = vadd.f32 %v2577, 0.5
  %v2580 = vmul.f32 %v2568, %v2266
  %v2581 = vmul.f32 %v2569, %v2267
  %v2582 = vmul.f32 %v2560, %v2570
  %v2583 = vmul.f32 %v2561, %v2571
  %v2584 = vadd.f32 %v2580, %v2582
  %v2585 = vadd.f32 %v2581, %v2583
  %v2586 = vtanh.pop %v2584
  %v2587 = vtanh.pop %v2585
  %v2588 = vmul.f32 %v2578, %v2586
  %v2589 = vmul.f32 %v2579, %v2587
  %v2590 = vmul.f32 %v2546, 0.5
  %v2591 = vmul.f32 %v2550, 0.5
  %v2592 = vtanh.pop %v2590
  %v2593 = vtanh.pop %v2591
  %v2594 = vmul.f32 %v2592, 0.5
  %v2595 = vmul.f32 %v2593, 0.5
  %v2596 = vadd.f32 %v2594, 0.5
  %v2597 = vadd.f32 %v2595, 0.5
  %v2598 = vmul.f32 %v2547, 0.5
  %v2599 = vmul.f32 %v2551, 0.5
  %v2600 = vtanh.pop %v2598
  %v2601 = vtanh.pop %v2599
  %v2602 = vmul.f32 %v2600, 0.5
  %v2603 = vmul.f32 %v2601, 0.5
  %v2604 = vadd.f32 %v2602, 0.5
  %v2605 = vadd.f32 %v2603, 0.5
  %v2606 = vtanh.pop %v2548
  %v2607 = vtanh.pop %v2552
  %v2608 = vmul.f32 %v2549, 0.5
  %v2609 = vmul.f32 %v2553, 0.5
  %v2610 = vtanh.pop %v2608
  %v2611 = vtanh.pop %v2609
  %v2612 = vmul.f32 %v2610, 0.5
  %v2613 = vmul.f32 %v2611, 0.5
  %v2614 = vadd.f32 %v2612, 0.5
  %v2615 = vadd.f32 %v2613, 0.5
  %v2616 = vmul.f32 %v2604, %v2332
  %v2617 = vmul.f32 %v2605, %v2333
  %v2618 = vmul.f32 %v2596, %v2606
  %v2619 = vmul.f32 %v2597, %v2607
  %v2620 = vadd.f32 %v2616, %v2618
  %v2621 = vadd.f32 %v2617, %v2619
  %v2622 = vtanh.pop %v2620
  %v2623 = vtanh.pop %v2621
  %v2624 = vmul.f32 %v2614, %v2622
  %v2625 = vmul.f32 %v2615, %v2623
  %s2626 = scalar_lea.vmem [#allocation3], 32
  %v2627 = vld [vmem:[%s2626] sm:$0xff]
  %v2628 = vld [vmem:[%s2626 + $0x8] sm:$0xff]
  %s2629 = scalar_lea.vmem [#allocation3], 80
  %v2630 = vld [vmem:[%s2629] sm:$0xff]
  %v2631 = vld [vmem:[%s2629 + $0x8] sm:$0xff]
  %v2632 = vmul.f32 %v2588, %v2627
  %v2633 = vmul.f32 %v2589, %v2628
  %s2634 = smul.u32 4, 2
  %s2635 = smul.addr %s2634, 8
  %s2636 = scalar_lea.vmem %s5, %s2635
  %2637 = vst [vmem:[%s2636] sm:$0xff] %v2632
  %2638 = vst [vmem:[%s2636 + $0x10] sm:$0xff] %v2633
  %v2639 = vmul.f32 %v2624, %v2630
  %v2640 = vmul.f32 %v2625, %v2631
  %s2641 = smul.u32 10, 2
  %s2642 = smul.addr %s2641, 8
  %s2643 = scalar_lea.vmem %s5, %s2642
  %2644 = vst [vmem:[%s2643 + $0x8] sm:$0xff] %v2639
  %2645 = vst [vmem:[%s2643 + $0x18] sm:$0xff] %v2640
  %vm2646 = vcmp.gt.f32.partialorder %v2630, 0.0
  %vm2647 = vcmp.gt.f32.partialorder %v2631, 0.0
  %v2648 = vsel %vm2646, %v2624, %v2330
  %v2649 = vsel %vm2647, %v2625, %v2331
  %v2650 = vsel %vm2646, %v2620, %v2332
  %v2651 = vsel %vm2647, %v2621, %v2333
  %v2652 = vpack.c.bf16 %v2589, %v2588
  %v2653 = vpack.c.bf16 %v2649, %v2648
  %2654 = vmatprep.subr.bf16.mxu0 %v1446
  %2655 = vmatpush1.bf16.msra.mxu0 %v1445
  %2656 = vmatprep.subr.bf16.mxu0 %v1454
  %2657 = vmatpush1.bf16.msra.mxu0 %v1453
  %2658 = vmatprep.subr.bf16.mxu0 %v1462
  %2659 = vmatpush1.bf16.msra.mxu0 %v1461
  %2660 = vmatprep.subr.bf16.mxu0 %v1470
  %2661 = vmatpush1.bf16.msra.mxu0 %v1469
  %2662 = vmatprep.subr.bf16.mxu0 %v1478
  %2663 = vmatpush1.bf16.msra.mxu0 %v1477
  %2664 = vmatprep.subr.bf16.mxu0 %v1486
  %2665 = vmatpush1.bf16.msra.mxu0 %v1485
  %2666 = vmatprep.subr.bf16.mxu0 %v1494
  %2667 = vmatpush1.bf16.msra.mxu0 %v1493
  %2668 = vmatprep.subr.bf16.mxu0 %v1502
  %2669 = vmatpush1.bf16.msra.mxu0 %v1501
  %2670 = vmatprep.subr.bf16.mxu0 %v1510
  %2671 = vmatpush1.bf16.msra.mxu0 %v1509
  %2672 = vmatprep.subr.bf16.mxu0 %v1518
  %2673 = vmatpush1.bf16.msra.mxu0 %v1517
  %2674 = vmatprep.subr.bf16.mxu0 %v1526
  %2675 = vmatpush1.bf16.msra.mxu0 %v1525
  %2676 = vmatprep.subr.bf16.mxu0 %v1534
  %2677 = vmatpush1.bf16.msra.mxu0 %v1533
  %2678 = vmatprep.subr.bf16.mxu0 %v1542
  %2679 = vmatpush1.bf16.msra.mxu0 %v1541
  %2680 = vmatprep.subr.bf16.mxu0 %v1550
  %2681 = vmatpush1.bf16.msra.mxu0 %v1549
  %2682 = vmatprep.subr.bf16.mxu0 %v1558
  %2683 = vmatpush1.bf16.msra.mxu0 %v1557
  %2684 = vmatprep.subr.bf16.mxu0 %v1566
  %2685 = vmatpush1.bf16.msra.mxu0 %v1565
  %2686 = vmatprep.mubr.bf16.mxu0 %v2653
  %2687 = vmatmul.mubr.bf16.gmra.mrb[0].mxu0 %v2652
  %v2688 = vpop.f32.mrb[0].mxu0
  %v2689 = vadd.f32 0.0, %v2688
  %v2690 = vpop.f32.mrb[0].mxu0
  %v2691 = vadd.f32 0.0, %v2690
  %v2692 = vpop.f32.mrb[0].mxu0
  %v2693 = vadd.f32 0.0, %v2692
  %v2694 = vpop.f32.mrb[0].mxu0
  %v2695 = vadd.f32 0.0, %v2694
  %2696 = vdwg.mxu0
  %2697 = vmatprep.subr.bf16.mxu0 %v1448
  %2698 = vmatpush1.bf16.msra.mxu0 %v1447
  %2699 = vmatprep.subr.bf16.mxu0 %v1456
  %2700 = vmatpush1.bf16.msra.mxu0 %v1455
  %2701 = vmatprep.subr.bf16.mxu0 %v1464
  %2702 = vmatpush1.bf16.msra.mxu0 %v1463
  %2703 = vmatprep.subr.bf16.mxu0 %v1472
  %2704 = vmatpush1.bf16.msra.mxu0 %v1471
  %2705 = vmatprep.subr.bf16.mxu0 %v1480
  %2706 = vmatpush1.bf16.msra.mxu0 %v1479
  %2707 = vmatprep.subr.bf16.mxu0 %v1488
  %2708 = vmatpush1.bf16.msra.mxu0 %v1487
  %2709 = vmatprep.subr.bf16.mxu0 %v1496
  %2710 = vmatpush1.bf16.msra.mxu0 %v1495
  %2711 = vmatprep.subr.bf16.mxu0 %v1504
  %2712 = vmatpush1.bf16.msra.mxu0 %v1503
  %2713 = vmatprep.subr.bf16.mxu0 %v1512
  %2714 = vmatpush1.bf16.msra.mxu0 %v1511
  %2715 = vmatprep.subr.bf16.mxu0 %v1520
  %2716 = vmatpush1.bf16.msra.mxu0 %v1519
  %2717 = vmatprep.subr.bf16.mxu0 %v1528
  %2718 = vmatpush1.bf16.msra.mxu0 %v1527
  %2719 = vmatprep.subr.bf16.mxu0 %v1536
  %2720 = vmatpush1.bf16.msra.mxu0 %v1535
  %2721 = vmatprep.subr.bf16.mxu0 %v1544
  %2722 = vmatpush1.bf16.msra.mxu0 %v1543
  %2723 = vmatprep.subr.bf16.mxu0 %v1552
  %2724 = vmatpush1.bf16.msra.mxu0 %v1551
  %2725 = vmatprep.subr.bf16.mxu0 %v1560
  %2726 = vmatpush1.bf16.msra.mxu0 %v1559
  %2727 = vmatprep.subr.bf16.mxu0 %v1568
  %2728 = vmatpush1.bf16.msra.mxu0 %v1567
  %2729 = vmatprep.mubr.bf16.mxu0 %v2653
  %2730 = vmatmul.mubr.bf16.gmra.mrb[0].mxu0 %v2652
  %v2731 = vpop.f32.mrb[0].mxu0
  %v2732 = vadd.f32 0.0, %v2731
  %v2733 = vpop.f32.mrb[0].mxu0
  %v2734 = vadd.f32 0.0, %v2733
  %v2735 = vpop.f32.mrb[0].mxu0
  %v2736 = vadd.f32 0.0, %v2735
  %v2737 = vpop.f32.mrb[0].mxu0
  %v2738 = vadd.f32 0.0, %v2737
  %2739 = vdwg.mxu0
  %2740 = vmatprep.subr.bf16.mxu0 %v1450
  %2741 = vmatpush1.bf16.msra.mxu0 %v1449
  %2742 = vmatprep.subr.bf16.mxu0 %v1458
  %2743 = vmatpush1.bf16.msra.mxu0 %v1457
  %2744 = vmatprep.subr.bf16.mxu0 %v1466
  %2745 = vmatpush1.bf16.msra.mxu0 %v1465
  %2746 = vmatprep.subr.bf16.mxu0 %v1474
  %2747 = vmatpush1.bf16.msra.mxu0 %v1473
  %2748 = vmatprep.subr.bf16.mxu0 %v1482
  %2749 = vmatpush1.bf16.msra.mxu0 %v1481
  %2750 = vmatprep.subr.bf16.mxu0 %v1490
  %2751 = vmatpush1.bf16.msra.mxu0 %v1489
  %2752 = vmatprep.subr.bf16.mxu0 %v1498
  %2753 = vmatpush1.bf16.msra.mxu0 %v1497
  %2754 = vmatprep.subr.bf16.mxu0 %v1506
  %2755 = vmatpush1.bf16.msra.mxu0 %v1505
  %2756 = vmatprep.subr.bf16.mxu0 %v1514
  %2757 = vmatpush1.bf16.msra.mxu0 %v1513
  %2758 = vmatprep.subr.bf16.mxu0 %v1522
  %2759 = vmatpush1.bf16.msra.mxu0 %v1521
  %2760 = vmatprep.subr.bf16.mxu0 %v1530
  %2761 = vmatpush1.bf16.msra.mxu0 %v1529
  %2762 = vmatprep.subr.bf16.mxu0 %v1538
  %2763 = vmatpush1.bf16.msra.mxu0 %v1537
  %2764 = vmatprep.subr.bf16.mxu0 %v1546
  %2765 = vmatpush1.bf16.msra.mxu0 %v1545
  %2766 = vmatprep.subr.bf16.mxu0 %v1554
  %2767 = vmatpush1.bf16.msra.mxu0 %v1553
  %2768 = vmatprep.subr.bf16.mxu0 %v1562
  %2769 = vmatpush1.bf16.msra.mxu0 %v1561
  %2770 = vmatprep.subr.bf16.mxu0 %v1570
  %2771 = vmatpush1.bf16.msra.mxu0 %v1569
  %2772 = vmatprep.mubr.bf16.mxu0 %v2653
  %2773 = vmatmul.mubr.bf16.gmra.mrb[0].mxu0 %v2652
  %v2774 = vpop.f32.mrb[0].mxu0
  %v2775 = vadd.f32 0.0, %v2774
  %v2776 = vpop.f32.mrb[0].mxu0
  %v2777 = vadd.f32 0.0, %v2776
  %v2778 = vpop.f32.mrb[0].mxu0
  %v2779 = vadd.f32 0.0, %v2778
  %v2780 = vpop.f32.mrb[0].mxu0
  %v2781 = vadd.f32 0.0, %v2780
  %2782 = vdwg.mxu0
  %2783 = vmatprep.subr.bf16.mxu0 %v1452
  %2784 = vmatpush1.bf16.msra.mxu0 %v1451
  %2785 = vmatprep.subr.bf16.mxu0 %v1460
  %2786 = vmatpush1.bf16.msra.mxu0 %v1459
  %2787 = vmatprep.subr.bf16.mxu0 %v1468
  %2788 = vmatpush1.bf16.msra.mxu0 %v1467
  %2789 = vmatprep.subr.bf16.mxu0 %v1476
  %2790 = vmatpush1.bf16.msra.mxu0 %v1475
  %2791 = vmatprep.subr.bf16.mxu0 %v1484
  %2792 = vmatpush1.bf16.msra.mxu0 %v1483
  %2793 = vmatprep.subr.bf16.mxu0 %v1492
  %2794 = vmatpush1.bf16.msra.mxu0 %v1491
  %2795 = vmatprep.subr.bf16.mxu0 %v1500
  %2796 = vmatpush1.bf16.msra.mxu0 %v1499
  %2797 = vmatprep.subr.bf16.mxu0 %v1508
  %2798 = vmatpush1.bf16.msra.mxu0 %v1507
  %2799 = vmatprep.subr.bf16.mxu0 %v1516
  %2800 = vmatpush1.bf16.msra.mxu0 %v1515
  %2801 = vmatprep.subr.bf16.mxu0 %v1524
  %2802 = vmatpush1.bf16.msra.mxu0 %v1523
  %2803 = vmatprep.subr.bf16.mxu0 %v1532
  %2804 = vmatpush1.bf16.msra.mxu0 %v1531
  %2805 = vmatprep.subr.bf16.mxu0 %v1540
  %2806 = vmatpush1.bf16.msra.mxu0 %v1539
  %2807 = vmatprep.subr.bf16.mxu0 %v1548
  %2808 = vmatpush1.bf16.msra.mxu0 %v1547
  %2809 = vmatprep.subr.bf16.mxu0 %v1556
  %2810 = vmatpush1.bf16.msra.mxu0 %v1555
  %2811 = vmatprep.subr.bf16.mxu0 %v1564
  %2812 = vmatpush1.bf16.msra.mxu0 %v1563
  %2813 = vmatprep.subr.bf16.mxu0 %v1572
  %2814 = vmatpush1.bf16.msra.mxu0 %v1571
  %2815 = vmatprep.mubr.bf16.mxu0 %v2653
  %2816 = vmatmul.mubr.bf16.gmra.mrb[0].mxu0 %v2652
  %v2817 = vpop.f32.mrb[0].mxu0
  %v2818 = vadd.f32 0.0, %v2817
  %v2819 = vpop.f32.mrb[0].mxu0
  %v2820 = vadd.f32 0.0, %v2819
  %v2821 = vpop.f32.mrb[0].mxu0
  %v2822 = vadd.f32 0.0, %v2821
  %v2823 = vpop.f32.mrb[0].mxu0
  %v2824 = vadd.f32 0.0, %v2823
  %2825 = vdwg.mxu0
  %s2826 = smul.u32 3, 8
  %s2827 = smul.addr %s2826, 8
  %s2828 = scalar_lea.vmem [#allocation2], %s2827
  %v2829 = vld [vmem:[%s2828] sm:$0xff]
  %v2830 = vld [vmem:[%s2828 + $0x8] sm:$0xff]
  %v2831 = vld [vmem:[%s2828 + $0x10] sm:$0xff]
  %v2832 = vld [vmem:[%s2828 + $0x18] sm:$0xff]
  %v2833 = vunpack.c.l.bf16 %v2829
  %v2834 = vunpack.c.l.bf16 %v2830
  %v2835 = vunpack.c.l.bf16 %v2831
  %v2836 = vunpack.c.l.bf16 %v2832
  %v2837 = vunpack.c.h.bf16 %v2829
  %v2838 = vunpack.c.h.bf16 %v2830
  %v2839 = vunpack.c.h.bf16 %v2831
  %v2840 = vunpack.c.h.bf16 %v2832
  %v2841 = vadd.f32 %v2689, %v2833
  %v2842 = vadd.f32 %v2691, %v2834
  %v2843 = vadd.f32 %v2732, %v2835
  %v2844 = vadd.f32 %v2734, %v2836
  %v2845 = vadd.f32 %v2693, %v2837
  %v2846 = vadd.f32 %v2695, %v2838
  %v2847 = vadd.f32 %v2736, %v2839
  %v2848 = vadd.f32 %v2738, %v2840
  %s2849 = smul.u32 4, 8
  %s2850 = smul.addr %s2849, 8
  %s2851 = scalar_lea.vmem [#allocation2], %s2850
  %v2852 = vld [vmem:[%s2851 + $0x20] sm:$0xff]
  %v2853 = vld [vmem:[%s2851 + $0x28] sm:$0xff]
  %v2854 = vld [vmem:[%s2851 + $0x30] sm:$0xff]
  %v2855 = vld [vmem:[%s2851 + $0x38] sm:$0xff]
  %v2856 = vunpack.c.l.bf16 %v2852
  %v2857 = vunpack.c.l.bf16 %v2853
  %v2858 = vunpack.c.l.bf16 %v2854
  %v2859 = vunpack.c.l.bf16 %v2855
  %v2860 = vunpack.c.h.bf16 %v2852
  %v2861 = vunpack.c.h.bf16 %v2853
  %v2862 = vunpack.c.h.bf16 %v2854
  %v2863 = vunpack.c.h.bf16 %v2855
  %v2864 = vadd.f32 %v2775, %v2856
  %v2865 = vadd.f32 %v2777, %v2857
  %v2866 = vadd.f32 %v2818, %v2858
  %v2867 = vadd.f32 %v2820, %v2859
  %v2868 = vadd.f32 %v2779, %v2860
  %v2869 = vadd.f32 %v2781, %v2861
  %v2870 = vadd.f32 %v2822, %v2862
  %v2871 = vadd.f32 %v2824, %v2863
  %v2872 = vmul.f32 %v2841, 0.5
  %v2873 = vmul.f32 %v2845, 0.5
  %v2874 = vtanh.pop %v2872
  %v2875 = vtanh.pop %v2873
  %v2876 = vmul.f32 %v2874, 0.5
  %v2877 = vmul.f32 %v2875, 0.5
  %v2878 = vadd.f32 %v2876, 0.5
  %v2879 = vadd.f32 %v2877, 0.5
  %v2880 = vmul.f32 %v2842, 0.5
  %v2881 = vmul.f32 %v2846, 0.5
  %v2882 = vtanh.pop %v2880
  %v2883 = vtanh.pop %v2881
  %v2884 = vmul.f32 %v2882, 0.5
  %v2885 = vmul.f32 %v2883, 0.5
  %v2886 = vadd.f32 %v2884, 0.5
  %v2887 = vadd.f32 %v2885, 0.5
  %v2888 = vtanh.pop %v2843
  %v2889 = vtanh.pop %v2847
  %v2890 = vmul.f32 %v2844, 0.5
  %v2891 = vmul.f32 %v2848, 0.5
  %v2892 = vtanh.pop %v2890
  %v2893 = vtanh.pop %v2891
  %v2894 = vmul.f32 %v2892, 0.5
  %v2895 = vmul.f32 %v2893, 0.5
  %v2896 = vadd.f32 %v2894, 0.5
  %v2897 = vadd.f32 %v2895, 0.5
  %v2898 = vmul.f32 %v2886, %v2584
  %v2899 = vmul.f32 %v2887, %v2585
  %v2900 = vmul.f32 %v2878, %v2888
  %v2901 = vmul.f32 %v2879, %v2889
  %v2902 = vadd.f32 %v2898, %v2900
  %v2903 = vadd.f32 %v2899, %v2901
  %v2904 = vtanh.pop %v2902
  %v2905 = vtanh.pop %v2903
  %v2906 = vmul.f32 %v2896, %v2904
  %v2907 = vmul.f32 %v2897, %v2905
  %v2908 = vmul.f32 %v2864, 0.5
  %v2909 = vmul.f32 %v2868, 0.5
  %v2910 = vtanh.pop %v2908
  %v2911 = vtanh.pop %v2909
  %v2912 = vmul.f32 %v2910, 0.5
  %v2913 = vmul.f32 %v2911, 0.5
  %v2914 = vadd.f32 %v2912, 0.5
  %v2915 = vadd.f32 %v2913, 0.5
  %v2916 = vmul.f32 %v2865, 0.5
  %v2917 = vmul.f32 %v2869, 0.5
  %v2918 = vtanh.pop %v2916
  %v2919 = vtanh.pop %v2917
  %v2920 = vmul.f32 %v2918, 0.5
  %v2921 = vmul.f32 %v2919, 0.5
  %v2922 = vadd.f32 %v2920, 0.5
  %v2923 = vadd.f32 %v2921, 0.5
  %v2924 = vtanh.pop %v2866
  %v2925 = vtanh.pop %v2870
  %v2926 = vmul.f32 %v2867, 0.5
  %v2927 = vmul.f32 %v2871, 0.5
  %v2928 = vtanh.pop %v2926
  %v2929 = vtanh.pop %v2927
  %v2930 = vmul.f32 %v2928, 0.5
  %v2931 = vmul.f32 %v2929, 0.5
  %v2932 = vadd.f32 %v2930, 0.5
  %v2933 = vadd.f32 %v2931, 0.5
  %v2934 = vmul.f32 %v2922, %v2650
  %v2935 = vmul.f32 %v2923, %v2651
  %v2936 = vmul.f32 %v2914, %v2924
  %v2937 = vmul.f32 %v2915, %v2925
  %v2938 = vadd.f32 %v2934, %v2936
  %v2939 = vadd.f32 %v2935, %v2937
  %v2940 = vtanh.pop %v2938
  %v2941 = vtanh.pop %v2939
  %v2942 = vmul.f32 %v2932, %v2940
  %v2943 = vmul.f32 %v2933, %v2941
  %s2944 = scalar_lea.vmem [#allocation3], 48
  %v2945 = vld [vmem:[%s2944] sm:$0xff]
  %v2946 = vld [vmem:[%s2944 + $0x8] sm:$0xff]
  %s2947 = scalar_lea.vmem [#allocation3], 64
  %v2948 = vld [vmem:[%s2947] sm:$0xff]
  %v2949 = vld [vmem:[%s2947 + $0x8] sm:$0xff]
  %v2950 = vmul.f32 %v2906, %v2945
  %v2951 = vmul.f32 %v2907, %v2946
  %s2952 = smul.u32 6, 2
  %s2953 = smul.addr %s2952, 8
  %s2954 = scalar_lea.vmem %s5, %s2953
  %2955 = vst [vmem:[%s2954] sm:$0xff] %v2950
  %2956 = vst [vmem:[%s2954 + $0x10] sm:$0xff] %v2951
  %v2957 = vmul.f32 %v2942, %v2948
  %v2958 = vmul.f32 %v2943, %v2949
  %s2959 = smul.u32 8, 2
  %s2960 = smul.addr %s2959, 8
  %s2961 = scalar_lea.vmem %s5, %s2960
  %2962 = vst [vmem:[%s2961 + $0x8] sm:$0xff] %v2957
  %2963 = vst [vmem:[%s2961 + $0x18] sm:$0xff] %v2958
  %vm2964 = vcmp.gt.f32.partialorder %v2948, 0.0
  %vm2965 = vcmp.gt.f32.partialorder %v2949, 0.0
  %v2966 = vsel %vm2964, %v2942, %v2648
  %v2967 = vsel %vm2965, %v2943, %v2649
  %v2968 = vsel %vm2964, %v2938, %v2650
  %v2969 = vsel %vm2965, %v2939, %v2651
  %v2970 = vpack.c.bf16 %v2907, %v2906
  %v2971 = vpack.c.bf16 %v2967, %v2966
  %2972 = vmatprep.subr.bf16.mxu0 %v1446
  %2973 = vmatpush1.bf16.msra.mxu0 %v1445
  %2974 = vmatprep.subr.bf16.mxu0 %v1454
  %2975 = vmatpush1.bf16.msra.mxu0 %v1453
  %2976 = vmatprep.subr.bf16.mxu0 %v1462
  %2977 = vmatpush1.bf16.msra.mxu0 %v1461
  %2978 = vmatprep.subr.bf16.mxu0 %v1470
  %2979 = vmatpush1.bf16.msra.mxu0 %v1469
  %2980 = vmatprep.subr.bf16.mxu0 %v1478
  %2981 = vmatpush1.bf16.msra.mxu0 %v1477
  %2982 = vmatprep.subr.bf16.mxu0 %v1486
  %2983 = vmatpush1.bf16.msra.mxu0 %v1485
  %2984 = vmatprep.subr.bf16.mxu0 %v1494
  %2985 = vmatpush1.bf16.msra.mxu0 %v1493
  %2986 = vmatprep.subr.bf16.mxu0 %v1502
  %2987 = vmatpush1.bf16.msra.mxu0 %v1501
  %2988 = vmatprep.subr.bf16.mxu0 %v1510
  %2989 = vmatpush1.bf16.msra.mxu0 %v1509
  %2990 = vmatprep.subr.bf16.mxu0 %v1518
  %2991 = vmatpush1.bf16.msra.mxu0 %v1517
  %2992 = vmatprep.subr.bf16.mxu0 %v1526
  %2993 = vmatpush1.bf16.msra.mxu0 %v1525
  %2994 = vmatprep.subr.bf16.mxu0 %v1534
  %2995 = vmatpush1.bf16.msra.mxu0 %v1533
  %2996 = vmatprep.subr.bf16.mxu0 %v1542
  %2997 = vmatpush1.bf16.msra.mxu0 %v1541
  %2998 = vmatprep.subr.bf16.mxu0 %v1550
  %2999 = vmatpush1.bf16.msra.mxu0 %v1549
  %3000 = vmatprep.subr.bf16.mxu0 %v1558
  %3001 = vmatpush1.bf16.msra.mxu0 %v1557
  %3002 = vmatprep.subr.bf16.mxu0 %v1566
  %3003 = vmatpush1.bf16.msra.mxu0 %v1565
  %3004 = vmatprep.mubr.bf16.mxu0 %v2971
  %3005 = vmatmul.mubr.bf16.gmra.mrb[0].mxu0 %v2970
  %v3006 = vpop.f32.mrb[0].mxu0
  %v3007 = vadd.f32 0.0, %v3006
  %v3008 = vpop.f32.mrb[0].mxu0
  %v3009 = vadd.f32 0.0, %v3008
  %v3010 = vpop.f32.mrb[0].mxu0
  %v3011 = vadd.f32 0.0, %v3010
  %v3012 = vpop.f32.mrb[0].mxu0
  %v3013 = vadd.f32 0.0, %v3012
  %3014 = vdwg.mxu0
  %3015 = vmatprep.subr.bf16.mxu0 %v1448
  %3016 = vmatpush1.bf16.msra.mxu0 %v1447
  %3017 = vmatprep.subr.bf16.mxu0 %v1456
  %3018 = vmatpush1.bf16.msra.mxu0 %v1455
  %3019 = vmatprep.subr.bf16.mxu0 %v1464
  %3020 = vmatpush1.bf16.msra.mxu0 %v1463
  %3021 = vmatprep.subr.bf16.mxu0 %v1472
  %3022 = vmatpush1.bf16.msra.mxu0 %v1471
  %3023 = vmatprep.subr.bf16.mxu0 %v1480
  %3024 = vmatpush1.bf16.msra.mxu0 %v1479
  %3025 = vmatprep.subr.bf16.mxu0 %v1488
  %3026 = vmatpush1.bf16.msra.mxu0 %v1487
  %3027 = vmatprep.subr.bf16.mxu0 %v1496
  %3028 = vmatpush1.bf16.msra.mxu0 %v1495
  %3029 = vmatprep.subr.bf16.mxu0 %v1504
  %3030 = vmatpush1.bf16.msra.mxu0 %v1503
  %3031 = vmatprep.subr.bf16.mxu0 %v1512
  %3032 = vmatpush1.bf16.msra.mxu0 %v1511
  %3033 = vmatprep.subr.bf16.mxu0 %v1520
  %3034 = vmatpush1.bf16.msra.mxu0 %v1519
  %3035 = vmatprep.subr.bf16.mxu0 %v1528
  %3036 = vmatpush1.bf16.msra.mxu0 %v1527
  %3037 = vmatprep.subr.bf16.mxu0 %v1536
  %3038 = vmatpush1.bf16.msra.mxu0 %v1535
  %3039 = vmatprep.subr.bf16.mxu0 %v1544
  %3040 = vmatpush1.bf16.msra.mxu0 %v1543
  %3041 = vmatprep.subr.bf16.mxu0 %v1552
  %3042 = vmatpush1.bf16.msra.mxu0 %v1551
  %3043 = vmatprep.subr.bf16.mxu0 %v1560
  %3044 = vmatpush1.bf16.msra.mxu0 %v1559
  %3045 = vmatprep.subr.bf16.mxu0 %v1568
  %3046 = vmatpush1.bf16.msra.mxu0 %v1567
  %3047 = vmatprep.mubr.bf16.mxu0 %v2971
  %3048 = vmatmul.mubr.bf16.gmra.mrb[0].mxu0 %v2970
  %v3049 = vpop.f32.mrb[0].mxu0
  %v3050 = vadd.f32 0.0, %v3049
  %v3051 = vpop.f32.mrb[0].mxu0
  %v3052 = vadd.f32 0.0, %v3051
  %v3053 = vpop.f32.mrb[0].mxu0
  %v3054 = vadd.f32 0.0, %v3053
  %v3055 = vpop.f32.mrb[0].mxu0
  %v3056 = vadd.f32 0.0, %v3055
  %3057 = vdwg.mxu0
  %3058 = vmatprep.subr.bf16.mxu0 %v1450
  %3059 = vmatpush1.bf16.msra.mxu0 %v1449
  %3060 = vmatprep.subr.bf16.mxu0 %v1458
  %3061 = vmatpush1.bf16.msra.mxu0 %v1457
  %3062 = vmatprep.subr.bf16.mxu0 %v1466
  %3063 = vmatpush1.bf16.msra.mxu0 %v1465
  %3064 = vmatprep.subr.bf16.mxu0 %v1474
  %3065 = vmatpush1.bf16.msra.mxu0 %v1473
  %3066 = vmatprep.subr.bf16.mxu0 %v1482
  %3067 = vmatpush1.bf16.msra.mxu0 %v1481
  %3068 = vmatprep.subr.bf16.mxu0 %v1490
  %3069 = vmatpush1.bf16.msra.mxu0 %v1489
  %3070 = vmatprep.subr.bf16.mxu0 %v1498
  %3071 = vmatpush1.bf16.msra.mxu0 %v1497
  %3072 = vmatprep.subr.bf16.mxu0 %v1506
  %3073 = vmatpush1.bf16.msra.mxu0 %v1505
  %3074 = vmatprep.subr.bf16.mxu0 %v1514
  %3075 = vmatpush1.bf16.msra.mxu0 %v1513
  %3076 = vmatprep.subr.bf16.mxu0 %v1522
  %3077 = vmatpush1.bf16.msra.mxu0 %v1521
  %3078 = vmatprep.subr.bf16.mxu0 %v1530
  %3079 = vmatpush1.bf16.msra.mxu0 %v1529
  %3080 = vmatprep.subr.bf16.mxu0 %v1538
  %3081 = vmatpush1.bf16.msra.mxu0 %v1537
  %3082 = vmatprep.subr.bf16.mxu0 %v1546
  %3083 = vmatpush1.bf16.msra.mxu0 %v1545
  %3084 = vmatprep.subr.bf16.mxu0 %v1554
  %3085 = vmatpush1.bf16.msra.mxu0 %v1553
  %3086 = vmatprep.subr.bf16.mxu0 %v1562
  %3087 = vmatpush1.bf16.msra.mxu0 %v1561
  %3088 = vmatprep.subr.bf16.mxu0 %v1570
  %3089 = vmatpush1.bf16.msra.mxu0 %v1569
  %3090 = vmatprep.mubr.bf16.mxu0 %v2971
  %3091 = vmatmul.mubr.bf16.gmra.mrb[0].mxu0 %v2970
  %v3092 = vpop.f32.mrb[0].mxu0
  %v3093 = vadd.f32 0.0, %v3092
  %v3094 = vpop.f32.mrb[0].mxu0
  %v3095 = vadd.f32 0.0, %v3094
  %v3096 = vpop.f32.mrb[0].mxu0
  %v3097 = vadd.f32 0.0, %v3096
  %v3098 = vpop.f32.mrb[0].mxu0
  %v3099 = vadd.f32 0.0, %v3098
  %3100 = vdwg.mxu0
  %3101 = vmatprep.subr.bf16.mxu0 %v1452
  %3102 = vmatpush1.bf16.msra.mxu0 %v1451
  %3103 = vmatprep.subr.bf16.mxu0 %v1460
  %3104 = vmatpush1.bf16.msra.mxu0 %v1459
  %3105 = vmatprep.subr.bf16.mxu0 %v1468
  %3106 = vmatpush1.bf16.msra.mxu0 %v1467
  %3107 = vmatprep.subr.bf16.mxu0 %v1476
  %3108 = vmatpush1.bf16.msra.mxu0 %v1475
  %3109 = vmatprep.subr.bf16.mxu0 %v1484
  %3110 = vmatpush1.bf16.msra.mxu0 %v1483
  %3111 = vmatprep.subr.bf16.mxu0 %v1492
  %3112 = vmatpush1.bf16.msra.mxu0 %v1491
  %3113 = vmatprep.subr.bf16.mxu0 %v1500
  %3114 = vmatpush1.bf16.msra.mxu0 %v1499
  %3115 = vmatprep.subr.bf16.mxu0 %v1508
  %3116 = vmatpush1.bf16.msra.mxu0 %v1507
  %3117 = vmatprep.subr.bf16.mxu0 %v1516
  %3118 = vmatpush1.bf16.msra.mxu0 %v1515
  %3119 = vmatprep.subr.bf16.mxu0 %v1524
  %3120 = vmatpush1.bf16.msra.mxu0 %v1523
  %3121 = vmatprep.subr.bf16.mxu0 %v1532
  %3122 = vmatpush1.bf16.msra.mxu0 %v1531
  %3123 = vmatprep.subr.bf16.mxu0 %v1540
  %3124 = vmatpush1.bf16.msra.mxu0 %v1539
  %3125 = vmatprep.subr.bf16.mxu0 %v1548
  %3126 = vmatpush1.bf16.msra.mxu0 %v1547
  %3127 = vmatprep.subr.bf16.mxu0 %v1556
  %3128 = vmatpush1.bf16.msra.mxu0 %v1555
  %3129 = vmatprep.subr.bf16.mxu0 %v1564
  %3130 = vmatpush1.bf16.msra.mxu0 %v1563
  %3131 = vmatprep.subr.bf16.mxu0 %v1572
  %3132 = vmatpush1.bf16.msra.mxu0 %v1571
  %3133 = vmatprep.mubr.bf16.mxu0 %v2971
  %3134 = vmatmul.mubr.bf16.gmra.mrb[0].mxu0 %v2970
  %v3135 = vpop.f32.mrb[0].mxu0
  %v3136 = vadd.f32 0.0, %v3135
  %v3137 = vpop.f32.mrb[0].mxu0
  %v3138 = vadd.f32 0.0, %v3137
  %v3139 = vpop.f32.mrb[0].mxu0
  %v3140 = vadd.f32 0.0, %v3139
  %v3141 = vpop.f32.mrb[0].mxu0
  %v3142 = vadd.f32 0.0, %v3141
  %3143 = vdwg.mxu0
  %v3144 = vld [vmem:[%s2851] sm:$0xff]
  %v3145 = vld [vmem:[%s2851 + $0x8] sm:$0xff]
  %v3146 = vld [vmem:[%s2851 + $0x10] sm:$0xff]
  %v3147 = vld [vmem:[%s2851 + $0x18] sm:$0xff]
  %v3148 = vunpack.c.l.bf16 %v3144
  %v3149 = vunpack.c.l.bf16 %v3145
  %v3150 = vunpack.c.l.bf16 %v3146
  %v3151 = vunpack.c.l.bf16 %v3147
  %v3152 = vunpack.c.h.bf16 %v3144
  %v3153 = vunpack.c.h.bf16 %v3145
  %v3154 = vunpack.c.h.bf16 %v3146
  %v3155 = vunpack.c.h.bf16 %v3147
  %v3156 = vadd.f32 %v3007, %v3148
  %v3157 = vadd.f32 %v3009, %v3149
  %v3158 = vadd.f32 %v3050, %v3150
  %v3159 = vadd.f32 %v3052, %v3151
  %v3160 = vadd.f32 %v3011, %v3152
  %v3161 = vadd.f32 %v3013, %v3153
  %v3162 = vadd.f32 %v3054, %v3154
  %v3163 = vadd.f32 %v3056, %v3155
  %v3164 = vld [vmem:[%s2828 + $0x20] sm:$0xff]
  %v3165 = vld [vmem:[%s2828 + $0x28] sm:$0xff]
  %v3166 = vld [vmem:[%s2828 + $0x30] sm:$0xff]
  %v3167 = vld [vmem:[%s2828 + $0x38] sm:$0xff]
  %v3168 = vunpack.c.l.bf16 %v3164
  %v3169 = vunpack.c.l.bf16 %v3165
  %v3170 = vunpack.c.l.bf16 %v3166
  %v3171 = vunpack.c.l.bf16 %v3167
  %v3172 = vunpack.c.h.bf16 %v3164
  %v3173 = vunpack.c.h.bf16 %v3165
  %v3174 = vunpack.c.h.bf16 %v3166
  %v3175 = vunpack.c.h.bf16 %v3167
  %v3176 = vadd.f32 %v3093, %v3168
  %v3177 = vadd.f32 %v3095, %v3169
  %v3178 = vadd.f32 %v3136, %v3170
  %v3179 = vadd.f32 %v3138, %v3171
  %v3180 = vadd.f32 %v3097, %v3172
  %v3181 = vadd.f32 %v3099, %v3173
  %v3182 = vadd.f32 %v3140, %v3174
  %v3183 = vadd.f32 %v3142, %v3175
  %v3184 = vmul.f32 %v3156, 0.5
  %v3185 = vmul.f32 %v3160, 0.5
  %v3186 = vtanh.pop %v3184
  %v3187 = vtanh.pop %v3185
  %v3188 = vmul.f32 %v3186, 0.5
  %v3189 = vmul.f32 %v3187, 0.5
  %v3190 = vadd.f32 %v3188, 0.5
  %v3191 = vadd.f32 %v3189, 0.5
  %v3192 = vmul.f32 %v3157, 0.5
  %v3193 = vmul.f32 %v3161, 0.5
  %v3194 = vtanh.pop %v3192
  %v3195 = vtanh.pop %v3193
  %v3196 = vmul.f32 %v3194, 0.5
  %v3197 = vmul.f32 %v3195, 0.5
  %v3198 = vadd.f32 %v3196, 0.5
  %v3199 = vadd.f32 %v3197, 0.5
  %v3200 = vtanh.pop %v3158
  %v3201 = vtanh.pop %v3162
  %v3202 = vmul.f32 %v3159, 0.5
  %v3203 = vmul.f32 %v3163, 0.5
  %v3204 = vtanh.pop %v3202
  %v3205 = vtanh.pop %v3203
  %v3206 = vmul.f32 %v3204, 0.5
  %v3207 = vmul.f32 %v3205, 0.5
  %v3208 = vadd.f32 %v3206, 0.5
  %v3209 = vadd.f32 %v3207, 0.5
  %v3210 = vmul.f32 %v3198, %v2902
  %v3211 = vmul.f32 %v3199, %v2903
  %v3212 = vmul.f32 %v3190, %v3200
  %v3213 = vmul.f32 %v3191, %v3201
  %v3214 = vadd.f32 %v3210, %v3212
  %v3215 = vadd.f32 %v3211, %v3213
  %v3216 = vtanh.pop %v3214
  %v3217 = vtanh.pop %v3215
  %v3218 = vmul.f32 %v3208, %v3216
  %v3219 = vmul.f32 %v3209, %v3217
  %v3220 = vmul.f32 %v3176, 0.5
  %v3221 = vmul.f32 %v3180, 0.5
  %v3222 = vtanh.pop %v3220
  %v3223 = vtanh.pop %v3221
  %v3224 = vmul.f32 %v3222, 0.5
  %v3225 = vmul.f32 %v3223, 0.5
  %v3226 = vadd.f32 %v3224, 0.5
  %v3227 = vadd.f32 %v3225, 0.5
  %v3228 = vmul.f32 %v3177, 0.5
  %v3229 = vmul.f32 %v3181, 0.5
  %v3230 = vtanh.pop %v3228
  %v3231 = vtanh.pop %v3229
  %v3232 = vmul.f32 %v3230, 0.5
  %v3233 = vmul.f32 %v3231, 0.5
  %v3234 = vadd.f32 %v3232, 0.5
  %v3235 = vadd.f32 %v3233, 0.5
  %v3236 = vtanh.pop %v3178
  %v3237 = vtanh.pop %v3182
  %v3238 = vmul.f32 %v3179, 0.5
  %v3239 = vmul.f32 %v3183, 0.5
  %v3240 = vtanh.pop %v3238
  %v3241 = vtanh.pop %v3239
  %v3242 = vmul.f32 %v3240, 0.5
  %v3243 = vmul.f32 %v3241, 0.5
  %v3244 = vadd.f32 %v3242, 0.5
  %v3245 = vadd.f32 %v3243, 0.5
  %v3246 = vmul.f32 %v3234, %v2968
  %v3247 = vmul.f32 %v3235, %v2969
  %v3248 = vmul.f32 %v3226, %v3236
  %v3249 = vmul.f32 %v3227, %v3237
  %v3250 = vadd.f32 %v3246, %v3248
  %v3251 = vadd.f32 %v3247, %v3249
  %v3252 = vtanh.pop %v3250
  %v3253 = vtanh.pop %v3251
  %v3254 = vmul.f32 %v3244, %v3252
  %v3255 = vmul.f32 %v3245, %v3253
  %v3256 = vld [vmem:[%s2947] sm:$0xff]
  %v3257 = vld [vmem:[%s2947 + $0x8] sm:$0xff]
  %v3258 = vld [vmem:[%s2944] sm:$0xff]
  %v3259 = vld [vmem:[%s2944 + $0x8] sm:$0xff]
  %v3260 = vmul.f32 %v3218, %v3256
  %v3261 = vmul.f32 %v3219, %v3257
  %3262 = vst [vmem:[%s2961] sm:$0xff] %v3260
  %3263 = vst [vmem:[%s2961 + $0x10] sm:$0xff] %v3261
  %v3264 = vmul.f32 %v3254, %v3258
  %v3265 = vmul.f32 %v3255, %v3259
  %3266 = vst [vmem:[%s2954 + $0x8] sm:$0xff] %v3264
  %3267 = vst [vmem:[%s2954 + $0x18] sm:$0xff] %v3265
  %vm3268 = vcmp.gt.f32.partialorder %v3258, 0.0
  %vm3269 = vcmp.gt.f32.partialorder %v3259, 0.0
  %v3270 = vsel %vm3268, %v3254, %v2966
  %v3271 = vsel %vm3269, %v3255, %v2967
  %v3272 = vsel %vm3268, %v3250, %v2968
  %v3273 = vsel %vm3269, %v3251, %v2969
  %v3274 = vpack.c.bf16 %v3219, %v3218
  %v3275 = vpack.c.bf16 %v3271, %v3270
  %3276 = vmatprep.subr.bf16.mxu0 %v1446
  %3277 = vmatpush1.bf16.msra.mxu0 %v1445
  %3278 = vmatprep.subr.bf16.mxu0 %v1454
  %3279 = vmatpush1.bf16.msra.mxu0 %v1453
  %3280 = vmatprep.subr.bf16.mxu0 %v1462
  %3281 = vmatpush1.bf16.msra.mxu0 %v1461
  %3282 = vmatprep.subr.bf16.mxu0 %v1470
  %3283 = vmatpush1.bf16.msra.mxu0 %v1469
  %3284 = vmatprep.subr.bf16.mxu0 %v1478
  %3285 = vmatpush1.bf16.msra.mxu0 %v1477
  %3286 = vmatprep.subr.bf16.mxu0 %v1486
  %3287 = vmatpush1.bf16.msra.mxu0 %v1485
  %3288 = vmatprep.subr.bf16.mxu0 %v1494
  %3289 = vmatpush1.bf16.msra.mxu0 %v1493
  %3290 = vmatprep.subr.bf16.mxu0 %v1502
  %3291 = vmatpush1.bf16.msra.mxu0 %v1501
  %3292 = vmatprep.subr.bf16.mxu0 %v1510
  %3293 = vmatpush1.bf16.msra.mxu0 %v1509
  %3294 = vmatprep.subr.bf16.mxu0 %v1518
  %3295 = vmatpush1.bf16.msra.mxu0 %v1517
  %3296 = vmatprep.subr.bf16.mxu0 %v1526
  %3297 = vmatpush1.bf16.msra.mxu0 %v1525
  %3298 = vmatprep.subr.bf16.mxu0 %v1534
  %3299 = vmatpush1.bf16.msra.mxu0 %v1533
  %3300 = vmatprep.subr.bf16.mxu0 %v1542
  %3301 = vmatpush1.bf16.msra.mxu0 %v1541
  %3302 = vmatprep.subr.bf16.mxu0 %v1550
  %3303 = vmatpush1.bf16.msra.mxu0 %v1549
  %3304 = vmatprep.subr.bf16.mxu0 %v1558
  %3305 = vmatpush1.bf16.msra.mxu0 %v1557
  %3306 = vmatprep.subr.bf16.mxu0 %v1566
  %3307 = vmatpush1.bf16.msra.mxu0 %v1565
  %3308 = vmatprep.mubr.bf16.mxu0 %v3275
  %3309 = vmatmul.mubr.bf16.gmra.mrb[0].mxu0 %v3274
  %v3310 = vpop.f32.mrb[0].mxu0
  %v3311 = vadd.f32 0.0, %v3310
  %v3312 = vpop.f32.mrb[0].mxu0
  %v3313 = vadd.f32 0.0, %v3312
  %v3314 = vpop.f32.mrb[0].mxu0
  %v3315 = vadd.f32 0.0, %v3314
  %v3316 = vpop.f32.mrb[0].mxu0
  %v3317 = vadd.f32 0.0, %v3316
  %3318 = vdwg.mxu0
  %3319 = vmatprep.subr.bf16.mxu0 %v1448
  %3320 = vmatpush1.bf16.msra.mxu0 %v1447
  %3321 = vmatprep.subr.bf16.mxu0 %v1456
  %3322 = vmatpush1.bf16.msra.mxu0 %v1455
  %3323 = vmatprep.subr.bf16.mxu0 %v1464
  %3324 = vmatpush1.bf16.msra.mxu0 %v1463
  %3325 = vmatprep.subr.bf16.mxu0 %v1472
  %3326 = vmatpush1.bf16.msra.mxu0 %v1471
  %3327 = vmatprep.subr.bf16.mxu0 %v1480
  %3328 = vmatpush1.bf16.msra.mxu0 %v1479
  %3329 = vmatprep.subr.bf16.mxu0 %v1488
  %3330 = vmatpush1.bf16.msra.mxu0 %v1487
  %3331 = vmatprep.subr.bf16.mxu0 %v1496
  %3332 = vmatpush1.bf16.msra.mxu0 %v1495
  %3333 = vmatprep.subr.bf16.mxu0 %v1504
  %3334 = vmatpush1.bf16.msra.mxu0 %v1503
  %3335 = vmatprep.subr.bf16.mxu0 %v1512
  %3336 = vmatpush1.bf16.msra.mxu0 %v1511
  %3337 = vmatprep.subr.bf16.mxu0 %v1520
  %3338 = vmatpush1.bf16.msra.mxu0 %v1519
  %3339 = vmatprep.subr.bf16.mxu0 %v1528
  %3340 = vmatpush1.bf16.msra.mxu0 %v1527
  %3341 = vmatprep.subr.bf16.mxu0 %v1536
  %3342 = vmatpush1.bf16.msra.mxu0 %v1535
  %3343 = vmatprep.subr.bf16.mxu0 %v1544
  %3344 = vmatpush1.bf16.msra.mxu0 %v1543
  %3345 = vmatprep.subr.bf16.mxu0 %v1552
  %3346 = vmatpush1.bf16.msra.mxu0 %v1551
  %3347 = vmatprep.subr.bf16.mxu0 %v1560
  %3348 = vmatpush1.bf16.msra.mxu0 %v1559
  %3349 = vmatprep.subr.bf16.mxu0 %v1568
  %3350 = vmatpush1.bf16.msra.mxu0 %v1567
  %3351 = vmatprep.mubr.bf16.mxu0 %v3275
  %3352 = vmatmul.mubr.bf16.gmra.mrb[0].mxu0 %v3274
  %v3353 = vpop.f32.mrb[0].mxu0
  %v3354 = vadd.f32 0.0, %v3353
  %v3355 = vpop.f32.mrb[0].mxu0
  %v3356 = vadd.f32 0.0, %v3355
  %v3357 = vpop.f32.mrb[0].mxu0
  %v3358 = vadd.f32 0.0, %v3357
  %v3359 = vpop.f32.mrb[0].mxu0
  %v3360 = vadd.f32 0.0, %v3359
  %3361 = vdwg.mxu0
  %3362 = vmatprep.subr.bf16.mxu0 %v1450
  %3363 = vmatpush1.bf16.msra.mxu0 %v1449
  %3364 = vmatprep.subr.bf16.mxu0 %v1458
  %3365 = vmatpush1.bf16.msra.mxu0 %v1457
  %3366 = vmatprep.subr.bf16.mxu0 %v1466
  %3367 = vmatpush1.bf16.msra.mxu0 %v1465
  %3368 = vmatprep.subr.bf16.mxu0 %v1474
  %3369 = vmatpush1.bf16.msra.mxu0 %v1473
  %3370 = vmatprep.subr.bf16.mxu0 %v1482
  %3371 = vmatpush1.bf16.msra.mxu0 %v1481
  %3372 = vmatprep.subr.bf16.mxu0 %v1490
  %3373 = vmatpush1.bf16.msra.mxu0 %v1489
  %3374 = vmatprep.subr.bf16.mxu0 %v1498
  %3375 = vmatpush1.bf16.msra.mxu0 %v1497
  %3376 = vmatprep.subr.bf16.mxu0 %v1506
  %3377 = vmatpush1.bf16.msra.mxu0 %v1505
  %3378 = vmatprep.subr.bf16.mxu0 %v1514
  %3379 = vmatpush1.bf16.msra.mxu0 %v1513
  %3380 = vmatprep.subr.bf16.mxu0 %v1522
  %3381 = vmatpush1.bf16.msra.mxu0 %v1521
  %3382 = vmatprep.subr.bf16.mxu0 %v1530
  %3383 = vmatpush1.bf16.msra.mxu0 %v1529
  %3384 = vmatprep.subr.bf16.mxu0 %v1538
  %3385 = vmatpush1.bf16.msra.mxu0 %v1537
  %3386 = vmatprep.subr.bf16.mxu0 %v1546
  %3387 = vmatpush1.bf16.msra.mxu0 %v1545
  %3388 = vmatprep.subr.bf16.mxu0 %v1554
  %3389 = vmatpush1.bf16.msra.mxu0 %v1553
  %3390 = vmatprep.subr.bf16.mxu0 %v1562
  %3391 = vmatpush1.bf16.msra.mxu0 %v1561
  %3392 = vmatprep.subr.bf16.mxu0 %v1570
  %3393 = vmatpush1.bf16.msra.mxu0 %v1569
  %3394 = vmatprep.mubr.bf16.mxu0 %v3275
  %3395 = vmatmul.mubr.bf16.gmra.mrb[0].mxu0 %v3274
  %v3396 = vpop.f32.mrb[0].mxu0
  %v3397 = vadd.f32 0.0, %v3396
  %v3398 = vpop.f32.mrb[0].mxu0
  %v3399 = vadd.f32 0.0, %v3398
  %v3400 = vpop.f32.mrb[0].mxu0
  %v3401 = vadd.f32 0.0, %v3400
  %v3402 = vpop.f32.mrb[0].mxu0
  %v3403 = vadd.f32 0.0, %v3402
  %3404 = vdwg.mxu0
  %3405 = vmatprep.subr.bf16.mxu0 %v1452
  %3406 = vmatpush1.bf16.msra.mxu0 %v1451
  %3407 = vmatprep.subr.bf16.mxu0 %v1460
  %3408 = vmatpush1.bf16.msra.mxu0 %v1459
  %3409 = vmatprep.subr.bf16.mxu0 %v1468
  %3410 = vmatpush1.bf16.msra.mxu0 %v1467
  %3411 = vmatprep.subr.bf16.mxu0 %v1476
  %3412 = vmatpush1.bf16.msra.mxu0 %v1475
  %3413 = vmatprep.subr.bf16.mxu0 %v1484
  %3414 = vmatpush1.bf16.msra.mxu0 %v1483
  %3415 = vmatprep.subr.bf16.mxu0 %v1492
  %3416 = vmatpush1.bf16.msra.mxu0 %v1491
  %3417 = vmatprep.subr.bf16.mxu0 %v1500
  %3418 = vmatpush1.bf16.msra.mxu0 %v1499
  %3419 = vmatprep.subr.bf16.mxu0 %v1508
  %3420 = vmatpush1.bf16.msra.mxu0 %v1507
  %3421 = vmatprep.subr.bf16.mxu0 %v1516
  %3422 = vmatpush1.bf16.msra.mxu0 %v1515
  %3423 = vmatprep.subr.bf16.mxu0 %v1524
  %3424 = vmatpush1.bf16.msra.mxu0 %v1523
  %3425 = vmatprep.subr.bf16.mxu0 %v1532
  %3426 = vmatpush1.bf16.msra.mxu0 %v1531
  %3427 = vmatprep.subr.bf16.mxu0 %v1540
  %3428 = vmatpush1.bf16.msra.mxu0 %v1539
  %3429 = vmatprep.subr.bf16.mxu0 %v1548
  %3430 = vmatpush1.bf16.msra.mxu0 %v1547
  %3431 = vmatprep.subr.bf16.mxu0 %v1556
  %3432 = vmatpush1.bf16.msra.mxu0 %v1555
  %3433 = vmatprep.subr.bf16.mxu0 %v1564
  %3434 = vmatpush1.bf16.msra.mxu0 %v1563
  %3435 = vmatprep.subr.bf16.mxu0 %v1572
  %3436 = vmatpush1.bf16.msra.mxu0 %v1571
  %3437 = vmatprep.mubr.bf16.mxu0 %v3275
  %3438 = vmatmul.mubr.bf16.gmra.mrb[0].mxu0 %v3274
  %v3439 = vpop.f32.mrb[0].mxu0
  %v3440 = vadd.f32 0.0, %v3439
  %v3441 = vpop.f32.mrb[0].mxu0
  %v3442 = vadd.f32 0.0, %v3441
  %v3443 = vpop.f32.mrb[0].mxu0
  %v3444 = vadd.f32 0.0, %v3443
  %v3445 = vpop.f32.mrb[0].mxu0
  %v3446 = vadd.f32 0.0, %v3445
  %3447 = vdwg.mxu0
  %v3448 = vld [vmem:[%s2533] sm:$0xff]
  %v3449 = vld [vmem:[%s2533 + $0x8] sm:$0xff]
  %v3450 = vld [vmem:[%s2533 + $0x10] sm:$0xff]
  %v3451 = vld [vmem:[%s2533 + $0x18] sm:$0xff]
  %v3452 = vunpack.c.l.bf16 %v3448
  %v3453 = vunpack.c.l.bf16 %v3449
  %v3454 = vunpack.c.l.bf16 %v3450
  %v3455 = vunpack.c.l.bf16 %v3451
  %v3456 = vunpack.c.h.bf16 %v3448
  %v3457 = vunpack.c.h.bf16 %v3449
  %v3458 = vunpack.c.h.bf16 %v3450
  %v3459 = vunpack.c.h.bf16 %v3451
  %v3460 = vadd.f32 %v3311, %v3452
  %v3461 = vadd.f32 %v3313, %v3453
  %v3462 = vadd.f32 %v3354, %v3454
  %v3463 = vadd.f32 %v3356, %v3455
  %v3464 = vadd.f32 %v3315, %v3456
  %v3465 = vadd.f32 %v3317, %v3457
  %v3466 = vadd.f32 %v3358, %v3458
  %v3467 = vadd.f32 %v3360, %v3459
  %v3468 = vld [vmem:[%s2510 + $0x20] sm:$0xff]
  %v3469 = vld [vmem:[%s2510 + $0x28] sm:$0xff]
  %v3470 = vld [vmem:[%s2510 + $0x30] sm:$0xff]
  %v3471 = vld [vmem:[%s2510 + $0x38] sm:$0xff]
  %v3472 = vunpack.c.l.bf16 %v3468
  %v3473 = vunpack.c.l.bf16 %v3469
  %v3474 = vunpack.c.l.bf16 %v3470
  %v3475 = vunpack.c.l.bf16 %v3471
  %v3476 = vunpack.c.h.bf16 %v3468
  %v3477 = vunpack.c.h.bf16 %v3469
  %v3478 = vunpack.c.h.bf16 %v3470
  %v3479 = vunpack.c.h.bf16 %v3471
  %v3480 = vadd.f32 %v3397, %v3472
  %v3481 = vadd.f32 %v3399, %v3473
  %v3482 = vadd.f32 %v3440, %v3474
  %v3483 = vadd.f32 %v3442, %v3475
  %v3484 = vadd.f32 %v3401, %v3476
  %v3485 = vadd.f32 %v3403, %v3477
  %v3486 = vadd.f32 %v3444, %v3478
  %v3487 = vadd.f32 %v3446, %v3479
  %v3488 = vmul.f32 %v3460, 0.5
  %v3489 = vmul.f32 %v3464, 0.5
  %v3490 = vtanh.pop %v3488
  %v3491 = vtanh.pop %v3489
  %v3492 = vmul.f32 %v3490, 0.5
  %v3493 = vmul.f32 %v3491, 0.5
  %v3494 = vadd.f32 %v3492, 0.5
  %v3495 = vadd.f32 %v3493, 0.5
  %v3496 = vmul.f32 %v3461, 0.5
  %v3497 = vmul.f32 %v3465, 0.5
  %v3498 = vtanh.pop %v3496
  %v3499 = vtanh.pop %v3497
  %v3500 = vmul.f32 %v3498, 0.5
  %v3501 = vmul.f32 %v3499, 0.5
  %v3502 = vadd.f32 %v3500, 0.5
  %v3503 = vadd.f32 %v3501, 0.5
  %v3504 = vtanh.pop %v3462
  %v3505 = vtanh.pop %v3466
  %v3506 = vmul.f32 %v3463, 0.5
  %v3507 = vmul.f32 %v3467, 0.5
  %v3508 = vtanh.pop %v3506
  %v3509 = vtanh.pop %v3507
  %v3510 = vmul.f32 %v3508, 0.5
  %v3511 = vmul.f32 %v3509, 0.5
  %v3512 = vadd.f32 %v3510, 0.5
  %v3513 = vadd.f32 %v3511, 0.5
  %v3514 = vmul.f32 %v3502, %v3214
  %v3515 = vmul.f32 %v3503, %v3215
  %v3516 = vmul.f32 %v3494, %v3504
  %v3517 = vmul.f32 %v3495, %v3505
  %v3518 = vadd.f32 %v3514, %v3516
  %v3519 = vadd.f32 %v3515, %v3517
  %v3520 = vtanh.pop %v3518
  %v3521 = vtanh.pop %v3519
  %v3522 = vmul.f32 %v3512, %v3520
  %v3523 = vmul.f32 %v3513, %v3521
  %v3524 = vmul.f32 %v3480, 0.5
  %v3525 = vmul.f32 %v3484, 0.5
  %v3526 = vtanh.pop %v3524
  %v3527 = vtanh.pop %v3525
  %v3528 = vmul.f32 %v3526, 0.5
  %v3529 = vmul.f32 %v3527, 0.5
  %v3530 = vadd.f32 %v3528, 0.5
  %v3531 = vadd.f32 %v3529, 0.5
  %v3532 = vmul.f32 %v3481, 0.5
  %v3533 = vmul.f32 %v3485, 0.5
  %v3534 = vtanh.pop %v3532
  %v3535 = vtanh.pop %v3533
  %v3536 = vmul.f32 %v3534, 0.5
  %v3537 = vmul.f32 %v3535, 0.5
  %v3538 = vadd.f32 %v3536, 0.5
  %v3539 = vadd.f32 %v3537, 0.5
  %v3540 = vtanh.pop %v3482
  %v3541 = vtanh.pop %v3486
  %v3542 = vmul.f32 %v3483, 0.5
  %v3543 = vmul.f32 %v3487, 0.5
  %v3544 = vtanh.pop %v3542
  %v3545 = vtanh.pop %v3543
  %v3546 = vmul.f32 %v3544, 0.5
  %v3547 = vmul.f32 %v3545, 0.5
  %v3548 = vadd.f32 %v3546, 0.5
  %v3549 = vadd.f32 %v3547, 0.5
  %v3550 = vmul.f32 %v3538, %v3272
  %v3551 = vmul.f32 %v3539, %v3273
  %v3552 = vmul.f32 %v3530, %v3540
  %v3553 = vmul.f32 %v3531, %v3541
  %v3554 = vadd.f32 %v3550, %v3552
  %v3555 = vadd.f32 %v3551, %v3553
  %v3556 = vtanh.pop %v3554
  %v3557 = vtanh.pop %v3555
  %v3558 = vmul.f32 %v3548, %v3556
  %v3559 = vmul.f32 %v3549, %v3557
  %v3560 = vld [vmem:[%s2629] sm:$0xff]
  %v3561 = vld [vmem:[%s2629 + $0x8] sm:$0xff]
  %v3562 = vld [vmem:[%s2626] sm:$0xff]
  %v3563 = vld [vmem:[%s2626 + $0x8] sm:$0xff]
  %v3564 = vmul.f32 %v3522, %v3560
  %v3565 = vmul.f32 %v3523, %v3561
  %3566 = vst [vmem:[%s2643] sm:$0xff] %v3564
  %3567 = vst [vmem:[%s2643 + $0x10] sm:$0xff] %v3565
  %v3568 = vmul.f32 %v3558, %v3562
  %v3569 = vmul.f32 %v3559, %v3563
  %3570 = vst [vmem:[%s2636 + $0x8] sm:$0xff] %v3568
  %3571 = vst [vmem:[%s2636 + $0x18] sm:$0xff] %v3569
  %vm3572 = vcmp.gt.f32.partialorder %v3562, 0.0
  %vm3573 = vcmp.gt.f32.partialorder %v3563, 0.0
  %v3574 = vsel %vm3572, %v3558, %v3270
  %v3575 = vsel %vm3573, %v3559, %v3271
  %v3576 = vsel %vm3572, %v3554, %v3272
  %v3577 = vsel %vm3573, %v3555, %v3273
  %v3578 = vpack.c.bf16 %v3523, %v3522
  %v3579 = vpack.c.bf16 %v3575, %v3574
  %3580 = vmatprep.subr.bf16.mxu0 %v1446
  %3581 = vmatpush1.bf16.msra.mxu0 %v1445
  %3582 = vmatprep.subr.bf16.mxu0 %v1454
  %3583 = vmatpush1.bf16.msra.mxu0 %v1453
  %3584 = vmatprep.subr.bf16.mxu0 %v1462
  %3585 = vmatpush1.bf16.msra.mxu0 %v1461
  %3586 = vmatprep.subr.bf16.mxu0 %v1470
  %3587 = vmatpush1.bf16.msra.mxu0 %v1469
  %3588 = vmatprep.subr.bf16.mxu0 %v1478
  %3589 = vmatpush1.bf16.msra.mxu0 %v1477
  %3590 = vmatprep.subr.bf16.mxu0 %v1486
  %3591 = vmatpush1.bf16.msra.mxu0 %v1485
  %3592 = vmatprep.subr.bf16.mxu0 %v1494
  %3593 = vmatpush1.bf16.msra.mxu0 %v1493
  %3594 = vmatprep.subr.bf16.mxu0 %v1502
  %3595 = vmatpush1.bf16.msra.mxu0 %v1501
  %3596 = vmatprep.subr.bf16.mxu0 %v1510
  %3597 = vmatpush1.bf16.msra.mxu0 %v1509
  %3598 = vmatprep.subr.bf16.mxu0 %v1518
  %3599 = vmatpush1.bf16.msra.mxu0 %v1517
  %3600 = vmatprep.subr.bf16.mxu0 %v1526
  %3601 = vmatpush1.bf16.msra.mxu0 %v1525
  %3602 = vmatprep.subr.bf16.mxu0 %v1534
  %3603 = vmatpush1.bf16.msra.mxu0 %v1533
  %3604 = vmatprep.subr.bf16.mxu0 %v1542
  %3605 = vmatpush1.bf16.msra.mxu0 %v1541
  %3606 = vmatprep.subr.bf16.mxu0 %v1550
  %3607 = vmatpush1.bf16.msra.mxu0 %v1549
  %3608 = vmatprep.subr.bf16.mxu0 %v1558
  %3609 = vmatpush1.bf16.msra.mxu0 %v1557
  %3610 = vmatprep.subr.bf16.mxu0 %v1566
  %3611 = vmatpush1.bf16.msra.mxu0 %v1565
  %3612 = vmatprep.mubr.bf16.mxu0 %v3579
  %3613 = vmatmul.mubr.bf16.gmra.mrb[0].mxu0 %v3578
  %v3614 = vpop.f32.mrb[0].mxu0
  %v3615 = vadd.f32 0.0, %v3614
  %v3616 = vpop.f32.mrb[0].mxu0
  %v3617 = vadd.f32 0.0, %v3616
  %v3618 = vpop.f32.mrb[0].mxu0
  %v3619 = vadd.f32 0.0, %v3618
  %v3620 = vpop.f32.mrb[0].mxu0
  %v3621 = vadd.f32 0.0, %v3620
  %3622 = vdwg.mxu0
  %3623 = vmatprep.subr.bf16.mxu0 %v1448
  %3624 = vmatpush1.bf16.msra.mxu0 %v1447
  %3625 = vmatprep.subr.bf16.mxu0 %v1456
  %3626 = vmatpush1.bf16.msra.mxu0 %v1455
  %3627 = vmatprep.subr.bf16.mxu0 %v1464
  %3628 = vmatpush1.bf16.msra.mxu0 %v1463
  %3629 = vmatprep.subr.bf16.mxu0 %v1472
  %3630 = vmatpush1.bf16.msra.mxu0 %v1471
  %3631 = vmatprep.subr.bf16.mxu0 %v1480
  %3632 = vmatpush1.bf16.msra.mxu0 %v1479
  %3633 = vmatprep.subr.bf16.mxu0 %v1488
  %3634 = vmatpush1.bf16.msra.mxu0 %v1487
  %3635 = vmatprep.subr.bf16.mxu0 %v1496
  %3636 = vmatpush1.bf16.msra.mxu0 %v1495
  %3637 = vmatprep.subr.bf16.mxu0 %v1504
  %3638 = vmatpush1.bf16.msra.mxu0 %v1503
  %3639 = vmatprep.subr.bf16.mxu0 %v1512
  %3640 = vmatpush1.bf16.msra.mxu0 %v1511
  %3641 = vmatprep.subr.bf16.mxu0 %v1520
  %3642 = vmatpush1.bf16.msra.mxu0 %v1519
  %3643 = vmatprep.subr.bf16.mxu0 %v1528
  %3644 = vmatpush1.bf16.msra.mxu0 %v1527
  %3645 = vmatprep.subr.bf16.mxu0 %v1536
  %3646 = vmatpush1.bf16.msra.mxu0 %v1535
  %3647 = vmatprep.subr.bf16.mxu0 %v1544
  %3648 = vmatpush1.bf16.msra.mxu0 %v1543
  %3649 = vmatprep.subr.bf16.mxu0 %v1552
  %3650 = vmatpush1.bf16.msra.mxu0 %v1551
  %3651 = vmatprep.subr.bf16.mxu0 %v1560
  %3652 = vmatpush1.bf16.msra.mxu0 %v1559
  %3653 = vmatprep.subr.bf16.mxu0 %v1568
  %3654 = vmatpush1.bf16.msra.mxu0 %v1567
  %3655 = vmatprep.mubr.bf16.mxu0 %v3579
  %3656 = vmatmul.mubr.bf16.gmra.mrb[0].mxu0 %v3578
  %v3657 = vpop.f32.mrb[0].mxu0
  %v3658 = vadd.f32 0.0, %v3657
  %v3659 = vpop.f32.mrb[0].mxu0
  %v3660 = vadd.f32 0.0, %v3659
  %v3661 = vpop.f32.mrb[0].mxu0
  %v3662 = vadd.f32 0.0, %v3661
  %v3663 = vpop.f32.mrb[0].mxu0
  %v3664 = vadd.f32 0.0, %v3663
  %3665 = vdwg.mxu0
  %3666 = vmatprep.subr.bf16.mxu0 %v1450
  %3667 = vmatpush1.bf16.msra.mxu0 %v1449
  %3668 = vmatprep.subr.bf16.mxu0 %v1458
  %3669 = vmatpush1.bf16.msra.mxu0 %v1457
  %3670 = vmatprep.subr.bf16.mxu0 %v1466
  %3671 = vmatpush1.bf16.msra.mxu0 %v1465
  %3672 = vmatprep.subr.bf16.mxu0 %v1474
  %3673 = vmatpush1.bf16.msra.mxu0 %v1473
  %3674 = vmatprep.subr.bf16.mxu0 %v1482
  %3675 = vmatpush1.bf16.msra.mxu0 %v1481
  %3676 = vmatprep.subr.bf16.mxu0 %v1490
  %3677 = vmatpush1.bf16.msra.mxu0 %v1489
  %3678 = vmatprep.subr.bf16.mxu0 %v1498
  %3679 = vmatpush1.bf16.msra.mxu0 %v1497
  %3680 = vmatprep.subr.bf16.mxu0 %v1506
  %3681 = vmatpush1.bf16.msra.mxu0 %v1505
  %3682 = vmatprep.subr.bf16.mxu0 %v1514
  %3683 = vmatpush1.bf16.msra.mxu0 %v1513
  %3684 = vmatprep.subr.bf16.mxu0 %v1522
  %3685 = vmatpush1.bf16.msra.mxu0 %v1521
  %3686 = vmatprep.subr.bf16.mxu0 %v1530
  %3687 = vmatpush1.bf16.msra.mxu0 %v1529
  %3688 = vmatprep.subr.bf16.mxu0 %v1538
  %3689 = vmatpush1.bf16.msra.mxu0 %v1537
  %3690 = vmatprep.subr.bf16.mxu0 %v1546
  %3691 = vmatpush1.bf16.msra.mxu0 %v1545
  %3692 = vmatprep.subr.bf16.mxu0 %v1554
  %3693 = vmatpush1.bf16.msra.mxu0 %v1553
  %3694 = vmatprep.subr.bf16.mxu0 %v1562
  %3695 = vmatpush1.bf16.msra.mxu0 %v1561
  %3696 = vmatprep.subr.bf16.mxu0 %v1570
  %3697 = vmatpush1.bf16.msra.mxu0 %v1569
  %3698 = vmatprep.mubr.bf16.mxu0 %v3579
  %3699 = vmatmul.mubr.bf16.gmra.mrb[0].mxu0 %v3578
  %v3700 = vpop.f32.mrb[0].mxu0
  %v3701 = vadd.f32 0.0, %v3700
  %v3702 = vpop.f32.mrb[0].mxu0
  %v3703 = vadd.f32 0.0, %v3702
  %v3704 = vpop.f32.mrb[0].mxu0
  %v3705 = vadd.f32 0.0, %v3704
  %v3706 = vpop.f32.mrb[0].mxu0
  %v3707 = vadd.f32 0.0, %v3706
  %3708 = vdwg.mxu0
  %3709 = vmatprep.subr.bf16.mxu0 %v1452
  %3710 = vmatpush1.bf16.msra.mxu0 %v1451
  %3711 = vmatprep.subr.bf16.mxu0 %v1460
  %3712 = vmatpush1.bf16.msra.mxu0 %v1459
  %3713 = vmatprep.subr.bf16.mxu0 %v1468
  %3714 = vmatpush1.bf16.msra.mxu0 %v1467
  %3715 = vmatprep.subr.bf16.mxu0 %v1476
  %3716 = vmatpush1.bf16.msra.mxu0 %v1475
  %3717 = vmatprep.subr.bf16.mxu0 %v1484
  %3718 = vmatpush1.bf16.msra.mxu0 %v1483
  %3719 = vmatprep.subr.bf16.mxu0 %v1492
  %3720 = vmatpush1.bf16.msra.mxu0 %v1491
  %3721 = vmatprep.subr.bf16.mxu0 %v1500
  %3722 = vmatpush1.bf16.msra.mxu0 %v1499
  %3723 = vmatprep.subr.bf16.mxu0 %v1508
  %3724 = vmatpush1.bf16.msra.mxu0 %v1507
  %3725 = vmatprep.subr.bf16.mxu0 %v1516
  %3726 = vmatpush1.bf16.msra.mxu0 %v1515
  %3727 = vmatprep.subr.bf16.mxu0 %v1524
  %3728 = vmatpush1.bf16.msra.mxu0 %v1523
  %3729 = vmatprep.subr.bf16.mxu0 %v1532
  %3730 = vmatpush1.bf16.msra.mxu0 %v1531
  %3731 = vmatprep.subr.bf16.mxu0 %v1540
  %3732 = vmatpush1.bf16.msra.mxu0 %v1539
  %3733 = vmatprep.subr.bf16.mxu0 %v1548
  %3734 = vmatpush1.bf16.msra.mxu0 %v1547
  %3735 = vmatprep.subr.bf16.mxu0 %v1556
  %3736 = vmatpush1.bf16.msra.mxu0 %v1555
  %3737 = vmatprep.subr.bf16.mxu0 %v1564
  %3738 = vmatpush1.bf16.msra.mxu0 %v1563
  %3739 = vmatprep.subr.bf16.mxu0 %v1572
  %3740 = vmatpush1.bf16.msra.mxu0 %v1571
  %3741 = vmatprep.mubr.bf16.mxu0 %v3579
  %3742 = vmatmul.mubr.bf16.gmra.mrb[0].mxu0 %v3578
  %v3743 = vpop.f32.mrb[0].mxu0
  %v3744 = vadd.f32 0.0, %v3743
  %v3745 = vpop.f32.mrb[0].mxu0
  %v3746 = vadd.f32 0.0, %v3745
  %v3747 = vpop.f32.mrb[0].mxu0
  %v3748 = vadd.f32 0.0, %v3747
  %v3749 = vpop.f32.mrb[0].mxu0
  %v3750 = vadd.f32 0.0, %v3749
  %3751 = vdwg.mxu0
  %v3752 = vld [vmem:[%s2215] sm:$0xff]
  %v3753 = vld [vmem:[%s2215 + $0x8] sm:$0xff]
  %v3754 = vld [vmem:[%s2215 + $0x10] sm:$0xff]
  %v3755 = vld [vmem:[%s2215 + $0x18] sm:$0xff]
  %v3756 = vunpack.c.l.bf16 %v3752
  %v3757 = vunpack.c.l.bf16 %v3753
  %v3758 = vunpack.c.l.bf16 %v3754
  %v3759 = vunpack.c.l.bf16 %v3755
  %v3760 = vunpack.c.h.bf16 %v3752
  %v3761 = vunpack.c.h.bf16 %v3753
  %v3762 = vunpack.c.h.bf16 %v3754
  %v3763 = vunpack.c.h.bf16 %v3755
  %v3764 = vadd.f32 %v3615, %v3756
  %v3765 = vadd.f32 %v3617, %v3757
  %v3766 = vadd.f32 %v3658, %v3758
  %v3767 = vadd.f32 %v3660, %v3759
  %v3768 = vadd.f32 %v3619, %v3760
  %v3769 = vadd.f32 %v3621, %v3761
  %v3770 = vadd.f32 %v3662, %v3762
  %v3771 = vadd.f32 %v3664, %v3763
  %v3772 = vld [vmem:[%s2192 + $0x20] sm:$0xff]
  %v3773 = vld [vmem:[%s2192 + $0x28] sm:$0xff]
  %v3774 = vld [vmem:[%s2192 + $0x30] sm:$0xff]
  %v3775 = vld [vmem:[%s2192 + $0x38] sm:$0xff]
  %v3776 = vunpack.c.l.bf16 %v3772
  %v3777 = vunpack.c.l.bf16 %v3773
  %v3778 = vunpack.c.l.bf16 %v3774
  %v3779 = vunpack.c.l.bf16 %v3775
  %v3780 = vunpack.c.h.bf16 %v3772
  %v3781 = vunpack.c.h.bf16 %v3773
  %v3782 = vunpack.c.h.bf16 %v3774
  %v3783 = vunpack.c.h.bf16 %v3775
  %v3784 = vadd.f32 %v3701, %v3776
  %v3785 = vadd.f32 %v3703, %v3777
  %v3786 = vadd.f32 %v3744, %v3778
  %v3787 = vadd.f32 %v3746, %v3779
  %v3788 = vadd.f32 %v3705, %v3780
  %v3789 = vadd.f32 %v3707, %v3781
  %v3790 = vadd.f32 %v3748, %v3782
  %v3791 = vadd.f32 %v3750, %v3783
  %v3792 = vmul.f32 %v3764, 0.5
  %v3793 = vmul.f32 %v3768, 0.5
  %v3794 = vtanh.pop %v3792
  %v3795 = vtanh.pop %v3793
  %v3796 = vmul.f32 %v3794, 0.5
  %v3797 = vmul.f32 %v3795, 0.5
  %v3798 = vadd.f32 %v3796, 0.5
  %v3799 = vadd.f32 %v3797, 0.5
  %v3800 = vmul.f32 %v3765, 0.5
  %v3801 = vmul.f32 %v3769, 0.5
  %v3802 = vtanh.pop %v3800
  %v3803 = vtanh.pop %v3801
  %v3804 = vmul.f32 %v3802, 0.5
  %v3805 = vmul.f32 %v3803, 0.5
  %v3806 = vadd.f32 %v3804, 0.5
  %v3807 = vadd.f32 %v3805, 0.5
  %v3808 = vtanh.pop %v3766
  %v3809 = vtanh.pop %v3770
  %v3810 = vmul.f32 %v3767, 0.5
  %v3811 = vmul.f32 %v3771, 0.5
  %v3812 = vtanh.pop %v3810
  %v3813 = vtanh.pop %v3811
  %v3814 = vmul.f32 %v3812, 0.5
  %v3815 = vmul.f32 %v3813, 0.5
  %v3816 = vadd.f32 %v3814, 0.5
  %v3817 = vadd.f32 %v3815, 0.5
  %v3818 = vmul.f32 %v3806, %v3518
  %v3819 = vmul.f32 %v3807, %v3519
  %v3820 = vmul.f32 %v3798, %v3808
  %v3821 = vmul.f32 %v3799, %v3809
  %v3822 = vadd.f32 %v3818, %v3820
  %v3823 = vadd.f32 %v3819, %v3821
  %v3824 = vtanh.pop %v3822
  %v3825 = vtanh.pop %v3823
  %v3826 = vmul.f32 %v3816, %v3824
  %v3827 = vmul.f32 %v3817, %v3825
  %v3828 = vmul.f32 %v3784, 0.5
  %v3829 = vmul.f32 %v3788, 0.5
  %v3830 = vtanh.pop %v3828
  %v3831 = vtanh.pop %v3829
  %v3832 = vmul.f32 %v3830, 0.5
  %v3833 = vmul.f32 %v3831, 0.5
  %v3834 = vadd.f32 %v3832, 0.5
  %v3835 = vadd.f32 %v3833, 0.5
  %v3836 = vmul.f32 %v3785, 0.5
  %v3837 = vmul.f32 %v3789, 0.5
  %v3838 = vtanh.pop %v3836
  %v3839 = vtanh.pop %v3837
  %v3840 = vmul.f32 %v3838, 0.5
  %v3841 = vmul.f32 %v3839, 0.5
  %v3842 = vadd.f32 %v3840, 0.5
  %v3843 = vadd.f32 %v3841, 0.5
  %v3844 = vtanh.pop %v3786
  %v3845 = vtanh.pop %v3790
  %v3846 = vmul.f32 %v3787, 0.5
  %v3847 = vmul.f32 %v3791, 0.5
  %v3848 = vtanh.pop %v3846
  %v3849 = vtanh.pop %v3847
  %v3850 = vmul.f32 %v3848, 0.5
  %v3851 = vmul.f32 %v3849, 0.5
  %v3852 = vadd.f32 %v3850, 0.5
  %v3853 = vadd.f32 %v3851, 0.5
  %v3854 = vmul.f32 %v3842, %v3576
  %v3855 = vmul.f32 %v3843, %v3577
  %v3856 = vmul.f32 %v3834, %v3844
  %v3857 = vmul.f32 %v3835, %v3845
  %v3858 = vadd.f32 %v3854, %v3856
  %v3859 = vadd.f32 %v3855, %v3857
  %v3860 = vtanh.pop %v3858
  %v3861 = vtanh.pop %v3859
  %v3862 = vmul.f32 %v3852, %v3860
  %v3863 = vmul.f32 %v3853, %v3861
  %v3864 = vld [vmem:[%s2311] sm:$0xff]
  %v3865 = vld [vmem:[%s2311 + $0x8] sm:$0xff]
  %v3866 = vld [vmem:[%s2308] sm:$0xff]
  %v3867 = vld [vmem:[%s2308 + $0x8] sm:$0xff]
  %v3868 = vmul.f32 %v3826, %v3864
  %v3869 = vmul.f32 %v3827, %v3865
  %3870 = vst [vmem:[%s2325] sm:$0xff] %v3868
  %3871 = vst [vmem:[%s2325 + $0x10] sm:$0xff] %v3869
  %v3872 = vmul.f32 %v3862, %v3866
  %v3873 = vmul.f32 %v3863, %v3867
  %3874 = vst [vmem:[%s2318 + $0x8] sm:$0xff] %v3872
  %3875 = vst [vmem:[%s2318 + $0x18] sm:$0xff] %v3873
  %vm3876 = vcmp.gt.f32.partialorder %v3866, 0.0
  %vm3877 = vcmp.gt.f32.partialorder %v3867, 0.0
  %v3878 = vsel %vm3876, %v3862, %v3574
  %v3879 = vsel %vm3877, %v3863, %v3575
  %v3880 = vsel %vm3876, %v3858, %v3576
  %v3881 = vsel %vm3877, %v3859, %v3577
  %v3882 = vpack.c.bf16 %v3827, %v3826
  %v3883 = vpack.c.bf16 %v3879, %v3878
  %3884 = vmatprep.subr.bf16.mxu0 %v1446
  %3885 = vmatpush1.bf16.msra.mxu0 %v1445
  %3886 = vmatprep.subr.bf16.mxu0 %v1454
  %3887 = vmatpush1.bf16.msra.mxu0 %v1453
  %3888 = vmatprep.subr.bf16.mxu0 %v1462
  %3889 = vmatpush1.bf16.msra.mxu0 %v1461
  %3890 = vmatprep.subr.bf16.mxu0 %v1470
  %3891 = vmatpush1.bf16.msra.mxu0 %v1469
  %3892 = vmatprep.subr.bf16.mxu0 %v1478
  %3893 = vmatpush1.bf16.msra.mxu0 %v1477
  %3894 = vmatprep.subr.bf16.mxu0 %v1486
  %3895 = vmatpush1.bf16.msra.mxu0 %v1485
  %3896 = vmatprep.subr.bf16.mxu0 %v1494
  %3897 = vmatpush1.bf16.msra.mxu0 %v1493
  %3898 = vmatprep.subr.bf16.mxu0 %v1502
  %3899 = vmatpush1.bf16.msra.mxu0 %v1501
  %3900 = vmatprep.subr.bf16.mxu0 %v1510
  %3901 = vmatpush1.bf16.msra.mxu0 %v1509
  %3902 = vmatprep.subr.bf16.mxu0 %v1518
  %3903 = vmatpush1.bf16.msra.mxu0 %v1517
  %3904 = vmatprep.subr.bf16.mxu0 %v1526
  %3905 = vmatpush1.bf16.msra.mxu0 %v1525
  %3906 = vmatprep.subr.bf16.mxu0 %v1534
  %3907 = vmatpush1.bf16.msra.mxu0 %v1533
  %3908 = vmatprep.subr.bf16.mxu0 %v1542
  %3909 = vmatpush1.bf16.msra.mxu0 %v1541
  %3910 = vmatprep.subr.bf16.mxu0 %v1550
  %3911 = vmatpush1.bf16.msra.mxu0 %v1549
  %3912 = vmatprep.subr.bf16.mxu0 %v1558
  %3913 = vmatpush1.bf16.msra.mxu0 %v1557
  %3914 = vmatprep.subr.bf16.mxu0 %v1566
  %3915 = vmatpush1.bf16.msra.mxu0 %v1565
  %3916 = vmatprep.mubr.bf16.mxu0 %v3883
  %3917 = vmatmul.mubr.bf16.gmra.mrb[0].mxu0 %v3882
  %v3918 = vpop.f32.mrb[0].mxu0
  %v3919 = vadd.f32 0.0, %v3918
  %v3920 = vpop.f32.mrb[0].mxu0
  %v3921 = vadd.f32 0.0, %v3920
  %v3922 = vpop.f32.mrb[0].mxu0
  %v3923 = vadd.f32 0.0, %v3922
  %v3924 = vpop.f32.mrb[0].mxu0
  %v3925 = vadd.f32 0.0, %v3924
  %3926 = vdwg.mxu0
  %3927 = vmatprep.subr.bf16.mxu0 %v1448
  %3928 = vmatpush1.bf16.msra.mxu0 %v1447
  %3929 = vmatprep.subr.bf16.mxu0 %v1456
  %3930 = vmatpush1.bf16.msra.mxu0 %v1455
  %3931 = vmatprep.subr.bf16.mxu0 %v1464
  %3932 = vmatpush1.bf16.msra.mxu0 %v1463
  %3933 = vmatprep.subr.bf16.mxu0 %v1472
  %3934 = vmatpush1.bf16.msra.mxu0 %v1471
  %3935 = vmatprep.subr.bf16.mxu0 %v1480
  %3936 = vmatpush1.bf16.msra.mxu0 %v1479
  %3937 = vmatprep.subr.bf16.mxu0 %v1488
  %3938 = vmatpush1.bf16.msra.mxu0 %v1487
  %3939 = vmatprep.subr.bf16.mxu0 %v1496
  %3940 = vmatpush1.bf16.msra.mxu0 %v1495
  %3941 = vmatprep.subr.bf16.mxu0 %v1504
  %3942 = vmatpush1.bf16.msra.mxu0 %v1503
  %3943 = vmatprep.subr.bf16.mxu0 %v1512
  %3944 = vmatpush1.bf16.msra.mxu0 %v1511
  %3945 = vmatprep.subr.bf16.mxu0 %v1520
  %3946 = vmatpush1.bf16.msra.mxu0 %v1519
  %3947 = vmatprep.subr.bf16.mxu0 %v1528
  %3948 = vmatpush1.bf16.msra.mxu0 %v1527
  %3949 = vmatprep.subr.bf16.mxu0 %v1536
  %3950 = vmatpush1.bf16.msra.mxu0 %v1535
  %3951 = vmatprep.subr.bf16.mxu0 %v1544
  %3952 = vmatpush1.bf16.msra.mxu0 %v1543
  %3953 = vmatprep.subr.bf16.mxu0 %v1552
  %3954 = vmatpush1.bf16.msra.mxu0 %v1551
  %3955 = vmatprep.subr.bf16.mxu0 %v1560
  %3956 = vmatpush1.bf16.msra.mxu0 %v1559
  %3957 = vmatprep.subr.bf16.mxu0 %v1568
  %3958 = vmatpush1.bf16.msra.mxu0 %v1567
  %3959 = vmatprep.mubr.bf16.mxu0 %v3883
  %3960 = vmatmul.mubr.bf16.gmra.mrb[0].mxu0 %v3882
  %v3961 = vpop.f32.mrb[0].mxu0
  %v3962 = vadd.f32 0.0, %v3961
  %v3963 = vpop.f32.mrb[0].mxu0
  %v3964 = vadd.f32 0.0, %v3963
  %v3965 = vpop.f32.mrb[0].mxu0
  %v3966 = vadd.f32 0.0, %v3965
  %v3967 = vpop.f32.mrb[0].mxu0
  %v3968 = vadd.f32 0.0, %v3967
  %3969 = vdwg.mxu0
  %3970 = vmatprep.subr.bf16.mxu0 %v1450
  %3971 = vmatpush1.bf16.msra.mxu0 %v1449
  %3972 = vmatprep.subr.bf16.mxu0 %v1458
  %3973 = vmatpush1.bf16.msra.mxu0 %v1457
  %3974 = vmatprep.subr.bf16.mxu0 %v1466
  %3975 = vmatpush1.bf16.msra.mxu0 %v1465
  %3976 = vmatprep.subr.bf16.mxu0 %v1474
  %3977 = vmatpush1.bf16.msra.mxu0 %v1473
  %3978 = vmatprep.subr.bf16.mxu0 %v1482
  %3979 = vmatpush1.bf16.msra.mxu0 %v1481
  %3980 = vmatprep.subr.bf16.mxu0 %v1490
  %3981 = vmatpush1.bf16.msra.mxu0 %v1489
  %3982 = vmatprep.subr.bf16.mxu0 %v1498
  %3983 = vmatpush1.bf16.msra.mxu0 %v1497
  %3984 = vmatprep.subr.bf16.mxu0 %v1506
  %3985 = vmatpush1.bf16.msra.mxu0 %v1505
  %3986 = vmatprep.subr.bf16.mxu0 %v1514
  %3987 = vmatpush1.bf16.msra.mxu0 %v1513
  %3988 = vmatprep.subr.bf16.mxu0 %v1522
  %3989 = vmatpush1.bf16.msra.mxu0 %v1521
  %3990 = vmatprep.subr.bf16.mxu0 %v1530
  %3991 = vmatpush1.bf16.msra.mxu0 %v1529
  %3992 = vmatprep.subr.bf16.mxu0 %v1538
  %3993 = vmatpush1.bf16.msra.mxu0 %v1537
  %3994 = vmatprep.subr.bf16.mxu0 %v1546
  %3995 = vmatpush1.bf16.msra.mxu0 %v1545
  %3996 = vmatprep.subr.bf16.mxu0 %v1554
  %3997 = vmatpush1.bf16.msra.mxu0 %v1553
  %3998 = vmatprep.subr.bf16.mxu0 %v1562
  %3999 = vmatpush1.bf16.msra.mxu0 %v1561
  %4000 = vmatprep.subr.bf16.mxu0 %v1570
  %4001 = vmatpush1.bf16.msra.mxu0 %v1569
  %4002 = vmatprep.mubr.bf16.mxu0 %v3883
  %4003 = vmatmul.mubr.bf16.gmra.mrb[0].mxu0 %v3882
  %v4004 = vpop.f32.mrb[0].mxu0
  %v4005 = vadd.f32 0.0, %v4004
  %v4006 = vpop.f32.mrb[0].mxu0
  %v4007 = vadd.f32 0.0, %v4006
  %v4008 = vpop.f32.mrb[0].mxu0
  %v4009 = vadd.f32 0.0, %v4008
  %v4010 = vpop.f32.mrb[0].mxu0
  %v4011 = vadd.f32 0.0, %v4010
  %4012 = vdwg.mxu0
  %4013 = vmatprep.subr.bf16.mxu0 %v1452
  %4014 = vmatpush1.bf16.msra.mxu0 %v1451
  %4015 = vmatprep.subr.bf16.mxu0 %v1460
  %4016 = vmatpush1.bf16.msra.mxu0 %v1459
  %4017 = vmatprep.subr.bf16.mxu0 %v1468
  %4018 = vmatpush1.bf16.msra.mxu0 %v1467
  %4019 = vmatprep.subr.bf16.mxu0 %v1476
  %4020 = vmatpush1.bf16.msra.mxu0 %v1475
  %4021 = vmatprep.subr.bf16.mxu0 %v1484
  %4022 = vmatpush1.bf16.msra.mxu0 %v1483
  %4023 = vmatprep.subr.bf16.mxu0 %v1492
  %4024 = vmatpush1.bf16.msra.mxu0 %v1491
  %4025 = vmatprep.subr.bf16.mxu0 %v1500
  %4026 = vmatpush1.bf16.msra.mxu0 %v1499
  %4027 = vmatprep.subr.bf16.mxu0 %v1508
  %4028 = vmatpush1.bf16.msra.mxu0 %v1507
  %4029 = vmatprep.subr.bf16.mxu0 %v1516
  %4030 = vmatpush1.bf16.msra.mxu0 %v1515
  %4031 = vmatprep.subr.bf16.mxu0 %v1524
  %4032 = vmatpush1.bf16.msra.mxu0 %v1523
  %4033 = vmatprep.subr.bf16.mxu0 %v1532
  %4034 = vmatpush1.bf16.msra.mxu0 %v1531
  %4035 = vmatprep.subr.bf16.mxu0 %v1540
  %4036 = vmatpush1.bf16.msra.mxu0 %v1539
  %4037 = vmatprep.subr.bf16.mxu0 %v1548
  %4038 = vmatpush1.bf16.msra.mxu0 %v1547
  %4039 = vmatprep.subr.bf16.mxu0 %v1556
  %4040 = vmatpush1.bf16.msra.mxu0 %v1555
  %4041 = vmatprep.subr.bf16.mxu0 %v1564
  %4042 = vmatpush1.bf16.msra.mxu0 %v1563
  %4043 = vmatprep.subr.bf16.mxu0 %v1572
  %4044 = vmatpush1.bf16.msra.mxu0 %v1571
  %4045 = vmatprep.mubr.bf16.mxu0 %v3883
  %4046 = vmatmul.mubr.bf16.gmra.mrb[0].mxu0 %v3882
  %v4047 = vpop.f32.mrb[0].mxu0
  %v4048 = vadd.f32 0.0, %v4047
  %v4049 = vpop.f32.mrb[0].mxu0
  %v4050 = vadd.f32 0.0, %v4049
  %v4051 = vpop.f32.mrb[0].mxu0
  %v4052 = vadd.f32 0.0, %v4051
  %v4053 = vpop.f32.mrb[0].mxu0
  %v4054 = vadd.f32 0.0, %v4053
  %4055 = vdwg.mxu0
  %v4056 = vld [vmem:[%s1898] sm:$0xff]
  %v4057 = vld [vmem:[%s1898 + $0x8] sm:$0xff]
  %v4058 = vld [vmem:[%s1898 + $0x10] sm:$0xff]
  %v4059 = vld [vmem:[%s1898 + $0x18] sm:$0xff]
  %v4060 = vunpack.c.l.bf16 %v4056
  %v4061 = vunpack.c.l.bf16 %v4057
  %v4062 = vunpack.c.l.bf16 %v4058
  %v4063 = vunpack.c.l.bf16 %v4059
  %v4064 = vunpack.c.h.bf16 %v4056
  %v4065 = vunpack.c.h.bf16 %v4057
  %v4066 = vunpack.c.h.bf16 %v4058
  %v4067 = vunpack.c.h.bf16 %v4059
  %v4068 = vadd.f32 %v3919, %v4060
  %v4069 = vadd.f32 %v3921, %v4061
  %v4070 = vadd.f32 %v3962, %v4062
  %v4071 = vadd.f32 %v3964, %v4063
  %v4072 = vadd.f32 %v3923, %v4064
  %v4073 = vadd.f32 %v3925, %v4065
  %v4074 = vadd.f32 %v3966, %v4066
  %v4075 = vadd.f32 %v3968, %v4067
  %v4076 = vld [vmem:[%s1875 + $0x20] sm:$0xff]
  %v4077 = vld [vmem:[%s1875 + $0x28] sm:$0xff]
  %v4078 = vld [vmem:[%s1875 + $0x30] sm:$0xff]
  %v4079 = vld [vmem:[%s1875 + $0x38] sm:$0xff]
  %v4080 = vunpack.c.l.bf16 %v4076
  %v4081 = vunpack.c.l.bf16 %v4077
  %v4082 = vunpack.c.l.bf16 %v4078
  %v4083 = vunpack.c.l.bf16 %v4079
  %v4084 = vunpack.c.h.bf16 %v4076
  %v4085 = vunpack.c.h.bf16 %v4077
  %v4086 = vunpack.c.h.bf16 %v4078
  %v4087 = vunpack.c.h.bf16 %v4079
  %v4088 = vadd.f32 %v4005, %v4080
  %v4089 = vadd.f32 %v4007, %v4081
  %v4090 = vadd.f32 %v4048, %v4082
  %v4091 = vadd.f32 %v4050, %v4083
  %v4092 = vadd.f32 %v4009, %v4084
  %v4093 = vadd.f32 %v4011, %v4085
  %v4094 = vadd.f32 %v4052, %v4086
  %v4095 = vadd.f32 %v4054, %v4087
  %v4096 = vmul.f32 %v4068, 0.5
  %v4097 = vmul.f32 %v4072, 0.5
  %v4098 = vtanh.pop %v4096
  %v4099 = vtanh.pop %v4097
  %v4100 = vmul.f32 %v4098, 0.5
  %v4101 = vmul.f32 %v4099, 0.5
  %v4102 = vadd.f32 %v4100, 0.5
  %v4103 = vadd.f32 %v4101, 0.5
  %v4104 = vmul.f32 %v4069, 0.5
  %v4105 = vmul.f32 %v4073, 0.5
  %v4106 = vtanh.pop %v4104
  %v4107 = vtanh.pop %v4105
  %v4108 = vmul.f32 %v4106, 0.5
  %v4109 = vmul.f32 %v4107, 0.5
  %v4110 = vadd.f32 %v4108, 0.5
  %v4111 = vadd.f32 %v4109, 0.5
  %v4112 = vtanh.pop %v4070
  %v4113 = vtanh.pop %v4074
  %v4114 = vmul.f32 %v4071, 0.5
  %v4115 = vmul.f32 %v4075, 0.5
  %v4116 = vtanh.pop %v4114
  %v4117 = vtanh.pop %v4115
  %v4118 = vmul.f32 %v4116, 0.5
  %v4119 = vmul.f32 %v4117, 0.5
  %v4120 = vadd.f32 %v4118, 0.5
  %v4121 = vadd.f32 %v4119, 0.5
  %v4122 = vmul.f32 %v4110, %v3822
  %v4123 = vmul.f32 %v4111, %v3823
  %v4124 = vmul.f32 %v4102, %v4112
  %v4125 = vmul.f32 %v4103, %v4113
  %v4126 = vadd.f32 %v4122, %v4124
  %v4127 = vadd.f32 %v4123, %v4125
  %v4128 = vtanh.pop %v4126
  %v4129 = vtanh.pop %v4127
  %v4130 = vmul.f32 %v4120, %v4128
  %v4131 = vmul.f32 %v4121, %v4129
  %v4132 = vmul.f32 %v4088, 0.5
  %v4133 = vmul.f32 %v4092, 0.5
  %v4134 = vtanh.pop %v4132
  %v4135 = vtanh.pop %v4133
  %v4136 = vmul.f32 %v4134, 0.5
  %v4137 = vmul.f32 %v4135, 0.5
  %v4138 = vadd.f32 %v4136, 0.5
  %v4139 = vadd.f32 %v4137, 0.5
  %v4140 = vmul.f32 %v4089, 0.5
  %v4141 = vmul.f32 %v4093, 0.5
  %v4142 = vtanh.pop %v4140
  %v4143 = vtanh.pop %v4141
  %v4144 = vmul.f32 %v4142, 0.5
  %v4145 = vmul.f32 %v4143, 0.5
  %v4146 = vadd.f32 %v4144, 0.5
  %v4147 = vadd.f32 %v4145, 0.5
  %v4148 = vtanh.pop %v4090
  %v4149 = vtanh.pop %v4094
  %v4150 = vmul.f32 %v4091, 0.5
  %v4151 = vmul.f32 %v4095, 0.5
  %v4152 = vtanh.pop %v4150
  %v4153 = vtanh.pop %v4151
  %v4154 = vmul.f32 %v4152, 0.5
  %v4155 = vmul.f32 %v4153, 0.5
  %v4156 = vadd.f32 %v4154, 0.5
  %v4157 = vadd.f32 %v4155, 0.5
  %v4158 = vmul.f32 %v4146, %v3880
  %v4159 = vmul.f32 %v4147, %v3881
  %v4160 = vmul.f32 %v4138, %v4148
  %v4161 = vmul.f32 %v4139, %v4149
  %v4162 = vadd.f32 %v4158, %v4160
  %v4163 = vadd.f32 %v4159, %v4161
  %v4164 = vtanh.pop %v4162
  %v4165 = vtanh.pop %v4163
  %v4166 = vmul.f32 %v4156, %v4164
  %v4167 = vmul.f32 %v4157, %v4165
  %v4168 = vld [vmem:[%s1993] sm:$0xff]
  %v4169 = vld [vmem:[%s1993 + $0x8] sm:$0xff]
  %v4170 = vld [vmem:[#allocation3] sm:$0xff]
  %v4171 = vld [vmem:[#allocation3 + $0x8] sm:$0xff]
  %v4172 = vmul.f32 %v4130, %v4168
  %v4173 = vmul.f32 %v4131, %v4169
  %4174 = vst [vmem:[%s2007] sm:$0xff] %v4172
  %4175 = vst [vmem:[%s2007 + $0x10] sm:$0xff] %v4173
  %v4176 = vmul.f32 %v4166, %v4170
  %v4177 = vmul.f32 %v4167, %v4171
  %4178 = vst [vmem:[%s2000 + $0x8] sm:$0xff] %v4176
  %4179 = vst [vmem:[%s2000 + $0x18] sm:$0xff] %v4177
  // Predicated region
  $region22: #{denote_model_forward.1} parent=0 // pred_check
    _
  $region23: #{denote_model_forward.1} parent=0 // pred_check_branch
    %4181 = sbr.rel (0) target = $region25
  $region24: #{denote_model_forward.1} parent=0 // pred_region
    _
  $region25: #{denote_model_forward.1} parent=0 // pred_fallthru
    _
  // Predicated region
  $region26: #{denote_model_forward.1} parent=0 // pred_check
    _
  $region27: #{denote_model_forward.1} parent=0 // pred_check_branch
    %4183 = sbr.rel (0) target = $region29
  $region28: #{denote_model_forward.1} parent=0 // pred_region
    _
  $region29: #{denote_model_forward.1} parent=0 // pred_fallthru
    _

</llo_original>
